<compile_context>
chip_gen: v6e
topology: v6e:2x2x1
jax: 0.10.0
libtpu: 0.0.40
codegen_flags: <defaults>
</compile_context>

<pallas_src>
import functools

import numpy as np
import jax
import jax.numpy as jnp
from jax.experimental import pallas as pl
from jax.experimental.pallas import tpu as pltpu


def _const_spec(shape):
    rank = len(shape)
    return pl.BlockSpec(shape, lambda *_: (0,) * rank)


# ====================== kernel 1: fused conv + wavelet paths (per batch) ======================

def _conv_wave_kernel(x_ref, wloc_ref, wcb3_ref, wcb7_ref, wpw_ref, wwav_ref,
                      ha_ref, hs_ref, vec_ref, x2_ref, x1_ref, *, W, HW):
    x = x_ref[...]                                           # (C, HW) f32, lane-dense

    def dwconv(src, w_ref, ksize, stride):
        # depthwise 'same' conv on a flattened image: each tap is an XLU lane-roll plus a
        # VPU multiply-add with a host-precomputed (weight * boundary-mask) plane.
        r = ksize // 2
        acc, idx = None, 0
        for dh in range(-r, r + 1):
            for dw in range(-r, r + 1):
                off = dh * stride + dw
                sh = (-off) % HW
                shifted = pltpu.roll(src, shift=sh, axis=1) if sh else src
                term = shifted * w_ref[idx]
                acc = term if acc is None else acc + term
                idx += 1
        return acc

    # ---- local_op: dwconv3x3 (BN1 folded) -> ReLU -> dwconv1x1*BN2 (scale+shift) ----
    y = jnp.maximum(dwconv(x, wloc_ref, 3, W) + vec_ref[0], 0.0)
    y = y * vec_ref[1] + vec_ref[2]

    # ---- CombinedConvBlock: dw3x3 -> pw1x1 (MXU), dw7x7, +residual, BN, ReLU ----
    dwo = dwconv(y, wcb3_ref, 3, W) + vec_ref[3]
    pwo = jnp.dot(wpw_ref[...], dwo, preferred_element_type=jnp.float32) + vec_ref[4]
    lko = dwconv(y, wcb7_ref, 7, W) + vec_ref[5]
    x2_ref[...] = jnp.maximum((pwo + lko + y) * vec_ref[6] + vec_ref[7], 0.0)

    # ---- global_op (MBWTConv2d, db1, 1 level) ----
    # TODO(synk): SS2D (self.global_atten) is undefined in the reference source; identity.
    # Haar analysis (stride-2 deinterleave + subband mix) as one constant matmul.
    sb = jnp.dot(x, ha_ref[...], preferred_element_type=jnp.float32)     # (C, 4*H2*W2)
    # per-(subband, channel) dw3x3; wavelet_scale and the LL base_scale are folded in.
    t = dwconv(sb, wwav_ref, 3, W // 2)
    # Haar synthesis (subband mix + re-interleave) as one constant matmul.
    xt = jnp.dot(t, hs_ref[...], preferred_element_type=jnp.float32)     # (C, HW)
    # base branch (base_scale * x) + wavelet tag, emitted already summed.
    x1_ref[...] = x * vec_ref[8] + xt


def conv_paths(xflat, pk, *, H, W):
    B, C, HW = xflat.shape
    kernel = functools.partial(_conv_wave_kernel, W=W, HW=HW)
    return pl.pallas_call(
        kernel,
        out_shape=(jax.ShapeDtypeStruct((B, C, HW), jnp.float32),
                   jax.ShapeDtypeStruct((B, C, HW), jnp.float32)),
        grid=(B,),
        in_specs=[
            pl.BlockSpec((None, C, HW), lambda b: (b, 0, 0)),
            _const_spec(pk["w_loc3"].shape),
            _const_spec(pk["w_cb3"].shape),
            _const_spec(pk["w_cb7"].shape),
            _const_spec(pk["w_pw"].shape),
            _const_spec(pk["w_wav"].shape),
            _const_spec(pk["haar_a"].shape),
            _const_spec(pk["haar_s"].shape),
            _const_spec(pk["vecs"].shape),
        ],
        out_specs=(pl.BlockSpec((None, C, HW), lambda b: (b, 0, 0)),
                   pl.BlockSpec((None, C, HW), lambda b: (b, 0, 0))),
        compiler_params=pltpu.CompilerParams(dimension_semantics=("parallel",)),
    )(xflat, pk["w_loc3"], pk["w_cb3"], pk["w_cb7"], pk["w_pw"], pk["w_wav"],
      pk["haar_a"], pk["haar_s"], pk["vecs"])


# ============== kernel 2: dual MHA + ReLU/concat/1x1-proj/residual epilogue ==============
# Rows are (batch b, channel c) tokens = torch's (L=B, N=C, E=H*W) layout flattened.
# Head reductions/broadcasts use constant hsum (E,heads) / hbc (heads,E) matrices so no
# in-kernel head transposes are needed.

def _attn_proj_kernel(x1_ref, x2_ref, x_ref, wa_ref, ba_ref, wb_ref, bb_ref,
                      wo0_ref, bo0_ref, wo1_ref, bo1_ref, hsum_ref, hbc_ref,
                      pw1_ref, pw2_ref, pb_ref, out_ref, *, L, N, E, heads):
    hd = E // heads
    scale = hd ** -0.5
    x1 = x1_ref[...]                                   # (L*N, E) global path (base + wavelet)
    x2 = x2_ref[...]                                   # (L*N, E) local path
    x1h = x1.astype(jnp.bfloat16)
    x2h = x2.astype(jnp.bfloat16)

    # merged input projections: x1 -> [q0 | k1 | v1], x2 -> [q1 | k0 | v0]
    pa = jnp.dot(x1h, wa_ref[...], preferred_element_type=jnp.float32) + ba_ref[...]
    pb = jnp.dot(x2h, wb_ref[...], preferred_element_type=jnp.float32) + bb_ref[...]
    q0, k1, v1 = pa[:, :E], pa[:, E:2 * E], pa[:, 2 * E:]
    q1, k0, v0 = pb[:, :E], pb[:, E:2 * E], pb[:, 2 * E:]

    hsum = hsum_ref[...]
    hbc = hbc_ref[...]

    # per-head scores for both MHAs and all (l, j) pairs in ONE stacked matmul
    blocks = []
    for q, k in ((q0, k0), (q1, k1)):
        qs = q * scale
        for l in range(L):
            ql = qs[l * N:(l + 1) * N]
            for j in range(L):
                blocks.append(ql * k[j * N:(j + 1) * N])
    prod = jnp.concatenate(blocks, axis=0)                               # (2*L*L*N, E)
    s = jnp.dot(prod, hsum, preferred_element_type=jnp.float32)          # (2*L*L*N, heads)

    # softmax over the key index j, per (mha, l, channel, head)
    probs = []
    for m in range(2):
        for l in range(L):
            base = (m * L + l) * L * N
            sl = [s[base + j * N: base + (j + 1) * N] for j in range(L)]
            mx = sl[0]
            for j in range(1, L):
                mx = jnp.maximum(mx, sl[j])
            ex = [jnp.exp(t - mx) for t in sl]
            den = ex[0]
            for j in range(1, L):
                den = den + ex[j]
            inv = pl.reciprocal(den, approx=True)                        # EUP slot
            probs.extend([e * inv for e in ex])
    pall = jnp.concatenate(probs, axis=0)                                # (2*L*L*N, heads)
    pbro = jnp.dot(pall, hbc, preferred_element_type=jnp.float32)        # (2*L*L*N, E)

    # attention contexts + one output projection per MHA
    ctxs = []
    for m, v in enumerate((v0, v1)):
        rows = []
        for l in range(L):
            base = (m * L + l) * L * N
            acc = pbro[base: base + N] * v[:N]
            for j in range(1, L):
                acc = acc + pbro[base + j * N: base + (j + 1) * N] * v[j * N:(j + 1) * N]
            rows.append(acc)
        ctxs.append(jnp.concatenate(rows, axis=0))                       # (L*N, E)
    ao0 = jnp.dot(ctxs[0].astype(jnp.bfloat16), wo0_ref[...],
                  preferred_element_type=jnp.float32) + bo0_ref[...]
    ao1 = jnp.dot(ctxs[1].astype(jnp.bfloat16), wo1_ref[...],
                  preferred_element_type=jnp.float32) + bo1_ref[...]

    # proj: ReLU -> Conv2d_BN(2C -> C) (block-diagonal over batches) -> + x
    lo = jnp.maximum(ao0 + x1, 0.0).astype(jnp.bfloat16)
    hi = jnp.maximum(ao1 + x2, 0.0).astype(jnp.bfloat16)
    out_ref[...] = (jnp.dot(pw1_ref[...], lo, preferred_element_type=jnp.float32) +
                    jnp.dot(pw2_ref[...], hi, preferred_element_type=jnp.float32) +
                    pb_ref[...] + x_ref[...])


def attn_proj(x1f, x2f, xf, pk, *, B, C, num_heads):
    LN, E = xf.shape
    args = [x1f, x2f, xf, pk["wa"], pk["ba"], pk["wb"], pk["bb"],
            pk["wo0"], pk["bo0"], pk["wo1"], pk["bo1"],
            pk["hsum"], pk["hbc"], pk["pw1bd"], pk["pw2bd"], pk["pbr"]]
    kernel = functools.partial(_attn_proj_kernel, L=B, N=C, E=E, heads=num_heads)
    return pl.pallas_call(
        kernel,
        out_shape=jax.ShapeDtypeStruct((LN, E), jnp.float32),
        grid=(1,),
        in_specs=[_const_spec(a.shape) for a in args],
        out_specs=pl.BlockSpec((LN, E), lambda i: (0, 0)),
        compiler_params=pltpu.CompilerParams(dimension_semantics=("arbitrary",)),
    )(*args)


# ================================ forward + params ================================

def mobile_mamba_forward(x, pk, *, num_heads):
    B, C, H, W = x.shape
    HW = H * W
    xflat = x.reshape(B, C, HW)                        # free row-major reshape
    x2, x1 = conv_paths(xflat, pk, H=H, W=W)
    out = attn_proj(x1.reshape(B * C, HW), x2.reshape(B * C, HW),
                    xflat.reshape(B * C, HW), pk, B=B, C=C, num_heads=num_heads)
    return out.reshape(B, C, H, W)


def make_params(key, dim, H, W, num_heads, batch):
    """Random parameters with BatchNorms folded (inference semantics), packed into
    kernel-ready layouts: per-tap masked weight planes (ntaps, C, H*W), constant Haar
    analysis/synthesis matrices, per-channel vectors tiled to (C, H*W), pre-transposed
    (and bf16) MHA projection matrices, and a block-diagonal 2C->C projection."""
    C, E = dim, H * W
    H2, W2 = H // 2, W // 2
    hd = E // num_heads
    assert hd * num_heads == E
    keys = iter(jax.random.split(key, 64))

    def nrm(shape, std=0.05):
        return jax.random.normal(next(keys), shape, jnp.float32) * std

    def bn_fold(c):
        gamma = jax.random.uniform(next(keys), (c,), jnp.float32, 0.5, 1.5)
        beta = nrm((c,))
        rm = nrm((c,))
        rv = jax.random.uniform(next(keys), (c,), jnp.float32, 0.5, 1.5)
        s = gamma / jnp.sqrt(rv + 1e-5)
        return s, beta - rm * s

    def taps_flat(w, Himg, Wimg):
        # w: (k, k, C) -> (k*k, C, Himg*Wimg); 'same' zero-padding masks folded in
        w = np.asarray(w)
        k = w.shape[0]
        r = k // 2
        P = Himg * Wimg
        rr, cc = np.arange(P) // Wimg, np.arange(P) % Wimg
        out = np.zeros((k * k, C, P), np.float32)
        i = 0
        for dh in range(-r, r + 1):
            for dw in range(-r, r + 1):
                m = ((rr + dh >= 0) & (rr + dh < Himg) &
                     (cc + dw >= 0) & (cc + dw < Wimg)).astype(np.float32)
                out[i] = w[dh + r, dw + r][:, None] * m[None, :]
                i += 1
        return jnp.asarray(out)

    def wav_taps_flat(w4, scale4, base_c):
        # w4: (4,3,3,C) per-(subband,channel) taps; wavelet_scale and LL base_scale folded
        w4, scale4, base_c = np.asarray(w4), np.asarray(scale4), np.asarray(base_c)
        P = H2 * W2
        rr, cc = np.arange(P) // W2, np.arange(P) % W2
        out = np.zeros((9, C, 4 * P), np.float32)
        i = 0
        for dh in (-1, 0, 1):
            for dw in (-1, 0, 1):
                m = ((rr + dh >= 0) & (rr + dh < H2) &
                     (cc + dw >= 0) & (cc + dw < W2)).astype(np.float32)
                for k in range(4):
                    wk = w4[k, dh + 1, dw + 1] * scale4[k]
                    if k == 0:
                        wk = wk * base_c
                    out[i, :, k * P:(k + 1) * P] = wk[:, None] * m[None, :]
                i += 1
        return jnp.asarray(out)

    def haar_mats():
        # db1 analysis: sb[:, k*Ps + i*W2 + j] = 0.5*sum_{a,b} sgn(k,a,b)*x[:, (2i+a)*W+2j+b]
        P, Ps = H * W, H2 * W2
        A = np.zeros((P, P), np.float32)
        for i in range(H2):
            for j in range(W2):
                for k in range(4):
                    for a in range(2):
                        for b in range(2):
                            s = 1.0
                            if k in (1, 3) and a == 1:
                                s = -s
                            if k in (2, 3) and b == 1:
                                s = -s
                            A[(2 * i + a) * W + 2 * j + b, k * Ps + i * W2 + j] = 0.5 * s
        return jnp.asarray(A), jnp.asarray(A.T.copy())   # synthesis = analysis^T for Haar

    def tile_c(v):
        return jnp.tile(jnp.reshape(v, (C, 1)), (1, E))

    # --- local_op: DWConv2d_BN_ReLU(dim, dim, 3) ---
    s1, b1 = bn_fold(C)
    w_dw3 = nrm((3, 3, C)) * s1[None, None, :]
    s2, b2 = bn_fold(C)
    s_1x1 = nrm((C,)) * s2                               # dw1x1 weight folded with BN2 scale

    # --- conbine_block: CombinedConvBlock(dim, dim) ---
    cb_dw_w, cb_dw_b = nrm((3, 3, C)), nrm((C,))
    cb_pw_w, cb_pw_b = nrm((C, C)), nrm((C,))            # [out, in]
    cb_lk_w, cb_lk_b = nrm((7, 7, C)), nrm((C,))
    cb_bn_s, cb_bn_b = bn_fold(C)

    # --- global_op: MBWTConv2d(dim, dim, 3, wt_levels=1, 'db1') ---
    wav_w = nrm((4, 3, 3, C))
    wav_s = nrm((4, C), std=0.1)                         # _ScaleModule([1, 4*dim, 1, 1])
    base = nrm((C,), std=0.3)                            # _ScaleModule([1, dim, 1, 1])

    # --- the two nn.MultiheadAttention blocks ---
    def mha_params():
        in_w, in_b = nrm((3 * E, E)), nrm((3 * E,))
        out_w, out_b = nrm((E, E)), nrm((E,))
        return (in_w[:E].T, in_b[:E], in_w[E:2 * E].T, in_b[E:2 * E],
                in_w[2 * E:].T, in_b[2 * E:], out_w.T, out_b)

    wq0, bq0, wk0, bk0, wv0, bv0, wo0, bo0 = mha_params()
    wq1, bq1, wk1, bk1, wv1, bv1, wo1, bo1 = mha_params()

    # merged projections: x1 -> [q0 | k1 | v1], x2 -> [q1 | k0 | v0]  (bf16 weights)
    wa = jnp.concatenate([wq0, wk1, wv1], axis=1).astype(jnp.bfloat16)
    ba = jnp.concatenate([bq0, bk1, bv1]).reshape(1, 3 * E)
    wb = jnp.concatenate([wq1, wk0, wv0], axis=1).astype(jnp.bfloat16)
    bb = jnp.concatenate([bq1, bk0, bv0]).reshape(1, 3 * E)

    # --- proj: ReLU -> Conv2d_BN(2*dim, dim), block-diagonal over batches ---
    pw = nrm((C, 2 * C))
    ps, pbias = bn_fold(C)
    pw_f = pw * ps[:, None]
    eye_b = jnp.eye(batch, dtype=jnp.float32)
    pw1bd = jnp.kron(eye_b, pw_f[:, :C]).astype(jnp.bfloat16)
    pw2bd = jnp.kron(eye_b, pw_f[:, C:]).astype(jnp.bfloat16)
    pbr = jnp.tile(pbias.reshape(C, 1), (batch, 1))

    hsum = jnp.repeat(jnp.eye(num_heads, dtype=jnp.float32), hd, axis=0)   # (E, heads)
    haar_a, haar_s = haar_mats()

    return dict(
        w_loc3=taps_flat(w_dw3, H, W),
        w_cb3=taps_flat(cb_dw_w, H, W),
        w_cb7=taps_flat(cb_lk_w, H, W),
        w_pw=cb_pw_w,
        w_wav=wav_taps_flat(wav_w, wav_s, base),
        haar_a=haar_a, haar_s=haar_s,
        vecs=jnp.stack([tile_c(b1), tile_c(s_1x1), tile_c(b2),
                        tile_c(cb_dw_b), tile_c(cb_pw_b), tile_c(cb_lk_b),
                        tile_c(cb_bn_s), tile_c(cb_bn_b), tile_c(base)], 0),
        wa=wa, ba=ba, wb=wb, bb=bb,
        wo0=wo0.astype(jnp.bfloat16), bo0=bo0.reshape(1, E),
        wo1=wo1.astype(jnp.bfloat16), bo1=bo1.reshape(1, E),
        hsum=hsum, hbc=hsum.T,
        pw1bd=pw1bd, pw2bd=pw2bd, pbr=pbr,
    )


if __name__ == "__main__":
    B, DIM, H, W = 2, 8, 16, 16       # embed_dim = H*W = 256 (required by the module's reshape)
    HEADS = 8                         # head_dim = 32

    key = jax.random.PRNGKey(0)
    kx, kp = jax.random.split(key)
    x = jax.random.normal(kx, (B, DIM, H, W), jnp.float32)
    params = make_params(kp, DIM, H, W, HEADS, B)

    fwd = jax.jit(functools.partial(mobile_mamba_forward, num_heads=HEADS))
    out = fwd(x, params)
    jax.block_until_ready(out)
    assert out.shape == (B, DIM, H, W) and out.dtype == jnp.float32
    assert bool(jnp.all(jnp.isfinite(out)))
    print("KERNEL_OK")
</pallas_src>

<mosaic_0001>
module attributes {stable_mosaic.version = 11 : i64} {
  func.func @_conv_wave_kernel(%arg0: i32, %arg1: memref<1x8x256xf32, #tpu.memory_space<vmem>>, %arg2: memref<9x8x256xf32, #tpu.memory_space<vmem>>, %arg3: memref<9x8x256xf32, #tpu.memory_space<vmem>>, %arg4: memref<49x8x256xf32, #tpu.memory_space<vmem>>, %arg5: memref<8x8xf32, #tpu.memory_space<vmem>>, %arg6: memref<9x8x256xf32, #tpu.memory_space<vmem>>, %arg7: memref<256x256xf32, #tpu.memory_space<vmem>>, %arg8: memref<256x256xf32, #tpu.memory_space<vmem>>, %arg9: memref<9x8x256xf32, #tpu.memory_space<vmem>>, %arg10: memref<1x8x256xf32, #tpu.memory_space<vmem>>, %arg11: memref<1x8x256xf32, #tpu.memory_space<vmem>>) attributes {dimension_semantics = [#tpu.dimension_semantics<parallel>], iteration_bounds = array<i64: 2>, scalar_prefetch = 0 : i64, scratch_operands = 0 : i64, tpu.core_type = #tpu.core_type<tc>, window_params = [{transform_indices = @transform_0, window_bounds = array<i64: 1, 8, 256>}, {pipeline_mode = #tpu.pipeline_mode<synchronous>, transform_indices = @transform_1, window_bounds = array<i64: 9, 8, 256>}, {pipeline_mode = #tpu.pipeline_mode<synchronous>, transform_indices = @transform_2, window_bounds = array<i64: 9, 8, 256>}, {pipeline_mode = #tpu.pipeline_mode<synchronous>, transform_indices = @transform_3, window_bounds = array<i64: 49, 8, 256>}, {pipeline_mode = #tpu.pipeline_mode<synchronous>, transform_indices = @transform_4, window_bounds = array<i64: 8, 8>}, {pipeline_mode = #tpu.pipeline_mode<synchronous>, transform_indices = @transform_5, window_bounds = array<i64: 9, 8, 256>}, {pipeline_mode = #tpu.pipeline_mode<synchronous>, transform_indices = @transform_6, window_bounds = array<i64: 256, 256>}, {pipeline_mode = #tpu.pipeline_mode<synchronous>, transform_indices = @transform_7, window_bounds = array<i64: 256, 256>}, {pipeline_mode = #tpu.pipeline_mode<synchronous>, transform_indices = @transform_8, window_bounds = array<i64: 9, 8, 256>}, {transform_indices = @transform_9, window_bounds = array<i64: 1, 8, 256>}, {transform_indices = @transform_10, window_bounds = array<i64: 1, 8, 256>}]} {
    %c0 = arith.constant 0 : index
    %c0_0 = arith.constant 0 : index
    %c0_1 = arith.constant 0 : index
    %0 = vector.load %arg1[%c0, %c0_0, %c0_1] : memref<1x8x256xf32, #tpu.memory_space<vmem>>, vector<1x8x256xf32>
    %1 = vector.shape_cast %0 : vector<1x8x256xf32> to vector<8x256xf32>
    %c17_i32 = arith.constant 17 : i32
    %2 = tpu.dynamic_rotate %1 by %c17_i32 dim 1 : vector<8x256xf32>, i32 -> vector<8x256xf32>
    %c0_2 = arith.constant 0 : index
    %c0_3 = arith.constant 0 : index
    %c0_4 = arith.constant 0 : index
    %3 = vector.load %arg2[%c0_2, %c0_3, %c0_4] : memref<9x8x256xf32, #tpu.memory_space<vmem>>, vector<1x8x256xf32>
    %4 = vector.shape_cast %3 : vector<1x8x256xf32> to vector<8x256xf32>
    %5 = arith.mulf %2, %4 : vector<8x256xf32>
    %c16_i32 = arith.constant 16 : i32
    %6 = tpu.dynamic_rotate %1 by %c16_i32 dim 1 : vector<8x256xf32>, i32 -> vector<8x256xf32>
    %c1 = arith.constant 1 : index
    %c0_5 = arith.constant 0 : index
    %c0_6 = arith.constant 0 : index
    %7 = vector.load %arg2[%c1, %c0_5, %c0_6] : memref<9x8x256xf32, #tpu.memory_space<vmem>>, vector<1x8x256xf32>
    %8 = vector.shape_cast %7 : vector<1x8x256xf32> to vector<8x256xf32>
    %9 = arith.mulf %6, %8 : vector<8x256xf32>
    %10 = arith.addf %5, %9 : vector<8x256xf32>
    %c15_i32 = arith.constant 15 : i32
    %11 = tpu.dynamic_rotate %1 by %c15_i32 dim 1 : vector<8x256xf32>, i32 -> vector<8x256xf32>
    %c2 = arith.constant 2 : index
    %c0_7 = arith.constant 0 : index
    %c0_8 = arith.constant 0 : index
    %12 = vector.load %arg2[%c2, %c0_7, %c0_8] : memref<9x8x256xf32, #tpu.memory_space<vmem>>, vector<1x8x256xf32>
    %13 = vector.shape_cast %12 : vector<1x8x256xf32> to vector<8x256xf32>
    %14 = arith.mulf %11, %13 : vector<8x256xf32>
    %15 = arith.addf %10, %14 : vector<8x256xf32>
    %c1_i32 = arith.constant 1 : i32
    %16 = tpu.dynamic_rotate %1 by %c1_i32 dim 1 : vector<8x256xf32>, i32 -> vector<8x256xf32>
    %c3 = arith.constant 3 : index
    %c0_9 = arith.constant 0 : index
    %c0_10 = arith.constant 0 : index
    %17 = vector.load %arg2[%c3, %c0_9, %c0_10] : memref<9x8x256xf32, #tpu.memory_space<vmem>>, vector<1x8x256xf32>
    %18 = vector.shape_cast %17 : vector<1x8x256xf32> to vector<8x256xf32>
    %19 = arith.mulf %16, %18 : vector<8x256xf32>
    %20 = arith.addf %15, %19 : vector<8x256xf32>
    %c4 = arith.constant 4 : index
    %c0_11 = arith.constant 0 : index
    %c0_12 = arith.constant 0 : index
    %21 = vector.load %arg2[%c4, %c0_11, %c0_12] : memref<9x8x256xf32, #tpu.memory_space<vmem>>, vector<1x8x256xf32>
    %22 = vector.shape_cast %21 : vector<1x8x256xf32> to vector<8x256xf32>
    %23 = arith.mulf %1, %22 : vector<8x256xf32>
    %24 = arith.addf %20, %23 : vector<8x256xf32>
    %c255_i32 = arith.constant 255 : i32
    %25 = tpu.dynamic_rotate %1 by %c255_i32 dim 1 : vector<8x256xf32>, i32 -> vector<8x256xf32>
    %c5 = arith.constant 5 : index
    %c0_13 = arith.constant 0 : index
    %c0_14 = arith.constant 0 : index
    %26 = vector.load %arg2[%c5, %c0_13, %c0_14] : memref<9x8x256xf32, #tpu.memory_space<vmem>>, vector<1x8x256xf32>
    %27 = vector.shape_cast %26 : vector<1x8x256xf32> to vector<8x256xf32>
    %28 = arith.mulf %25, %27 : vector<8x256xf32>
    %29 = arith.addf %24, %28 : vector<8x256xf32>
    %c241_i32 = arith.constant 241 : i32
    %30 = tpu.dynamic_rotate %1 by %c241_i32 dim 1 : vector<8x256xf32>, i32 -> vector<8x256xf32>
    %c6 = arith.constant 6 : index
    %c0_15 = arith.constant 0 : index
    %c0_16 = arith.constant 0 : index
    %31 = vector.load %arg2[%c6, %c0_15, %c0_16] : memref<9x8x256xf32, #tpu.memory_space<vmem>>, vector<1x8x256xf32>
    %32 = vector.shape_cast %31 : vector<1x8x256xf32> to vector<8x256xf32>
    %33 = arith.mulf %30, %32 : vector<8x256xf32>
    %34 = arith.addf %29, %33 : vector<8x256xf32>
    %c240_i32 = arith.constant 240 : i32
    %35 = tpu.dynamic_rotate %1 by %c240_i32 dim 1 : vector<8x256xf32>, i32 -> vector<8x256xf32>
    %c7 = arith.constant 7 : index
    %c0_17 = arith.constant 0 : index
    %c0_18 = arith.constant 0 : index
    %36 = vector.load %arg2[%c7, %c0_17, %c0_18] : memref<9x8x256xf32, #tpu.memory_space<vmem>>, vector<1x8x256xf32>
    %37 = vector.shape_cast %36 : vector<1x8x256xf32> to vector<8x256xf32>
    %38 = arith.mulf %35, %37 : vector<8x256xf32>
    %39 = arith.addf %34, %38 : vector<8x256xf32>
    %c239_i32 = arith.constant 239 : i32
    %40 = tpu.dynamic_rotate %1 by %c239_i32 dim 1 : vector<8x256xf32>, i32 -> vector<8x256xf32>
    %c8 = arith.constant 8 : index
    %c0_19 = arith.constant 0 : index
    %c0_20 = arith.constant 0 : index
    %41 = vector.load %arg2[%c8, %c0_19, %c0_20] : memref<9x8x256xf32, #tpu.memory_space<vmem>>, vector<1x8x256xf32>
    %42 = vector.shape_cast %41 : vector<1x8x256xf32> to vector<8x256xf32>
    %43 = arith.mulf %40, %42 : vector<8x256xf32>
    %44 = arith.addf %39, %43 : vector<8x256xf32>
    %c0_21 = arith.constant 0 : index
    %c0_22 = arith.constant 0 : index
    %c0_23 = arith.constant 0 : index
    %45 = vector.load %arg9[%c0_21, %c0_22, %c0_23] : memref<9x8x256xf32, #tpu.memory_space<vmem>>, vector<1x8x256xf32>
    %46 = vector.shape_cast %45 : vector<1x8x256xf32> to vector<8x256xf32>
    %47 = arith.addf %44, %46 : vector<8x256xf32>
    %cst = arith.constant 0.000000e+00 : f32
    %48 = vector.broadcast %cst : f32 to vector<8x256xf32>
    %49 = arith.maximumf %47, %48 : vector<8x256xf32>
    %c1_24 = arith.constant 1 : index
    %c0_25 = arith.constant 0 : index
    %c0_26 = arith.constant 0 : index
    %50 = vector.load %arg9[%c1_24, %c0_25, %c0_26] : memref<9x8x256xf32, #tpu.memory_space<vmem>>, vector<1x8x256xf32>
    %51 = vector.shape_cast %50 : vector<1x8x256xf32> to vector<8x256xf32>
    %52 = arith.mulf %49, %51 : vector<8x256xf32>
    %c2_27 = arith.constant 2 : index
    %c0_28 = arith.constant 0 : index
    %c0_29 = arith.constant 0 : index
    %53 = vector.load %arg9[%c2_27, %c0_28, %c0_29] : memref<9x8x256xf32, #tpu.memory_space<vmem>>, vector<1x8x256xf32>
    %54 = vector.shape_cast %53 : vector<1x8x256xf32> to vector<8x256xf32>
    %55 = arith.addf %52, %54 : vector<8x256xf32>
    %c17_i32_30 = arith.constant 17 : i32
    %56 = tpu.dynamic_rotate %55 by %c17_i32_30 dim 1 : vector<8x256xf32>, i32 -> vector<8x256xf32>
    %c0_31 = arith.constant 0 : index
    %c0_32 = arith.constant 0 : index
    %c0_33 = arith.constant 0 : index
    %57 = vector.load %arg3[%c0_31, %c0_32, %c0_33] : memref<9x8x256xf32, #tpu.memory_space<vmem>>, vector<1x8x256xf32>
    %58 = vector.shape_cast %57 : vector<1x8x256xf32> to vector<8x256xf32>
    %59 = arith.mulf %56, %58 : vector<8x256xf32>
    %c16_i32_34 = arith.constant 16 : i32
    %60 = tpu.dynamic_rotate %55 by %c16_i32_34 dim 1 : vector<8x256xf32>, i32 -> vector<8x256xf32>
    %c1_35 = arith.constant 1 : index
    %c0_36 = arith.constant 0 : index
    %c0_37 = arith.constant 0 : index
    %61 = vector.load %arg3[%c1_35, %c0_36, %c0_37] : memref<9x8x256xf32, #tpu.memory_space<vmem>>, vector<1x8x256xf32>
    %62 = vector.shape_cast %61 : vector<1x8x256xf32> to vector<8x256xf32>
    %63 = arith.mulf %60, %62 : vector<8x256xf32>
    %64 = arith.addf %59, %63 : vector<8x256xf32>
    %c15_i32_38 = arith.constant 15 : i32
    %65 = tpu.dynamic_rotate %55 by %c15_i32_38 dim 1 : vector<8x256xf32>, i32 -> vector<8x256xf32>
    %c2_39 = arith.constant 2 : index
    %c0_40 = arith.constant 0 : index
    %c0_41 = arith.constant 0 : index
    %66 = vector.load %arg3[%c2_39, %c0_40, %c0_41] : memref<9x8x256xf32, #tpu.memory_space<vmem>>, vector<1x8x256xf32>
    %67 = vector.shape_cast %66 : vector<1x8x256xf32> to vector<8x256xf32>
    %68 = arith.mulf %65, %67 : vector<8x256xf32>
    %69 = arith.addf %64, %68 : vector<8x256xf32>
    %c1_i32_42 = arith.constant 1 : i32
    %70 = tpu.dynamic_rotate %55 by %c1_i32_42 dim 1 : vector<8x256xf32>, i32 -> vector<8x256xf32>
    %c3_43 = arith.constant 3 : index
    %c0_44 = arith.constant 0 : index
    %c0_45 = arith.constant 0 : index
    %71 = vector.load %arg3[%c3_43, %c0_44, %c0_45] : memref<9x8x256xf32, #tpu.memory_space<vmem>>, vector<1x8x256xf32>
    %72 = vector.shape_cast %71 : vector<1x8x256xf32> to vector<8x256xf32>
    %73 = arith.mulf %70, %72 : vector<8x256xf32>
    %74 = arith.addf %69, %73 : vector<8x256xf32>
    %c4_46 = arith.constant 4 : index
    %c0_47 = arith.constant 0 : index
    %c0_48 = arith.constant 0 : index
    %75 = vector.load %arg3[%c4_46, %c0_47, %c0_48] : memref<9x8x256xf32, #tpu.memory_space<vmem>>, vector<1x8x256xf32>
    %76 = vector.shape_cast %75 : vector<1x8x256xf32> to vector<8x256xf32>
    %77 = arith.mulf %55, %76 : vector<8x256xf32>
    %78 = arith.addf %74, %77 : vector<8x256xf32>
    %c255_i32_49 = arith.constant 255 : i32
    %79 = tpu.dynamic_rotate %55 by %c255_i32_49 dim 1 : vector<8x256xf32>, i32 -> vector<8x256xf32>
    %c5_50 = arith.constant 5 : index
    %c0_51 = arith.constant 0 : index
    %c0_52 = arith.constant 0 : index
    %80 = vector.load %arg3[%c5_50, %c0_51, %c0_52] : memref<9x8x256xf32, #tpu.memory_space<vmem>>, vector<1x8x256xf32>
    %81 = vector.shape_cast %80 : vector<1x8x256xf32> to vector<8x256xf32>
    %82 = arith.mulf %79, %81 : vector<8x256xf32>
    %83 = arith.addf %78, %82 : vector<8x256xf32>
    %c241_i32_53 = arith.constant 241 : i32
    %84 = tpu.dynamic_rotate %55 by %c241_i32_53 dim 1 : vector<8x256xf32>, i32 -> vector<8x256xf32>
    %c6_54 = arith.constant 6 : index
    %c0_55 = arith.constant 0 : index
    %c0_56 = arith.constant 0 : index
    %85 = vector.load %arg3[%c6_54, %c0_55, %c0_56] : memref<9x8x256xf32, #tpu.memory_space<vmem>>, vector<1x8x256xf32>
    %86 = vector.shape_cast %85 : vector<1x8x256xf32> to vector<8x256xf32>
    %87 = arith.mulf %84, %86 : vector<8x256xf32>
    %88 = arith.addf %83, %87 : vector<8x256xf32>
    %c240_i32_57 = arith.constant 240 : i32
    %89 = tpu.dynamic_rotate %55 by %c240_i32_57 dim 1 : vector<8x256xf32>, i32 -> vector<8x256xf32>
    %c7_58 = arith.constant 7 : index
    %c0_59 = arith.constant 0 : index
    %c0_60 = arith.constant 0 : index
    %90 = vector.load %arg3[%c7_58, %c0_59, %c0_60] : memref<9x8x256xf32, #tpu.memory_space<vmem>>, vector<1x8x256xf32>
    %91 = vector.shape_cast %90 : vector<1x8x256xf32> to vector<8x256xf32>
    %92 = arith.mulf %89, %91 : vector<8x256xf32>
    %93 = arith.addf %88, %92 : vector<8x256xf32>
    %c239_i32_61 = arith.constant 239 : i32
    %94 = tpu.dynamic_rotate %55 by %c239_i32_61 dim 1 : vector<8x256xf32>, i32 -> vector<8x256xf32>
    %c8_62 = arith.constant 8 : index
    %c0_63 = arith.constant 0 : index
    %c0_64 = arith.constant 0 : index
    %95 = vector.load %arg3[%c8_62, %c0_63, %c0_64] : memref<9x8x256xf32, #tpu.memory_space<vmem>>, vector<1x8x256xf32>
    %96 = vector.shape_cast %95 : vector<1x8x256xf32> to vector<8x256xf32>
    %97 = arith.mulf %94, %96 : vector<8x256xf32>
    %98 = arith.addf %93, %97 : vector<8x256xf32>
    %c3_65 = arith.constant 3 : index
    %c0_66 = arith.constant 0 : index
    %c0_67 = arith.constant 0 : index
    %99 = vector.load %arg9[%c3_65, %c0_66, %c0_67] : memref<9x8x256xf32, #tpu.memory_space<vmem>>, vector<1x8x256xf32>
    %100 = vector.shape_cast %99 : vector<1x8x256xf32> to vector<8x256xf32>
    %101 = arith.addf %98, %100 : vector<8x256xf32>
    %c0_68 = arith.constant 0 : index
    %c0_69 = arith.constant 0 : index
    %102 = vector.load %arg5[%c0_68, %c0_69] : memref<8x8xf32, #tpu.memory_space<vmem>>, vector<8x8xf32>
    %cst_70 = arith.constant dense<0.000000e+00> : vector<8x256xf32>
    %103 = tpu.matmul %102, %101, %cst_70 {dimension_numbers = #tpu.dot_dimension_numbers<[1], [0], [0], [1], [0, 0, 1, 1], [], []>} : vector<8x8xf32>, vector<8x256xf32>, vector<8x256xf32> -> vector<8x256xf32>
    %c4_71 = arith.constant 4 : index
    %c0_72 = arith.constant 0 : index
    %c0_73 = arith.constant 0 : index
    %104 = vector.load %arg9[%c4_71, %c0_72, %c0_73] : memref<9x8x256xf32, #tpu.memory_space<vmem>>, vector<1x8x256xf32>
    %105 = vector.shape_cast %104 : vector<1x8x256xf32> to vector<8x256xf32>
    %106 = arith.addf %103, %105 : vector<8x256xf32>
    %c51_i32 = arith.constant 51 : i32
    %107 = tpu.dynamic_rotate %55 by %c51_i32 dim 1 : vector<8x256xf32>, i32 -> vector<8x256xf32>
    %c0_74 = arith.constant 0 : index
    %c0_75 = arith.constant 0 : index
    %c0_76 = arith.constant 0 : index
    %108 = vector.load %arg4[%c0_74, %c0_75, %c0_76] : memref<49x8x256xf32, #tpu.memory_space<vmem>>, vector<1x8x256xf32>
    %109 = vector.shape_cast %108 : vector<1x8x256xf32> to vector<8x256xf32>
    %110 = arith.mulf %107, %109 : vector<8x256xf32>
    %c50_i32 = arith.constant 50 : i32
    %111 = tpu.dynamic_rotate %55 by %c50_i32 dim 1 : vector<8x256xf32>, i32 -> vector<8x256xf32>
    %c1_77 = arith.constant 1 : index
    %c0_78 = arith.constant 0 : index
    %c0_79 = arith.constant 0 : index
    %112 = vector.load %arg4[%c1_77, %c0_78, %c0_79] : memref<49x8x256xf32, #tpu.memory_space<vmem>>, vector<1x8x256xf32>
    %113 = vector.shape_cast %112 : vector<1x8x256xf32> to vector<8x256xf32>
    %114 = arith.mulf %111, %113 : vector<8x256xf32>
    %115 = arith.addf %110, %114 : vector<8x256xf32>
    %c49_i32 = arith.constant 49 : i32
    %116 = tpu.dynamic_rotate %55 by %c49_i32 dim 1 : vector<8x256xf32>, i32 -> vector<8x256xf32>
    %c2_80 = arith.constant 2 : index
    %c0_81 = arith.constant 0 : index
    %c0_82 = arith.constant 0 : index
    %117 = vector.load %arg4[%c2_80, %c0_81, %c0_82] : memref<49x8x256xf32, #tpu.memory_space<vmem>>, vector<1x8x256xf32>
    %118 = vector.shape_cast %117 : vector<1x8x256xf32> to vector<8x256xf32>
    %119 = arith.mulf %116, %118 : vector<8x256xf32>
    %120 = arith.addf %115, %119 : vector<8x256xf32>
    %c48_i32 = arith.constant 48 : i32
    %121 = tpu.dynamic_rotate %55 by %c48_i32 dim 1 : vector<8x256xf32>, i32 -> vector<8x256xf32>
    %c3_83 = arith.constant 3 : index
    %c0_84 = arith.constant 0 : index
    %c0_85 = arith.constant 0 : index
    %122 = vector.load %arg4[%c3_83, %c0_84, %c0_85] : memref<49x8x256xf32, #tpu.memory_space<vmem>>, vector<1x8x256xf32>
    %123 = vector.shape_cast %122 : vector<1x8x256xf32> to vector<8x256xf32>
    %124 = arith.mulf %121, %123 : vector<8x256xf32>
    %125 = arith.addf %120, %124 : vector<8x256xf32>
    %c47_i32 = arith.constant 47 : i32
    %126 = tpu.dynamic_rotate %55 by %c47_i32 dim 1 : vector<8x256xf32>, i32 -> vector<8x256xf32>
    %c4_86 = arith.constant 4 : index
    %c0_87 = arith.constant 0 : index
    %c0_88 = arith.constant 0 : index
    %127 = vector.load %arg4[%c4_86, %c0_87, %c0_88] : memref<49x8x256xf32, #tpu.memory_space<vmem>>, vector<1x8x256xf32>
    %128 = vector.shape_cast %127 : vector<1x8x256xf32> to vector<8x256xf32>
    %129 = arith.mulf %126, %128 : vector<8x256xf32>
    %130 = arith.addf %125, %129 : vector<8x256xf32>
    %c46_i32 = arith.constant 46 : i32
    %131 = tpu.dynamic_rotate %55 by %c46_i32 dim 1 : vector<8x256xf32>, i32 -> vector<8x256xf32>
    %c5_89 = arith.constant 5 : index
    %c0_90 = arith.constant 0 : index
    %c0_91 = arith.constant 0 : index
    %132 = vector.load %arg4[%c5_89, %c0_90, %c0_91] : memref<49x8x256xf32, #tpu.memory_space<vmem>>, vector<1x8x256xf32>
    %133 = vector.shape_cast %132 : vector<1x8x256xf32> to vector<8x256xf32>
    %134 = arith.mulf %131, %133 : vector<8x256xf32>
    %135 = arith.addf %130, %134 : vector<8x256xf32>
    %c45_i32 = arith.constant 45 : i32
    %136 = tpu.dynamic_rotate %55 by %c45_i32 dim 1 : vector<8x256xf32>, i32 -> vector<8x256xf32>
    %c6_92 = arith.constant 6 : index
    %c0_93 = arith.constant 0 : index
    %c0_94 = arith.constant 0 : index
    %137 = vector.load %arg4[%c6_92, %c0_93, %c0_94] : memref<49x8x256xf32, #tpu.memory_space<vmem>>, vector<1x8x256xf32>
    %138 = vector.shape_cast %137 : vector<1x8x256xf32> to vector<8x256xf32>
    %139 = arith.mulf %136, %138 : vector<8x256xf32>
    %140 = arith.addf %135, %139 : vector<8x256xf32>
    %c35_i32 = arith.constant 35 : i32
    %141 = tpu.dynamic_rotate %55 by %c35_i32 dim 1 : vector<8x256xf32>, i32 -> vector<8x256xf32>
    %c7_95 = arith.constant 7 : index
    %c0_96 = arith.constant 0 : index
    %c0_97 = arith.constant 0 : index
    %142 = vector.load %arg4[%c7_95, %c0_96, %c0_97] : memref<49x8x256xf32, #tpu.memory_space<vmem>>, vector<1x8x256xf32>
    %143 = vector.shape_cast %142 : vector<1x8x256xf32> to vector<8x256xf32>
    %144 = arith.mulf %141, %143 : vector<8x256xf32>
    %145 = arith.addf %140, %144 : vector<8x256xf32>
    %c34_i32 = arith.constant 34 : i32
    %146 = tpu.dynamic_rotate %55 by %c34_i32 dim 1 : vector<8x256xf32>, i32 -> vector<8x256xf32>
    %c8_98 = arith.constant 8 : index
    %c0_99 = arith.constant 0 : index
    %c0_100 = arith.constant 0 : index
    %147 = vector.load %arg4[%c8_98, %c0_99, %c0_100] : memref<49x8x256xf32, #tpu.memory_space<vmem>>, vector<1x8x256xf32>
    %148 = vector.shape_cast %147 : vector<1x8x256xf32> to vector<8x256xf32>
    %149 = arith.mulf %146, %148 : vector<8x256xf32>
    %150 = arith.addf %145, %149 : vector<8x256xf32>
    %c33_i32 = arith.constant 33 : i32
    %151 = tpu.dynamic_rotate %55 by %c33_i32 dim 1 : vector<8x256xf32>, i32 -> vector<8x256xf32>
    %c9 = arith.constant 9 : index
    %c0_101 = arith.constant 0 : index
    %c0_102 = arith.constant 0 : index
    %152 = vector.load %arg4[%c9, %c0_101, %c0_102] : memref<49x8x256xf32, #tpu.memory_space<vmem>>, vector<1x8x256xf32>
    %153 = vector.shape_cast %152 : vector<1x8x256xf32> to vector<8x256xf32>
    %154 = arith.mulf %151, %153 : vector<8x256xf32>
    %155 = arith.addf %150, %154 : vector<8x256xf32>
    %c32_i32 = arith.constant 32 : i32
    %156 = tpu.dynamic_rotate %55 by %c32_i32 dim 1 : vector<8x256xf32>, i32 -> vector<8x256xf32>
    %c10 = arith.constant 10 : index
    %c0_103 = arith.constant 0 : index
    %c0_104 = arith.constant 0 : index
    %157 = vector.load %arg4[%c10, %c0_103, %c0_104] : memref<49x8x256xf32, #tpu.memory_space<vmem>>, vector<1x8x256xf32>
    %158 = vector.shape_cast %157 : vector<1x8x256xf32> to vector<8x256xf32>
    %159 = arith.mulf %156, %158 : vector<8x256xf32>
    %160 = arith.addf %155, %159 : vector<8x256xf32>
    %c31_i32 = arith.constant 31 : i32
    %161 = tpu.dynamic_rotate %55 by %c31_i32 dim 1 : vector<8x256xf32>, i32 -> vector<8x256xf32>
    %c11 = arith.constant 11 : index
    %c0_105 = arith.constant 0 : index
    %c0_106 = arith.constant 0 : index
    %162 = vector.load %arg4[%c11, %c0_105, %c0_106] : memref<49x8x256xf32, #tpu.memory_space<vmem>>, vector<1x8x256xf32>
    %163 = vector.shape_cast %162 : vector<1x8x256xf32> to vector<8x256xf32>
    %164 = arith.mulf %161, %163 : vector<8x256xf32>
    %165 = arith.addf %160, %164 : vector<8x256xf32>
    %c30_i32 = arith.constant 30 : i32
    %166 = tpu.dynamic_rotate %55 by %c30_i32 dim 1 : vector<8x256xf32>, i32 -> vector<8x256xf32>
    %c12 = arith.constant 12 : index
    %c0_107 = arith.constant 0 : index
    %c0_108 = arith.constant 0 : index
    %167 = vector.load %arg4[%c12, %c0_107, %c0_108] : memref<49x8x256xf32, #tpu.memory_space<vmem>>, vector<1x8x256xf32>
    %168 = vector.shape_cast %167 : vector<1x8x256xf32> to vector<8x256xf32>
    %169 = arith.mulf %166, %168 : vector<8x256xf32>
    %170 = arith.addf %165, %169 : vector<8x256xf32>
    %c29_i32 = arith.constant 29 : i32
    %171 = tpu.dynamic_rotate %55 by %c29_i32 dim 1 : vector<8x256xf32>, i32 -> vector<8x256xf32>
    %c13 = arith.constant 13 : index
    %c0_109 = arith.constant 0 : index
    %c0_110 = arith.constant 0 : index
    %172 = vector.load %arg4[%c13, %c0_109, %c0_110] : memref<49x8x256xf32, #tpu.memory_space<vmem>>, vector<1x8x256xf32>
    %173 = vector.shape_cast %172 : vector<1x8x256xf32> to vector<8x256xf32>
    %174 = arith.mulf %171, %173 : vector<8x256xf32>
    %175 = arith.addf %170, %174 : vector<8x256xf32>
    %c19_i32 = arith.constant 19 : i32
    %176 = tpu.dynamic_rotate %55 by %c19_i32 dim 1 : vector<8x256xf32>, i32 -> vector<8x256xf32>
    %c14 = arith.constant 14 : index
    %c0_111 = arith.constant 0 : index
    %c0_112 = arith.constant 0 : index
    %177 = vector.load %arg4[%c14, %c0_111, %c0_112] : memref<49x8x256xf32, #tpu.memory_space<vmem>>, vector<1x8x256xf32>
    %178 = vector.shape_cast %177 : vector<1x8x256xf32> to vector<8x256xf32>
    %179 = arith.mulf %176, %178 : vector<8x256xf32>
    %180 = arith.addf %175, %179 : vector<8x256xf32>
    %c18_i32 = arith.constant 18 : i32
    %181 = tpu.dynamic_rotate %55 by %c18_i32 dim 1 : vector<8x256xf32>, i32 -> vector<8x256xf32>
    %c15 = arith.constant 15 : index
    %c0_113 = arith.constant 0 : index
    %c0_114 = arith.constant 0 : index
    %182 = vector.load %arg4[%c15, %c0_113, %c0_114] : memref<49x8x256xf32, #tpu.memory_space<vmem>>, vector<1x8x256xf32>
    %183 = vector.shape_cast %182 : vector<1x8x256xf32> to vector<8x256xf32>
    %184 = arith.mulf %181, %183 : vector<8x256xf32>
    %185 = arith.addf %180, %184 : vector<8x256xf32>
    %c17_i32_115 = arith.constant 17 : i32
    %186 = tpu.dynamic_rotate %55 by %c17_i32_115 dim 1 : vector<8x256xf32>, i32 -> vector<8x256xf32>
    %c16 = arith.constant 16 : index
    %c0_116 = arith.constant 0 : index
    %c0_117 = arith.constant 0 : index
    %187 = vector.load %arg4[%c16, %c0_116, %c0_117] : memref<49x8x256xf32, #tpu.memory_space<vmem>>, vector<1x8x256xf32>
    %188 = vector.shape_cast %187 : vector<1x8x256xf32> to vector<8x256xf32>
    %189 = arith.mulf %186, %188 : vector<8x256xf32>
    %190 = arith.addf %185, %189 : vector<8x256xf32>
    %c16_i32_118 = arith.constant 16 : i32
    %191 = tpu.dynamic_rotate %55 by %c16_i32_118 dim 1 : vector<8x256xf32>, i32 -> vector<8x256xf32>
    %c17 = arith.constant 17 : index
    %c0_119 = arith.constant 0 : index
    %c0_120 = arith.constant 0 : index
    %192 = vector.load %arg4[%c17, %c0_119, %c0_120] : memref<49x8x256xf32, #tpu.memory_space<vmem>>, vector<1x8x256xf32>
    %193 = vector.shape_cast %192 : vector<1x8x256xf32> to vector<8x256xf32>
    %194 = arith.mulf %191, %193 : vector<8x256xf32>
    %195 = arith.addf %190, %194 : vector<8x256xf32>
    %c15_i32_121 = arith.constant 15 : i32
    %196 = tpu.dynamic_rotate %55 by %c15_i32_121 dim 1 : vector<8x256xf32>, i32 -> vector<8x256xf32>
    %c18 = arith.constant 18 : index
    %c0_122 = arith.constant 0 : index
    %c0_123 = arith.constant 0 : index
    %197 = vector.load %arg4[%c18, %c0_122, %c0_123] : memref<49x8x256xf32, #tpu.memory_space<vmem>>, vector<1x8x256xf32>
    %198 = vector.shape_cast %197 : vector<1x8x256xf32> to vector<8x256xf32>
    %199 = arith.mulf %196, %198 : vector<8x256xf32>
    %200 = arith.addf %195, %199 : vector<8x256xf32>
    %c14_i32 = arith.constant 14 : i32
    %201 = tpu.dynamic_rotate %55 by %c14_i32 dim 1 : vector<8x256xf32>, i32 -> vector<8x256xf32>
    %c19 = arith.constant 19 : index
    %c0_124 = arith.constant 0 : index
    %c0_125 = arith.constant 0 : index
    %202 = vector.load %arg4[%c19, %c0_124, %c0_125] : memref<49x8x256xf32, #tpu.memory_space<vmem>>, vector<1x8x256xf32>
    %203 = vector.shape_cast %202 : vector<1x8x256xf32> to vector<8x256xf32>
    %204 = arith.mulf %201, %203 : vector<8x256xf32>
    %205 = arith.addf %200, %204 : vector<8x256xf32>
    %c13_i32 = arith.constant 13 : i32
    %206 = tpu.dynamic_rotate %55 by %c13_i32 dim 1 : vector<8x256xf32>, i32 -> vector<8x256xf32>
    %c20 = arith.constant 20 : index
    %c0_126 = arith.constant 0 : index
    %c0_127 = arith.constant 0 : index
    %207 = vector.load %arg4[%c20, %c0_126, %c0_127] : memref<49x8x256xf32, #tpu.memory_space<vmem>>, vector<1x8x256xf32>
    %208 = vector.shape_cast %207 : vector<1x8x256xf32> to vector<8x256xf32>
    %209 = arith.mulf %206, %208 : vector<8x256xf32>
    %210 = arith.addf %205, %209 : vector<8x256xf32>
    %c3_i32 = arith.constant 3 : i32
    %211 = tpu.dynamic_rotate %55 by %c3_i32 dim 1 : vector<8x256xf32>, i32 -> vector<8x256xf32>
    %c21 = arith.constant 21 : index
    %c0_128 = arith.constant 0 : index
    %c0_129 = arith.constant 0 : index
    %212 = vector.load %arg4[%c21, %c0_128, %c0_129] : memref<49x8x256xf32, #tpu.memory_space<vmem>>, vector<1x8x256xf32>
    %213 = vector.shape_cast %212 : vector<1x8x256xf32> to vector<8x256xf32>
    %214 = arith.mulf %211, %213 : vector<8x256xf32>
    %215 = arith.addf %210, %214 : vector<8x256xf32>
    %c2_i32 = arith.constant 2 : i32
    %216 = tpu.dynamic_rotate %55 by %c2_i32 dim 1 : vector<8x256xf32>, i32 -> vector<8x256xf32>
    %c22 = arith.constant 22 : index
    %c0_130 = arith.constant 0 : index
    %c0_131 = arith.constant 0 : index
    %217 = vector.load %arg4[%c22, %c0_130, %c0_131] : memref<49x8x256xf32, #tpu.memory_space<vmem>>, vector<1x8x256xf32>
    %218 = vector.shape_cast %217 : vector<1x8x256xf32> to vector<8x256xf32>
    %219 = arith.mulf %216, %218 : vector<8x256xf32>
    %220 = arith.addf %215, %219 : vector<8x256xf32>
    %c1_i32_132 = arith.constant 1 : i32
    %221 = tpu.dynamic_rotate %55 by %c1_i32_132 dim 1 : vector<8x256xf32>, i32 -> vector<8x256xf32>
    %c23 = arith.constant 23 : index
    %c0_133 = arith.constant 0 : index
    %c0_134 = arith.constant 0 : index
    %222 = vector.load %arg4[%c23, %c0_133, %c0_134] : memref<49x8x256xf32, #tpu.memory_space<vmem>>, vector<1x8x256xf32>
    %223 = vector.shape_cast %222 : vector<1x8x256xf32> to vector<8x256xf32>
    %224 = arith.mulf %221, %223 : vector<8x256xf32>
    %225 = arith.addf %220, %224 : vector<8x256xf32>
    %c24 = arith.constant 24 : index
    %c0_135 = arith.constant 0 : index
    %c0_136 = arith.constant 0 : index
    %226 = vector.load %arg4[%c24, %c0_135, %c0_136] : memref<49x8x256xf32, #tpu.memory_space<vmem>>, vector<1x8x256xf32>
    %227 = vector.shape_cast %226 : vector<1x8x256xf32> to vector<8x256xf32>
    %228 = arith.mulf %55, %227 : vector<8x256xf32>
    %229 = arith.addf %225, %228 : vector<8x256xf32>
    %c255_i32_137 = arith.constant 255 : i32
    %230 = tpu.dynamic_rotate %55 by %c255_i32_137 dim 1 : vector<8x256xf32>, i32 -> vector<8x256xf32>
    %c25 = arith.constant 25 : index
    %c0_138 = arith.constant 0 : index
    %c0_139 = arith.constant 0 : index
    %231 = vector.load %arg4[%c25, %c0_138, %c0_139] : memref<49x8x256xf32, #tpu.memory_space<vmem>>, vector<1x8x256xf32>
    %232 = vector.shape_cast %231 : vector<1x8x256xf32> to vector<8x256xf32>
    %233 = arith.mulf %230, %232 : vector<8x256xf32>
    %234 = arith.addf %229, %233 : vector<8x256xf32>
    %c254_i32 = arith.constant 254 : i32
    %235 = tpu.dynamic_rotate %55 by %c254_i32 dim 1 : vector<8x256xf32>, i32 -> vector<8x256xf32>
    %c26 = arith.constant 26 : index
    %c0_140 = arith.constant 0 : index
    %c0_141 = arith.constant 0 : index
    %236 = vector.load %arg4[%c26, %c0_140, %c0_141] : memref<49x8x256xf32, #tpu.memory_space<vmem>>, vector<1x8x256xf32>
    %237 = vector.shape_cast %236 : vector<1x8x256xf32> to vector<8x256xf32>
    %238 = arith.mulf %235, %237 : vector<8x256xf32>
    %239 = arith.addf %234, %238 : vector<8x256xf32>
    %c253_i32 = arith.constant 253 : i32
    %240 = tpu.dynamic_rotate %55 by %c253_i32 dim 1 : vector<8x256xf32>, i32 -> vector<8x256xf32>
    %c27 = arith.constant 27 : index
    %c0_142 = arith.constant 0 : index
    %c0_143 = arith.constant 0 : index
    %241 = vector.load %arg4[%c27, %c0_142, %c0_143] : memref<49x8x256xf32, #tpu.memory_space<vmem>>, vector<1x8x256xf32>
    %242 = vector.shape_cast %241 : vector<1x8x256xf32> to vector<8x256xf32>
    %243 = arith.mulf %240, %242 : vector<8x256xf32>
    %244 = arith.addf %239, %243 : vector<8x256xf32>
    %c243_i32 = arith.constant 243 : i32
    %245 = tpu.dynamic_rotate %55 by %c243_i32 dim 1 : vector<8x256xf32>, i32 -> vector<8x256xf32>
    %c28 = arith.constant 28 : index
    %c0_144 = arith.constant 0 : index
    %c0_145 = arith.constant 0 : index
    %246 = vector.load %arg4[%c28, %c0_144, %c0_145] : memref<49x8x256xf32, #tpu.memory_space<vmem>>, vector<1x8x256xf32>
    %247 = vector.shape_cast %246 : vector<1x8x256xf32> to vector<8x256xf32>
    %248 = arith.mulf %245, %247 : vector<8x256xf32>
    %249 = arith.addf %244, %248 : vector<8x256xf32>
    %c242_i32 = arith.constant 242 : i32
    %250 = tpu.dynamic_rotate %55 by %c242_i32 dim 1 : vector<8x256xf32>, i32 -> vector<8x256xf32>
    %c29 = arith.constant 29 : index
    %c0_146 = arith.constant 0 : index
    %c0_147 = arith.constant 0 : index
    %251 = vector.load %arg4[%c29, %c0_146, %c0_147] : memref<49x8x256xf32, #tpu.memory_space<vmem>>, vector<1x8x256xf32>
    %252 = vector.shape_cast %251 : vector<1x8x256xf32> to vector<8x256xf32>
    %253 = arith.mulf %250, %252 : vector<8x256xf32>
    %254 = arith.addf %249, %253 : vector<8x256xf32>
    %c241_i32_148 = arith.constant 241 : i32
    %255 = tpu.dynamic_rotate %55 by %c241_i32_148 dim 1 : vector<8x256xf32>, i32 -> vector<8x256xf32>
    %c30 = arith.constant 30 : index
    %c0_149 = arith.constant 0 : index
    %c0_150 = arith.constant 0 : index
    %256 = vector.load %arg4[%c30, %c0_149, %c0_150] : memref<49x8x256xf32, #tpu.memory_space<vmem>>, vector<1x8x256xf32>
    %257 = vector.shape_cast %256 : vector<1x8x256xf32> to vector<8x256xf32>
    %258 = arith.mulf %255, %257 : vector<8x256xf32>
    %259 = arith.addf %254, %258 : vector<8x256xf32>
    %c240_i32_151 = arith.constant 240 : i32
    %260 = tpu.dynamic_rotate %55 by %c240_i32_151 dim 1 : vector<8x256xf32>, i32 -> vector<8x256xf32>
    %c31 = arith.constant 31 : index
    %c0_152 = arith.constant 0 : index
    %c0_153 = arith.constant 0 : index
    %261 = vector.load %arg4[%c31, %c0_152, %c0_153] : memref<49x8x256xf32, #tpu.memory_space<vmem>>, vector<1x8x256xf32>
    %262 = vector.shape_cast %261 : vector<1x8x256xf32> to vector<8x256xf32>
    %263 = arith.mulf %260, %262 : vector<8x256xf32>
    %264 = arith.addf %259, %263 : vector<8x256xf32>
    %c239_i32_154 = arith.constant 239 : i32
    %265 = tpu.dynamic_rotate %55 by %c239_i32_154 dim 1 : vector<8x256xf32>, i32 -> vector<8x256xf32>
    %c32 = arith.constant 32 : index
    %c0_155 = arith.constant 0 : index
    %c0_156 = arith.constant 0 : index
    %266 = vector.load %arg4[%c32, %c0_155, %c0_156] : memref<49x8x256xf32, #tpu.memory_space<vmem>>, vector<1x8x256xf32>
    %267 = vector.shape_cast %266 : vector<1x8x256xf32> to vector<8x256xf32>
    %268 = arith.mulf %265, %267 : vector<8x256xf32>
    %269 = arith.addf %264, %268 : vector<8x256xf32>
    %c238_i32 = arith.constant 238 : i32
    %270 = tpu.dynamic_rotate %55 by %c238_i32 dim 1 : vector<8x256xf32>, i32 -> vector<8x256xf32>
    %c33 = arith.constant 33 : index
    %c0_157 = arith.constant 0 : index
    %c0_158 = arith.constant 0 : index
    %271 = vector.load %arg4[%c33, %c0_157, %c0_158] : memref<49x8x256xf32, #tpu.memory_space<vmem>>, vector<1x8x256xf32>
    %272 = vector.shape_cast %271 : vector<1x8x256xf32> to vector<8x256xf32>
    %273 = arith.mulf %270, %272 : vector<8x256xf32>
    %274 = arith.addf %269, %273 : vector<8x256xf32>
    %c237_i32 = arith.constant 237 : i32
    %275 = tpu.dynamic_rotate %55 by %c237_i32 dim 1 : vector<8x256xf32>, i32 -> vector<8x256xf32>
    %c34 = arith.constant 34 : index
    %c0_159 = arith.constant 0 : index
    %c0_160 = arith.constant 0 : index
    %276 = vector.load %arg4[%c34, %c0_159, %c0_160] : memref<49x8x256xf32, #tpu.memory_space<vmem>>, vector<1x8x256xf32>
    %277 = vector.shape_cast %276 : vector<1x8x256xf32> to vector<8x256xf32>
    %278 = arith.mulf %275, %277 : vector<8x256xf32>
    %279 = arith.addf %274, %278 : vector<8x256xf32>
    %c227_i32 = arith.constant 227 : i32
    %280 = tpu.dynamic_rotate %55 by %c227_i32 dim 1 : vector<8x256xf32>, i32 -> vector<8x256xf32>
    %c35 = arith.constant 35 : index
    %c0_161 = arith.constant 0 : index
    %c0_162 = arith.constant 0 : index
    %281 = vector.load %arg4[%c35, %c0_161, %c0_162] : memref<49x8x256xf32, #tpu.memory_space<vmem>>, vector<1x8x256xf32>
    %282 = vector.shape_cast %281 : vector<1x8x256xf32> to vector<8x256xf32>
    %283 = arith.mulf %280, %282 : vector<8x256xf32>
    %284 = arith.addf %279, %283 : vector<8x256xf32>
    %c226_i32 = arith.constant 226 : i32
    %285 = tpu.dynamic_rotate %55 by %c226_i32 dim 1 : vector<8x256xf32>, i32 -> vector<8x256xf32>
    %c36 = arith.constant 36 : index
    %c0_163 = arith.constant 0 : index
    %c0_164 = arith.constant 0 : index
    %286 = vector.load %arg4[%c36, %c0_163, %c0_164] : memref<49x8x256xf32, #tpu.memory_space<vmem>>, vector<1x8x256xf32>
    %287 = vector.shape_cast %286 : vector<1x8x256xf32> to vector<8x256xf32>
    %288 = arith.mulf %285, %287 : vector<8x256xf32>
    %289 = arith.addf %284, %288 : vector<8x256xf32>
    %c225_i32 = arith.constant 225 : i32
    %290 = tpu.dynamic_rotate %55 by %c225_i32 dim 1 : vector<8x256xf32>, i32 -> vector<8x256xf32>
    %c37 = arith.constant 37 : index
    %c0_165 = arith.constant 0 : index
    %c0_166 = arith.constant 0 : index
    %291 = vector.load %arg4[%c37, %c0_165, %c0_166] : memref<49x8x256xf32, #tpu.memory_space<vmem>>, vector<1x8x256xf32>
    %292 = vector.shape_cast %291 : vector<1x8x256xf32> to vector<8x256xf32>
    %293 = arith.mulf %290, %292 : vector<8x256xf32>
    %294 = arith.addf %289, %293 : vector<8x256xf32>
    %c224_i32 = arith.constant 224 : i32
    %295 = tpu.dynamic_rotate %55 by %c224_i32 dim 1 : vector<8x256xf32>, i32 -> vector<8x256xf32>
    %c38 = arith.constant 38 : index
    %c0_167 = arith.constant 0 : index
    %c0_168 = arith.constant 0 : index
    %296 = vector.load %arg4[%c38, %c0_167, %c0_168] : memref<49x8x256xf32, #tpu.memory_space<vmem>>, vector<1x8x256xf32>
    %297 = vector.shape_cast %296 : vector<1x8x256xf32> to vector<8x256xf32>
    %298 = arith.mulf %295, %297 : vector<8x256xf32>
    %299 = arith.addf %294, %298 : vector<8x256xf32>
    %c223_i32 = arith.constant 223 : i32
    %300 = tpu.dynamic_rotate %55 by %c223_i32 dim 1 : vector<8x256xf32>, i32 -> vector<8x256xf32>
    %c39 = arith.constant 39 : index
    %c0_169 = arith.constant 0 : index
    %c0_170 = arith.constant 0 : index
    %301 = vector.load %arg4[%c39, %c0_169, %c0_170] : memref<49x8x256xf32, #tpu.memory_space<vmem>>, vector<1x8x256xf32>
    %302 = vector.shape_cast %301 : vector<1x8x256xf32> to vector<8x256xf32>
    %303 = arith.mulf %300, %302 : vector<8x256xf32>
    %304 = arith.addf %299, %303 : vector<8x256xf32>
    %c222_i32 = arith.constant 222 : i32
    %305 = tpu.dynamic_rotate %55 by %c222_i32 dim 1 : vector<8x256xf32>, i32 -> vector<8x256xf32>
    %c40 = arith.constant 40 : index
    %c0_171 = arith.constant 0 : index
    %c0_172 = arith.constant 0 : index
    %306 = vector.load %arg4[%c40, %c0_171, %c0_172] : memref<49x8x256xf32, #tpu.memory_space<vmem>>, vector<1x8x256xf32>
    %307 = vector.shape_cast %306 : vector<1x8x256xf32> to vector<8x256xf32>
    %308 = arith.mulf %305, %307 : vector<8x256xf32>
    %309 = arith.addf %304, %308 : vector<8x256xf32>
    %c221_i32 = arith.constant 221 : i32
    %310 = tpu.dynamic_rotate %55 by %c221_i32 dim 1 : vector<8x256xf32>, i32 -> vector<8x256xf32>
    %c41 = arith.constant 41 : index
    %c0_173 = arith.constant 0 : index
    %c0_174 = arith.constant 0 : index
    %311 = vector.load %arg4[%c41, %c0_173, %c0_174] : memref<49x8x256xf32, #tpu.memory_space<vmem>>, vector<1x8x256xf32>
    %312 = vector.shape_cast %311 : vector<1x8x256xf32> to vector<8x256xf32>
    %313 = arith.mulf %310, %312 : vector<8x256xf32>
    %314 = arith.addf %309, %313 : vector<8x256xf32>
    %c211_i32 = arith.constant 211 : i32
    %315 = tpu.dynamic_rotate %55 by %c211_i32 dim 1 : vector<8x256xf32>, i32 -> vector<8x256xf32>
    %c42 = arith.constant 42 : index
    %c0_175 = arith.constant 0 : index
    %c0_176 = arith.constant 0 : index
    %316 = vector.load %arg4[%c42, %c0_175, %c0_176] : memref<49x8x256xf32, #tpu.memory_space<vmem>>, vector<1x8x256xf32>
    %317 = vector.shape_cast %316 : vector<1x8x256xf32> to vector<8x256xf32>
    %318 = arith.mulf %315, %317 : vector<8x256xf32>
    %319 = arith.addf %314, %318 : vector<8x256xf32>
    %c210_i32 = arith.constant 210 : i32
    %320 = tpu.dynamic_rotate %55 by %c210_i32 dim 1 : vector<8x256xf32>, i32 -> vector<8x256xf32>
    %c43 = arith.constant 43 : index
    %c0_177 = arith.constant 0 : index
    %c0_178 = arith.constant 0 : index
    %321 = vector.load %arg4[%c43, %c0_177, %c0_178] : memref<49x8x256xf32, #tpu.memory_space<vmem>>, vector<1x8x256xf32>
    %322 = vector.shape_cast %321 : vector<1x8x256xf32> to vector<8x256xf32>
    %323 = arith.mulf %320, %322 : vector<8x256xf32>
    %324 = arith.addf %319, %323 : vector<8x256xf32>
    %c209_i32 = arith.constant 209 : i32
    %325 = tpu.dynamic_rotate %55 by %c209_i32 dim 1 : vector<8x256xf32>, i32 -> vector<8x256xf32>
    %c44 = arith.constant 44 : index
    %c0_179 = arith.constant 0 : index
    %c0_180 = arith.constant 0 : index
    %326 = vector.load %arg4[%c44, %c0_179, %c0_180] : memref<49x8x256xf32, #tpu.memory_space<vmem>>, vector<1x8x256xf32>
    %327 = vector.shape_cast %326 : vector<1x8x256xf32> to vector<8x256xf32>
    %328 = arith.mulf %325, %327 : vector<8x256xf32>
    %329 = arith.addf %324, %328 : vector<8x256xf32>
    %c208_i32 = arith.constant 208 : i32
    %330 = tpu.dynamic_rotate %55 by %c208_i32 dim 1 : vector<8x256xf32>, i32 -> vector<8x256xf32>
    %c45 = arith.constant 45 : index
    %c0_181 = arith.constant 0 : index
    %c0_182 = arith.constant 0 : index
    %331 = vector.load %arg4[%c45, %c0_181, %c0_182] : memref<49x8x256xf32, #tpu.memory_space<vmem>>, vector<1x8x256xf32>
    %332 = vector.shape_cast %331 : vector<1x8x256xf32> to vector<8x256xf32>
    %333 = arith.mulf %330, %332 : vector<8x256xf32>
    %334 = arith.addf %329, %333 : vector<8x256xf32>
    %c207_i32 = arith.constant 207 : i32
    %335 = tpu.dynamic_rotate %55 by %c207_i32 dim 1 : vector<8x256xf32>, i32 -> vector<8x256xf32>
    %c46 = arith.constant 46 : index
    %c0_183 = arith.constant 0 : index
    %c0_184 = arith.constant 0 : index
    %336 = vector.load %arg4[%c46, %c0_183, %c0_184] : memref<49x8x256xf32, #tpu.memory_space<vmem>>, vector<1x8x256xf32>
    %337 = vector.shape_cast %336 : vector<1x8x256xf32> to vector<8x256xf32>
    %338 = arith.mulf %335, %337 : vector<8x256xf32>
    %339 = arith.addf %334, %338 : vector<8x256xf32>
    %c206_i32 = arith.constant 206 : i32
    %340 = tpu.dynamic_rotate %55 by %c206_i32 dim 1 : vector<8x256xf32>, i32 -> vector<8x256xf32>
    %c47 = arith.constant 47 : index
    %c0_185 = arith.constant 0 : index
    %c0_186 = arith.constant 0 : index
    %341 = vector.load %arg4[%c47, %c0_185, %c0_186] : memref<49x8x256xf32, #tpu.memory_space<vmem>>, vector<1x8x256xf32>
    %342 = vector.shape_cast %341 : vector<1x8x256xf32> to vector<8x256xf32>
    %343 = arith.mulf %340, %342 : vector<8x256xf32>
    %344 = arith.addf %339, %343 : vector<8x256xf32>
    %c205_i32 = arith.constant 205 : i32
    %345 = tpu.dynamic_rotate %55 by %c205_i32 dim 1 : vector<8x256xf32>, i32 -> vector<8x256xf32>
    %c48 = arith.constant 48 : index
    %c0_187 = arith.constant 0 : index
    %c0_188 = arith.constant 0 : index
    %346 = vector.load %arg4[%c48, %c0_187, %c0_188] : memref<49x8x256xf32, #tpu.memory_space<vmem>>, vector<1x8x256xf32>
    %347 = vector.shape_cast %346 : vector<1x8x256xf32> to vector<8x256xf32>
    %348 = arith.mulf %345, %347 : vector<8x256xf32>
    %349 = arith.addf %344, %348 : vector<8x256xf32>
    %c5_189 = arith.constant 5 : index
    %c0_190 = arith.constant 0 : index
    %c0_191 = arith.constant 0 : index
    %350 = vector.load %arg9[%c5_189, %c0_190, %c0_191] : memref<9x8x256xf32, #tpu.memory_space<vmem>>, vector<1x8x256xf32>
    %351 = vector.shape_cast %350 : vector<1x8x256xf32> to vector<8x256xf32>
    %352 = arith.addf %349, %351 : vector<8x256xf32>
    %353 = arith.addf %106, %352 : vector<8x256xf32>
    %354 = arith.addf %353, %55 : vector<8x256xf32>
    %c6_192 = arith.constant 6 : index
    %c0_193 = arith.constant 0 : index
    %c0_194 = arith.constant 0 : index
    %355 = vector.load %arg9[%c6_192, %c0_193, %c0_194] : memref<9x8x256xf32, #tpu.memory_space<vmem>>, vector<1x8x256xf32>
    %356 = vector.shape_cast %355 : vector<1x8x256xf32> to vector<8x256xf32>
    %357 = arith.mulf %354, %356 : vector<8x256xf32>
    %c7_195 = arith.constant 7 : index
    %c0_196 = arith.constant 0 : index
    %c0_197 = arith.constant 0 : index
    %358 = vector.load %arg9[%c7_195, %c0_196, %c0_197] : memref<9x8x256xf32, #tpu.memory_space<vmem>>, vector<1x8x256xf32>
    %359 = vector.shape_cast %358 : vector<1x8x256xf32> to vector<8x256xf32>
    %360 = arith.addf %357, %359 : vector<8x256xf32>
    %cst_198 = arith.constant 0.000000e+00 : f32
    %361 = vector.broadcast %cst_198 : f32 to vector<8x256xf32>
    %362 = arith.maximumf %360, %361 : vector<8x256xf32>
    %c0_199 = arith.constant 0 : index
    %c0_200 = arith.constant 0 : index
    %c0_201 = arith.constant 0 : index
    %363 = vector.load %arg10[%c0_199, %c0_200, %c0_201] : memref<1x8x256xf32, #tpu.memory_space<vmem>>, vector<1x8x256xf32>
    %364 = vector.shape_cast %363 : vector<1x8x256xf32> to vector<8x256xf32>
    %365 = vector.shape_cast %362 : vector<8x256xf32> to vector<1x8x256xf32>
    tpu.vector_store %arg10[%c0_199, %c0_200, %c0_201], %365 {strides = array<i32>} : memref<1x8x256xf32, #tpu.memory_space<vmem>>, vector<1x8x256xf32>,
    %c0_202 = arith.constant 0 : index
    %c0_203 = arith.constant 0 : index
    %366 = vector.load %arg7[%c0_202, %c0_203] : memref<256x256xf32, #tpu.memory_space<vmem>>, vector<256x256xf32>
    %cst_204 = arith.constant dense<0.000000e+00> : vector<8x256xf32>
    %367 = tpu.matmul %1, %366, %cst_204 {dimension_numbers = #tpu.dot_dimension_numbers<[1], [0], [0], [1], [0, 0, 1, 1], [], []>} : vector<8x256xf32>, vector<256x256xf32>, vector<8x256xf32> -> vector<8x256xf32>
    %c9_i32 = arith.constant 9 : i32
    %368 = tpu.dynamic_rotate %367 by %c9_i32 dim 1 : vector<8x256xf32>, i32 -> vector<8x256xf32>
    %c0_205 = arith.constant 0 : index
    %c0_206 = arith.constant 0 : index
    %c0_207 = arith.constant 0 : index
    %369 = vector.load %arg6[%c0_205, %c0_206, %c0_207] : memref<9x8x256xf32, #tpu.memory_space<vmem>>, vector<1x8x256xf32>
    %370 = vector.shape_cast %369 : vector<1x8x256xf32> to vector<8x256xf32>
    %371 = arith.mulf %368, %370 : vector<8x256xf32>
    %c8_i32 = arith.constant 8 : i32
    %372 = tpu.dynamic_rotate %367 by %c8_i32 dim 1 : vector<8x256xf32>, i32 -> vector<8x256xf32>
    %c1_208 = arith.constant 1 : index
    %c0_209 = arith.constant 0 : index
    %c0_210 = arith.constant 0 : index
    %373 = vector.load %arg6[%c1_208, %c0_209, %c0_210] : memref<9x8x256xf32, #tpu.memory_space<vmem>>, vector<1x8x256xf32>
    %374 = vector.shape_cast %373 : vector<1x8x256xf32> to vector<8x256xf32>
    %375 = arith.mulf %372, %374 : vector<8x256xf32>
    %376 = arith.addf %371, %375 : vector<8x256xf32>
    %c7_i32 = arith.constant 7 : i32
    %377 = tpu.dynamic_rotate %367 by %c7_i32 dim 1 : vector<8x256xf32>, i32 -> vector<8x256xf32>
    %c2_211 = arith.constant 2 : index
    %c0_212 = arith.constant 0 : index
    %c0_213 = arith.constant 0 : index
    %378 = vector.load %arg6[%c2_211, %c0_212, %c0_213] : memref<9x8x256xf32, #tpu.memory_space<vmem>>, vector<1x8x256xf32>
    %379 = vector.shape_cast %378 : vector<1x8x256xf32> to vector<8x256xf32>
    %380 = arith.mulf %377, %379 : vector<8x256xf32>
    %381 = arith.addf %376, %380 : vector<8x256xf32>
    %c1_i32_214 = arith.constant 1 : i32
    %382 = tpu.dynamic_rotate %367 by %c1_i32_214 dim 1 : vector<8x256xf32>, i32 -> vector<8x256xf32>
    %c3_215 = arith.constant 3 : index
    %c0_216 = arith.constant 0 : index
    %c0_217 = arith.constant 0 : index
    %383 = vector.load %arg6[%c3_215, %c0_216, %c0_217] : memref<9x8x256xf32, #tpu.memory_space<vmem>>, vector<1x8x256xf32>
    %384 = vector.shape_cast %383 : vector<1x8x256xf32> to vector<8x256xf32>
    %385 = arith.mulf %382, %384 : vector<8x256xf32>
    %386 = arith.addf %381, %385 : vector<8x256xf32>
    %c4_218 = arith.constant 4 : index
    %c0_219 = arith.constant 0 : index
    %c0_220 = arith.constant 0 : index
    %387 = vector.load %arg6[%c4_218, %c0_219, %c0_220] : memref<9x8x256xf32, #tpu.memory_space<vmem>>, vector<1x8x256xf32>
    %388 = vector.shape_cast %387 : vector<1x8x256xf32> to vector<8x256xf32>
    %389 = arith.mulf %367, %388 : vector<8x256xf32>
    %390 = arith.addf %386, %389 : vector<8x256xf32>
    %c255_i32_221 = arith.constant 255 : i32
    %391 = tpu.dynamic_rotate %367 by %c255_i32_221 dim 1 : vector<8x256xf32>, i32 -> vector<8x256xf32>
    %c5_222 = arith.constant 5 : index
    %c0_223 = arith.constant 0 : index
    %c0_224 = arith.constant 0 : index
    %392 = vector.load %arg6[%c5_222, %c0_223, %c0_224] : memref<9x8x256xf32, #tpu.memory_space<vmem>>, vector<1x8x256xf32>
    %393 = vector.shape_cast %392 : vector<1x8x256xf32> to vector<8x256xf32>
    %394 = arith.mulf %391, %393 : vector<8x256xf32>
    %395 = arith.addf %390, %394 : vector<8x256xf32>
    %c249_i32 = arith.constant 249 : i32
    %396 = tpu.dynamic_rotate %367 by %c249_i32 dim 1 : vector<8x256xf32>, i32 -> vector<8x256xf32>
    %c6_225 = arith.constant 6 : index
    %c0_226 = arith.constant 0 : index
    %c0_227 = arith.constant 0 : index
    %397 = vector.load %arg6[%c6_225, %c0_226, %c0_227] : memref<9x8x256xf32, #tpu.memory_space<vmem>>, vector<1x8x256xf32>
    %398 = vector.shape_cast %397 : vector<1x8x256xf32> to vector<8x256xf32>
    %399 = arith.mulf %396, %398 : vector<8x256xf32>
    %400 = arith.addf %395, %399 : vector<8x256xf32>
    %c248_i32 = arith.constant 248 : i32
    %401 = tpu.dynamic_rotate %367 by %c248_i32 dim 1 : vector<8x256xf32>, i32 -> vector<8x256xf32>
    %c7_228 = arith.constant 7 : index
    %c0_229 = arith.constant 0 : index
    %c0_230 = arith.constant 0 : index
    %402 = vector.load %arg6[%c7_228, %c0_229, %c0_230] : memref<9x8x256xf32, #tpu.memory_space<vmem>>, vector<1x8x256xf32>
    %403 = vector.shape_cast %402 : vector<1x8x256xf32> to vector<8x256xf32>
    %404 = arith.mulf %401, %403 : vector<8x256xf32>
    %405 = arith.addf %400, %404 : vector<8x256xf32>
    %c247_i32 = arith.constant 247 : i32
    %406 = tpu.dynamic_rotate %367 by %c247_i32 dim 1 : vector<8x256xf32>, i32 -> vector<8x256xf32>
    %c8_231 = arith.constant 8 : index
    %c0_232 = arith.constant 0 : index
    %c0_233 = arith.constant 0 : index
    %407 = vector.load %arg6[%c8_231, %c0_232, %c0_233] : memref<9x8x256xf32, #tpu.memory_space<vmem>>, vector<1x8x256xf32>
    %408 = vector.shape_cast %407 : vector<1x8x256xf32> to vector<8x256xf32>
    %409 = arith.mulf %406, %408 : vector<8x256xf32>
    %410 = arith.addf %405, %409 : vector<8x256xf32>
    %c0_234 = arith.constant 0 : index
    %c0_235 = arith.constant 0 : index
    %411 = vector.load %arg8[%c0_234, %c0_235] : memref<256x256xf32, #tpu.memory_space<vmem>>, vector<256x256xf32>
    %cst_236 = arith.constant dense<0.000000e+00> : vector<8x256xf32>
    %412 = tpu.matmul %410, %411, %cst_236 {dimension_numbers = #tpu.dot_dimension_numbers<[1], [0], [0], [1], [0, 0, 1, 1], [], []>} : vector<8x256xf32>, vector<256x256xf32>, vector<8x256xf32> -> vector<8x256xf32>
    %c8_237 = arith.constant 8 : index
    %c0_238 = arith.constant 0 : index
    %c0_239 = arith.constant 0 : index
    %413 = vector.load %arg9[%c8_237, %c0_238, %c0_239] : memref<9x8x256xf32, #tpu.memory_space<vmem>>, vector<1x8x256xf32>
    %414 = vector.shape_cast %413 : vector<1x8x256xf32> to vector<8x256xf32>
    %415 = arith.mulf %1, %414 : vector<8x256xf32>
    %416 = arith.addf %415, %412 : vector<8x256xf32>
    %c0_240 = arith.constant 0 : index
    %c0_241 = arith.constant 0 : index
    %c0_242 = arith.constant 0 : index
    %417 = vector.load %arg11[%c0_240, %c0_241, %c0_242] : memref<1x8x256xf32, #tpu.memory_space<vmem>>, vector<1x8x256xf32>
    %418 = vector.shape_cast %417 : vector<1x8x256xf32> to vector<8x256xf32>
    %419 = vector.shape_cast %416 : vector<8x256xf32> to vector<1x8x256xf32>
    tpu.vector_store %arg11[%c0_240, %c0_241, %c0_242], %419 {strides = array<i32>} : memref<1x8x256xf32, #tpu.memory_space<vmem>>, vector<1x8x256xf32>,
    return
  }
  func.func @transform_0(%arg0: i32) -> (i32, i32, i32) {
    %c0_i32 = arith.constant 0 : i32
    %c0_i32_0 = arith.constant 0 : i32
    %c0_i32_1 = arith.constant 0 : i32
    return %arg0, %c0_i32, %c0_i32_0 : i32, i32, i32
  }
  func.func @transform_1(%arg0: i32) -> (i32, i32, i32) {
    %c0_i32 = arith.constant 0 : i32
    %c0_i32_0 = arith.constant 0 : i32
    %c0_i32_1 = arith.constant 0 : i32
    %c0_i32_2 = arith.constant 0 : i32
    return %c0_i32, %c0_i32_0, %c0_i32_1 : i32, i32, i32
  }
  func.func @transform_2(%arg0: i32) -> (i32, i32, i32) {
    %c0_i32 = arith.constant 0 : i32
    %c0_i32_0 = arith.constant 0 : i32
    %c0_i32_1 = arith.constant 0 : i32
    %c0_i32_2 = arith.constant 0 : i32
    return %c0_i32, %c0_i32_0, %c0_i32_1 : i32, i32, i32
  }
  func.func @transform_3(%arg0: i32) -> (i32, i32, i32) {
    %c0_i32 = arith.constant 0 : i32
    %c0_i32_0 = arith.constant 0 : i32
    %c0_i32_1 = arith.constant 0 : i32
    %c0_i32_2 = arith.constant 0 : i32
    return %c0_i32, %c0_i32_0, %c0_i32_1 : i32, i32, i32
  }
  func.func @transform_4(%arg0: i32) -> (i32, i32) {
    %c0_i32 = arith.constant 0 : i32
    %c0_i32_0 = arith.constant 0 : i32
    %c0_i32_1 = arith.constant 0 : i32
    return %c0_i32, %c0_i32_0 : i32, i32
  }
  func.func @transform_5(%arg0: i32) -> (i32, i32, i32) {
    %c0_i32 = arith.constant 0 : i32
    %c0_i32_0 = arith.constant 0 : i32
    %c0_i32_1 = arith.constant 0 : i32
    %c0_i32_2 = arith.constant 0 : i32
    return %c0_i32, %c0_i32_0, %c0_i32_1 : i32, i32, i32
  }
  func.func @transform_6(%arg0: i32) -> (i32, i32) {
    %c0_i32 = arith.constant 0 : i32
    %c0_i32_0 = arith.constant 0 : i32
    %c0_i32_1 = arith.constant 0 : i32
    return %c0_i32, %c0_i32_0 : i32, i32
  }
  func.func @transform_7(%arg0: i32) -> (i32, i32) {
    %c0_i32 = arith.constant 0 : i32
    %c0_i32_0 = arith.constant 0 : i32
    %c0_i32_1 = arith.constant 0 : i32
    return %c0_i32, %c0_i32_0 : i32, i32
  }
  func.func @transform_8(%arg0: i32) -> (i32, i32, i32) {
    %c0_i32 = arith.constant 0 : i32
    %c0_i32_0 = arith.constant 0 : i32
    %c0_i32_1 = arith.constant 0 : i32
    %c0_i32_2 = arith.constant 0 : i32
    return %c0_i32, %c0_i32_0, %c0_i32_1 : i32, i32, i32
  }
  func.func @transform_9(%arg0: i32) -> (i32, i32, i32) {
    %c0_i32 = arith.constant 0 : i32
    %c0_i32_0 = arith.constant 0 : i32
    %c0_i32_1 = arith.constant 0 : i32
    return %arg0, %c0_i32, %c0_i32_0 : i32, i32, i32
  }
  func.func @transform_10(%arg0: i32) -> (i32, i32, i32) {
    %c0_i32 = arith.constant 0 : i32
    %c0_i32_0 = arith.constant 0 : i32
    %c0_i32_1 = arith.constant 0 : i32
    return %arg0, %c0_i32, %c0_i32_0 : i32, i32, i32
  }
}

module attributes {stable_mosaic.version = 11 : i64} {
  func.func @_attn_proj_kernel(%arg0: i32, %arg1: memref<16x256xf32, #tpu.memory_space<vmem>>, %arg2: memref<16x256xf32, #tpu.memory_space<vmem>>, %arg3: memref<16x256xf32, #tpu.memory_space<vmem>>, %arg4: memref<256x768xbf16, #tpu.memory_space<vmem>>, %arg5: memref<1x768xf32, #tpu.memory_space<vmem>>, %arg6: memref<256x768xbf16, #tpu.memory_space<vmem>>, %arg7: memref<1x768xf32, #tpu.memory_space<vmem>>, %arg8: memref<256x256xbf16, #tpu.memory_space<vmem>>, %arg9: memref<1x256xf32, #tpu.memory_space<vmem>>, %arg10: memref<256x256xbf16, #tpu.memory_space<vmem>>, %arg11: memref<1x256xf32, #tpu.memory_space<vmem>>, %arg12: memref<256x8xf32, #tpu.memory_space<vmem>>, %arg13: memref<8x256xf32, #tpu.memory_space<vmem>>, %arg14: memref<16x16xbf16, #tpu.memory_space<vmem>>, %arg15: memref<16x16xbf16, #tpu.memory_space<vmem>>, %arg16: memref<16x1xf32, #tpu.memory_space<vmem>>, %arg17: memref<16x256xf32, #tpu.memory_space<vmem>>) attributes {dimension_semantics = [#tpu.dimension_semantics<arbitrary>], iteration_bounds = array<i64: 1>, scalar_prefetch = 0 : i64, scratch_operands = 0 : i64, tpu.core_type = #tpu.core_type<tc>, window_params = [{pipeline_mode = #tpu.pipeline_mode<synchronous>, transform_indices = @transform_0, window_bounds = array<i64: 16, 256>}, {pipeline_mode = #tpu.pipeline_mode<synchronous>, transform_indices = @transform_1, window_bounds = array<i64: 16, 256>}, {pipeline_mode = #tpu.pipeline_mode<synchronous>, transform_indices = @transform_2, window_bounds = array<i64: 16, 256>}, {pipeline_mode = #tpu.pipeline_mode<synchronous>, transform_indices = @transform_3, window_bounds = array<i64: 256, 768>}, {pipeline_mode = #tpu.pipeline_mode<synchronous>, transform_indices = @transform_4, window_bounds = array<i64: 1, 768>}, {pipeline_mode = #tpu.pipeline_mode<synchronous>, transform_indices = @transform_5, window_bounds = array<i64: 256, 768>}, {pipeline_mode = #tpu.pipeline_mode<synchronous>, transform_indices = @transform_6, window_bounds = array<i64: 1, 768>}, {pipeline_mode = #tpu.pipeline_mode<synchronous>, transform_indices = @transform_7, window_bounds = array<i64: 256, 256>}, {pipeline_mode = #tpu.pipeline_mode<synchronous>, transform_indices = @transform_8, window_bounds = array<i64: 1, 256>}, {pipeline_mode = #tpu.pipeline_mode<synchronous>, transform_indices = @transform_9, window_bounds = array<i64: 256, 256>}, {pipeline_mode = #tpu.pipeline_mode<synchronous>, transform_indices = @transform_10, window_bounds = array<i64: 1, 256>}, {pipeline_mode = #tpu.pipeline_mode<synchronous>, transform_indices = @transform_11, window_bounds = array<i64: 256, 8>}, {pipeline_mode = #tpu.pipeline_mode<synchronous>, transform_indices = @transform_12, window_bounds = array<i64: 8, 256>}, {pipeline_mode = #tpu.pipeline_mode<synchronous>, transform_indices = @transform_13, window_bounds = array<i64: 16, 16>}, {pipeline_mode = #tpu.pipeline_mode<synchronous>, transform_indices = @transform_14, window_bounds = array<i64: 16, 16>}, {pipeline_mode = #tpu.pipeline_mode<synchronous>, transform_indices = @transform_15, window_bounds = array<i64: 16, 1>}, {pipeline_mode = #tpu.pipeline_mode<synchronous>, transform_indices = @transform_16, window_bounds = array<i64: 16, 256>}]} {
    %c0 = arith.constant 0 : index
    %c0_0 = arith.constant 0 : index
    %0 = vector.load %arg1[%c0, %c0_0] : memref<16x256xf32, #tpu.memory_space<vmem>>, vector<16x256xf32>
    %c0_1 = arith.constant 0 : index
    %c0_2 = arith.constant 0 : index
    %1 = vector.load %arg2[%c0_1, %c0_2] : memref<16x256xf32, #tpu.memory_space<vmem>>, vector<16x256xf32>
    %2 = arith.truncf %0 : vector<16x256xf32> to vector<16x256xbf16>
    %3 = arith.truncf %1 : vector<16x256xf32> to vector<16x256xbf16>
    %c0_3 = arith.constant 0 : index
    %c0_4 = arith.constant 0 : index
    %4 = vector.load %arg4[%c0_3, %c0_4] : memref<256x768xbf16, #tpu.memory_space<vmem>>, vector<256x768xbf16>
    %cst = arith.constant dense<0.000000e+00> : vector<16x768xf32>
    %5 = tpu.matmul %2, %4, %cst {dimension_numbers = #tpu.dot_dimension_numbers<[1], [0], [0], [1], [0, 0, 1, 1], [], []>} : vector<16x256xbf16>, vector<256x768xbf16>, vector<16x768xf32> -> vector<16x768xf32>
    %c0_5 = arith.constant 0 : index
    %c0_6 = arith.constant 0 : index
    %6 = vector.load %arg5[%c0_5, %c0_6] : memref<1x768xf32, #tpu.memory_space<vmem>>, vector<1x768xf32>
    %7 = vector.broadcast %6 : vector<1x768xf32> to vector<16x768xf32>
    %8 = arith.addf %5, %7 : vector<16x768xf32>
    %c0_7 = arith.constant 0 : index
    %c0_8 = arith.constant 0 : index
    %9 = vector.load %arg6[%c0_7, %c0_8] : memref<256x768xbf16, #tpu.memory_space<vmem>>, vector<256x768xbf16>
    %cst_9 = arith.constant dense<0.000000e+00> : vector<16x768xf32>
    %10 = tpu.matmul %3, %9, %cst_9 {dimension_numbers = #tpu.dot_dimension_numbers<[1], [0], [0], [1], [0, 0, 1, 1], [], []>} : vector<16x256xbf16>, vector<256x768xbf16>, vector<16x768xf32> -> vector<16x768xf32>
    %c0_10 = arith.constant 0 : index
    %c0_11 = arith.constant 0 : index
    %11 = vector.load %arg7[%c0_10, %c0_11] : memref<1x768xf32, #tpu.memory_space<vmem>>, vector<1x768xf32>
    %12 = vector.broadcast %11 : vector<1x768xf32> to vector<16x768xf32>
    %13 = arith.addf %10, %12 : vector<16x768xf32>
    %14 = vector.extract_strided_slice %8 {offsets = [0, 0], sizes = [16, 256], strides = [1, 1]} : vector<16x768xf32> to vector<16x256xf32>
    %15 = vector.extract_strided_slice %8 {offsets = [0, 256], sizes = [16, 256], strides = [1, 1]} : vector<16x768xf32> to vector<16x256xf32>
    %16 = vector.extract_strided_slice %8 {offsets = [0, 512], sizes = [16, 256], strides = [1, 1]} : vector<16x768xf32> to vector<16x256xf32>
    %17 = vector.extract_strided_slice %13 {offsets = [0, 0], sizes = [16, 256], strides = [1, 1]} : vector<16x768xf32> to vector<16x256xf32>
    %18 = vector.extract_strided_slice %13 {offsets = [0, 256], sizes = [16, 256], strides = [1, 1]} : vector<16x768xf32> to vector<16x256xf32>
    %19 = vector.extract_strided_slice %13 {offsets = [0, 512], sizes = [16, 256], strides = [1, 1]} : vector<16x768xf32> to vector<16x256xf32>
    %c0_12 = arith.constant 0 : index
    %c0_13 = arith.constant 0 : index
    %20 = vector.load %arg12[%c0_12, %c0_13] : memref<256x8xf32, #tpu.memory_space<vmem>>, vector<256x8xf32>
    %c0_14 = arith.constant 0 : index
    %c0_15 = arith.constant 0 : index
    %21 = vector.load %arg13[%c0_14, %c0_15] : memref<8x256xf32, #tpu.memory_space<vmem>>, vector<8x256xf32>
    %cst_16 = arith.constant 0.176776692 : f32
    %22 = vector.broadcast %cst_16 : f32 to vector<16x256xf32>
    %23 = arith.mulf %14, %22 : vector<16x256xf32>
    %24 = vector.extract_strided_slice %23 {offsets = [0, 0], sizes = [8, 256], strides = [1, 1]} : vector<16x256xf32> to vector<8x256xf32>
    %25 = vector.extract_strided_slice %18 {offsets = [0, 0], sizes = [8, 256], strides = [1, 1]} : vector<16x256xf32> to vector<8x256xf32>
    %26 = arith.mulf %24, %25 : vector<8x256xf32>
    %27 = vector.extract_strided_slice %18 {offsets = [8, 0], sizes = [8, 256], strides = [1, 1]} : vector<16x256xf32> to vector<8x256xf32>
    %28 = arith.mulf %24, %27 : vector<8x256xf32>
    %29 = vector.extract_strided_slice %23 {offsets = [8, 0], sizes = [8, 256], strides = [1, 1]} : vector<16x256xf32> to vector<8x256xf32>
    %30 = vector.extract_strided_slice %18 {offsets = [0, 0], sizes = [8, 256], strides = [1, 1]} : vector<16x256xf32> to vector<8x256xf32>
    %31 = arith.mulf %29, %30 : vector<8x256xf32>
    %32 = vector.extract_strided_slice %18 {offsets = [8, 0], sizes = [8, 256], strides = [1, 1]} : vector<16x256xf32> to vector<8x256xf32>
    %33 = arith.mulf %29, %32 : vector<8x256xf32>
    %cst_17 = arith.constant 0.176776692 : f32
    %34 = vector.broadcast %cst_17 : f32 to vector<16x256xf32>
    %35 = arith.mulf %17, %34 : vector<16x256xf32>
    %36 = vector.extract_strided_slice %35 {offsets = [0, 0], sizes = [8, 256], strides = [1, 1]} : vector<16x256xf32> to vector<8x256xf32>
    %37 = vector.extract_strided_slice %15 {offsets = [0, 0], sizes = [8, 256], strides = [1, 1]} : vector<16x256xf32> to vector<8x256xf32>
    %38 = arith.mulf %36, %37 : vector<8x256xf32>
    %39 = vector.extract_strided_slice %15 {offsets = [8, 0], sizes = [8, 256], strides = [1, 1]} : vector<16x256xf32> to vector<8x256xf32>
    %40 = arith.mulf %36, %39 : vector<8x256xf32>
    %41 = vector.extract_strided_slice %35 {offsets = [8, 0], sizes = [8, 256], strides = [1, 1]} : vector<16x256xf32> to vector<8x256xf32>
    %42 = vector.extract_strided_slice %15 {offsets = [0, 0], sizes = [8, 256], strides = [1, 1]} : vector<16x256xf32> to vector<8x256xf32>
    %43 = arith.mulf %41, %42 : vector<8x256xf32>
    %44 = vector.extract_strided_slice %15 {offsets = [8, 0], sizes = [8, 256], strides = [1, 1]} : vector<16x256xf32> to vector<8x256xf32>
    %45 = arith.mulf %41, %44 : vector<8x256xf32>
    %46 = tpu.concatenate %26, %28, %31, %33, %38, %40, %43, %45 in 0 : vector<8x256xf32>, vector<8x256xf32>, vector<8x256xf32>, vector<8x256xf32>, vector<8x256xf32>, vector<8x256xf32>, vector<8x256xf32>, vector<8x256xf32> -> vector<64x256xf32>
    %cst_18 = arith.constant dense<0.000000e+00> : vector<64x8xf32>
    %47 = tpu.matmul %46, %20, %cst_18 {dimension_numbers = #tpu.dot_dimension_numbers<[1], [0], [0], [1], [0, 0, 1, 1], [], []>} : vector<64x256xf32>, vector<256x8xf32>, vector<64x8xf32> -> vector<64x8xf32>
    %48 = vector.extract_strided_slice %47 {offsets = [0, 0], sizes = [8, 8], strides = [1, 1]} : vector<64x8xf32> to vector<8x8xf32>
    %49 = vector.extract_strided_slice %47 {offsets = [8, 0], sizes = [8, 8], strides = [1, 1]} : vector<64x8xf32> to vector<8x8xf32>
    %50 = arith.maximumf %48, %49 : vector<8x8xf32>
    %51 = arith.subf %48, %50 : vector<8x8xf32>
    %52 = math.exp %51 : vector<8x8xf32>
    %53 = arith.subf %49, %50 : vector<8x8xf32>
    %54 = math.exp %53 : vector<8x8xf32>
    %55 = arith.addf %52, %54 : vector<8x8xf32>
    %56 = tpu.reciprocal %55 {approx = true} : vector<8x8xf32> -> vector<8x8xf32>
    %57 = arith.mulf %52, %56 : vector<8x8xf32>
    %58 = arith.mulf %54, %56 : vector<8x8xf32>
    %59 = vector.extract_strided_slice %47 {offsets = [16, 0], sizes = [8, 8], strides = [1, 1]} : vector<64x8xf32> to vector<8x8xf32>
    %60 = vector.extract_strided_slice %47 {offsets = [24, 0], sizes = [8, 8], strides = [1, 1]} : vector<64x8xf32> to vector<8x8xf32>
    %61 = arith.maximumf %59, %60 : vector<8x8xf32>
    %62 = arith.subf %59, %61 : vector<8x8xf32>
    %63 = math.exp %62 : vector<8x8xf32>
    %64 = arith.subf %60, %61 : vector<8x8xf32>
    %65 = math.exp %64 : vector<8x8xf32>
    %66 = arith.addf %63, %65 : vector<8x8xf32>
    %67 = tpu.reciprocal %66 {approx = true} : vector<8x8xf32> -> vector<8x8xf32>
    %68 = arith.mulf %63, %67 : vector<8x8xf32>
    %69 = arith.mulf %65, %67 : vector<8x8xf32>
    %70 = vector.extract_strided_slice %47 {offsets = [32, 0], sizes = [8, 8], strides = [1, 1]} : vector<64x8xf32> to vector<8x8xf32>
    %71 = vector.extract_strided_slice %47 {offsets = [40, 0], sizes = [8, 8], strides = [1, 1]} : vector<64x8xf32> to vector<8x8xf32>
    %72 = arith.maximumf %70, %71 : vector<8x8xf32>
    %73 = arith.subf %70, %72 : vector<8x8xf32>
    %74 = math.exp %73 : vector<8x8xf32>
    %75 = arith.subf %71, %72 : vector<8x8xf32>
    %76 = math.exp %75 : vector<8x8xf32>
    %77 = arith.addf %74, %76 : vector<8x8xf32>
    %78 = tpu.reciprocal %77 {approx = true} : vector<8x8xf32> -> vector<8x8xf32>
    %79 = arith.mulf %74, %78 : vector<8x8xf32>
    %80 = arith.mulf %76, %78 : vector<8x8xf32>
    %81 = vector.extract_strided_slice %47 {offsets = [48, 0], sizes = [8, 8], strides = [1, 1]} : vector<64x8xf32> to vector<8x8xf32>
    %82 = vector.extract_strided_slice %47 {offsets = [56, 0], sizes = [8, 8], strides = [1, 1]} : vector<64x8xf32> to vector<8x8xf32>
    %83 = arith.maximumf %81, %82 : vector<8x8xf32>
    %84 = arith.subf %81, %83 : vector<8x8xf32>
    %85 = math.exp %84 : vector<8x8xf32>
    %86 = arith.subf %82, %83 : vector<8x8xf32>
    %87 = math.exp %86 : vector<8x8xf32>
    %88 = arith.addf %85, %87 : vector<8x8xf32>
    %89 = tpu.reciprocal %88 {approx = true} : vector<8x8xf32> -> vector<8x8xf32>
    %90 = arith.mulf %85, %89 : vector<8x8xf32>
    %91 = arith.mulf %87, %89 : vector<8x8xf32>
    %92 = tpu.concatenate %57, %58, %68, %69, %79, %80, %90, %91 in 0 : vector<8x8xf32>, vector<8x8xf32>, vector<8x8xf32>, vector<8x8xf32>, vector<8x8xf32>, vector<8x8xf32>, vector<8x8xf32>, vector<8x8xf32> -> vector<64x8xf32>
    %cst_19 = arith.constant dense<0.000000e+00> : vector<64x256xf32>
    %93 = tpu.matmul %92, %21, %cst_19 {dimension_numbers = #tpu.dot_dimension_numbers<[1], [0], [0], [1], [0, 0, 1, 1], [], []>} : vector<64x8xf32>, vector<8x256xf32>, vector<64x256xf32> -> vector<64x256xf32>
    %94 = vector.extract_strided_slice %93 {offsets = [0, 0], sizes = [8, 256], strides = [1, 1]} : vector<64x256xf32> to vector<8x256xf32>
    %95 = vector.extract_strided_slice %19 {offsets = [0, 0], sizes = [8, 256], strides = [1, 1]} : vector<16x256xf32> to vector<8x256xf32>
    %96 = arith.mulf %94, %95 : vector<8x256xf32>
    %97 = vector.extract_strided_slice %93 {offsets = [8, 0], sizes = [8, 256], strides = [1, 1]} : vector<64x256xf32> to vector<8x256xf32>
    %98 = vector.extract_strided_slice %19 {offsets = [8, 0], sizes = [8, 256], strides = [1, 1]} : vector<16x256xf32> to vector<8x256xf32>
    %99 = arith.mulf %97, %98 : vector<8x256xf32>
    %100 = arith.addf %96, %99 : vector<8x256xf32>
    %101 = vector.extract_strided_slice %93 {offsets = [16, 0], sizes = [8, 256], strides = [1, 1]} : vector<64x256xf32> to vector<8x256xf32>
    %102 = vector.extract_strided_slice %19 {offsets = [0, 0], sizes = [8, 256], strides = [1, 1]} : vector<16x256xf32> to vector<8x256xf32>
    %103 = arith.mulf %101, %102 : vector<8x256xf32>
    %104 = vector.extract_strided_slice %93 {offsets = [24, 0], sizes = [8, 256], strides = [1, 1]} : vector<64x256xf32> to vector<8x256xf32>
    %105 = vector.extract_strided_slice %19 {offsets = [8, 0], sizes = [8, 256], strides = [1, 1]} : vector<16x256xf32> to vector<8x256xf32>
    %106 = arith.mulf %104, %105 : vector<8x256xf32>
    %107 = arith.addf %103, %106 : vector<8x256xf32>
    %108 = tpu.concatenate %100, %107 in 0 : vector<8x256xf32>, vector<8x256xf32> -> vector<16x256xf32>
    %109 = vector.extract_strided_slice %93 {offsets = [32, 0], sizes = [8, 256], strides = [1, 1]} : vector<64x256xf32> to vector<8x256xf32>
    %110 = vector.extract_strided_slice %16 {offsets = [0, 0], sizes = [8, 256], strides = [1, 1]} : vector<16x256xf32> to vector<8x256xf32>
    %111 = arith.mulf %109, %110 : vector<8x256xf32>
    %112 = vector.extract_strided_slice %93 {offsets = [40, 0], sizes = [8, 256], strides = [1, 1]} : vector<64x256xf32> to vector<8x256xf32>
    %113 = vector.extract_strided_slice %16 {offsets = [8, 0], sizes = [8, 256], strides = [1, 1]} : vector<16x256xf32> to vector<8x256xf32>
    %114 = arith.mulf %112, %113 : vector<8x256xf32>
    %115 = arith.addf %111, %114 : vector<8x256xf32>
    %116 = vector.extract_strided_slice %93 {offsets = [48, 0], sizes = [8, 256], strides = [1, 1]} : vector<64x256xf32> to vector<8x256xf32>
    %117 = vector.extract_strided_slice %16 {offsets = [0, 0], sizes = [8, 256], strides = [1, 1]} : vector<16x256xf32> to vector<8x256xf32>
    %118 = arith.mulf %116, %117 : vector<8x256xf32>
    %119 = vector.extract_strided_slice %93 {offsets = [56, 0], sizes = [8, 256], strides = [1, 1]} : vector<64x256xf32> to vector<8x256xf32>
    %120 = vector.extract_strided_slice %16 {offsets = [8, 0], sizes = [8, 256], strides = [1, 1]} : vector<16x256xf32> to vector<8x256xf32>
    %121 = arith.mulf %119, %120 : vector<8x256xf32>
    %122 = arith.addf %118, %121 : vector<8x256xf32>
    %123 = tpu.concatenate %115, %122 in 0 : vector<8x256xf32>, vector<8x256xf32> -> vector<16x256xf32>
    %124 = arith.truncf %108 : vector<16x256xf32> to vector<16x256xbf16>
    %c0_20 = arith.constant 0 : index
    %c0_21 = arith.constant 0 : index
    %125 = vector.load %arg8[%c0_20, %c0_21] : memref<256x256xbf16, #tpu.memory_space<vmem>>, vector<256x256xbf16>
    %cst_22 = arith.constant dense<0.000000e+00> : vector<16x256xf32>
    %126 = tpu.matmul %124, %125, %cst_22 {dimension_numbers = #tpu.dot_dimension_numbers<[1], [0], [0], [1], [0, 0, 1, 1], [], []>} : vector<16x256xbf16>, vector<256x256xbf16>, vector<16x256xf32> -> vector<16x256xf32>
    %c0_23 = arith.constant 0 : index
    %c0_24 = arith.constant 0 : index
    %127 = vector.load %arg9[%c0_23, %c0_24] : memref<1x256xf32, #tpu.memory_space<vmem>>, vector<1x256xf32>
    %128 = vector.broadcast %127 : vector<1x256xf32> to vector<16x256xf32>
    %129 = arith.addf %126, %128 : vector<16x256xf32>
    %130 = arith.truncf %123 : vector<16x256xf32> to vector<16x256xbf16>
    %c0_25 = arith.constant 0 : index
    %c0_26 = arith.constant 0 : index
    %131 = vector.load %arg10[%c0_25, %c0_26] : memref<256x256xbf16, #tpu.memory_space<vmem>>, vector<256x256xbf16>
    %cst_27 = arith.constant dense<0.000000e+00> : vector<16x256xf32>
    %132 = tpu.matmul %130, %131, %cst_27 {dimension_numbers = #tpu.dot_dimension_numbers<[1], [0], [0], [1], [0, 0, 1, 1], [], []>} : vector<16x256xbf16>, vector<256x256xbf16>, vector<16x256xf32> -> vector<16x256xf32>
    %c0_28 = arith.constant 0 : index
    %c0_29 = arith.constant 0 : index
    %133 = vector.load %arg11[%c0_28, %c0_29] : memref<1x256xf32, #tpu.memory_space<vmem>>, vector<1x256xf32>
    %134 = vector.broadcast %133 : vector<1x256xf32> to vector<16x256xf32>
    %135 = arith.addf %132, %134 : vector<16x256xf32>
    %136 = arith.addf %129, %0 : vector<16x256xf32>
    %cst_30 = arith.constant 0.000000e+00 : f32
    %137 = vector.broadcast %cst_30 : f32 to vector<16x256xf32>
    %138 = arith.maximumf %136, %137 : vector<16x256xf32>
    %139 = arith.truncf %138 : vector<16x256xf32> to vector<16x256xbf16>
    %140 = arith.addf %135, %1 : vector<16x256xf32>
    %cst_31 = arith.constant 0.000000e+00 : f32
    %141 = vector.broadcast %cst_31 : f32 to vector<16x256xf32>
    %142 = arith.maximumf %140, %141 : vector<16x256xf32>
    %143 = arith.truncf %142 : vector<16x256xf32> to vector<16x256xbf16>
    %c0_32 = arith.constant 0 : index
    %c0_33 = arith.constant 0 : index
    %144 = vector.load %arg14[%c0_32, %c0_33] : memref<16x16xbf16, #tpu.memory_space<vmem>>, vector<16x16xbf16>
    %cst_34 = arith.constant dense<0.000000e+00> : vector<16x256xf32>
    %145 = tpu.matmul %144, %139, %cst_34 {dimension_numbers = #tpu.dot_dimension_numbers<[1], [0], [0], [1], [0, 0, 1, 1], [], []>} : vector<16x16xbf16>, vector<16x256xbf16>, vector<16x256xf32> -> vector<16x256xf32>
    %c0_35 = arith.constant 0 : index
    %c0_36 = arith.constant 0 : index
    %146 = vector.load %arg15[%c0_35, %c0_36] : memref<16x16xbf16, #tpu.memory_space<vmem>>, vector<16x16xbf16>
    %cst_37 = arith.constant dense<0.000000e+00> : vector<16x256xf32>
    %147 = tpu.matmul %146, %143, %cst_37 {dimension_numbers = #tpu.dot_dimension_numbers<[1], [0], [0], [1], [0, 0, 1, 1], [], []>} : vector<16x16xbf16>, vector<16x256xbf16>, vector<16x256xf32> -> vector<16x256xf32>
    %148 = arith.addf %145, %147 : vector<16x256xf32>
    %c0_38 = arith.constant 0 : index
    %c0_39 = arith.constant 0 : index
    %149 = vector.load %arg16[%c0_38, %c0_39] : memref<16x1xf32, #tpu.memory_space<vmem>>, vector<16x1xf32>
    %150 = vector.broadcast %149 : vector<16x1xf32> to vector<16x256xf32>
    %151 = arith.addf %148, %150 : vector<16x256xf32>
    %c0_40 = arith.constant 0 : index
    %c0_41 = arith.constant 0 : index
    %152 = vector.load %arg3[%c0_40, %c0_41] : memref<16x256xf32, #tpu.memory_space<vmem>>, vector<16x256xf32>
    %153 = arith.addf %151, %152 : vector<16x256xf32>
    %c0_42 = arith.constant 0 : index
    %c0_43 = arith.constant 0 : index
    %154 = vector.load %arg17[%c0_42, %c0_43] : memref<16x256xf32, #tpu.memory_space<vmem>>, vector<16x256xf32>
    tpu.vector_store %arg17[%c0_42, %c0_43], %153 {strides = array<i32>} : memref<16x256xf32, #tpu.memory_space<vmem>>, vector<16x256xf32>,
    return
  }
  func.func @transform_0(%arg0: i32) -> (i32, i32) {
    %c0_i32 = arith.constant 0 : i32
    %c0_i32_0 = arith.constant 0 : i32
    %c0_i32_1 = arith.constant 0 : i32
    return %c0_i32, %c0_i32_0 : i32, i32
  }
  func.func @transform_1(%arg0: i32) -> (i32, i32) {
    %c0_i32 = arith.constant 0 : i32
    %c0_i32_0 = arith.constant 0 : i32
    %c0_i32_1 = arith.constant 0 : i32
    return %c0_i32, %c0_i32_0 : i32, i32
  }
  func.func @transform_2(%arg0: i32) -> (i32, i32) {
    %c0_i32 = arith.constant 0 : i32
    %c0_i32_0 = arith.constant 0 : i32
    %c0_i32_1 = arith.constant 0 : i32
    return %c0_i32, %c0_i32_0 : i32, i32
  }
  func.func @transform_3(%arg0: i32) -> (i32, i32) {
    %c0_i32 = arith.constant 0 : i32
    %c0_i32_0 = arith.constant 0 : i32
    %c0_i32_1 = arith.constant 0 : i32
    return %c0_i32, %c0_i32_0 : i32, i32
  }
  func.func @transform_4(%arg0: i32) -> (i32, i32) {
    %c0_i32 = arith.constant 0 : i32
    %c0_i32_0 = arith.constant 0 : i32
    %c0_i32_1 = arith.constant 0 : i32
    return %c0_i32, %c0_i32_0 : i32, i32
  }
  func.func @transform_5(%arg0: i32) -> (i32, i32) {
    %c0_i32 = arith.constant 0 : i32
    %c0_i32_0 = arith.constant 0 : i32
    %c0_i32_1 = arith.constant 0 : i32
    return %c0_i32, %c0_i32_0 : i32, i32
  }
  func.func @transform_6(%arg0: i32) -> (i32, i32) {
    %c0_i32 = arith.constant 0 : i32
    %c0_i32_0 = arith.constant 0 : i32
    %c0_i32_1 = arith.constant 0 : i32
    return %c0_i32, %c0_i32_0 : i32, i32
  }
  func.func @transform_7(%arg0: i32) -> (i32, i32) {
    %c0_i32 = arith.constant 0 : i32
    %c0_i32_0 = arith.constant 0 : i32
    %c0_i32_1 = arith.constant 0 : i32
    return %c0_i32, %c0_i32_0 : i32, i32
  }
  func.func @transform_8(%arg0: i32) -> (i32, i32) {
    %c0_i32 = arith.constant 0 : i32
    %c0_i32_0 = arith.constant 0 : i32
    %c0_i32_1 = arith.constant 0 : i32
    return %c0_i32, %c0_i32_0 : i32, i32
  }
  func.func @transform_9(%arg0: i32) -> (i32, i32) {
    %c0_i32 = arith.constant 0 : i32
    %c0_i32_0 = arith.constant 0 : i32
    %c0_i32_1 = arith.constant 0 : i32
    return %c0_i32, %c0_i32_0 : i32, i32
  }
  func.func @transform_10(%arg0: i32) -> (i32, i32) {
    %c0_i32 = arith.constant 0 : i32
    %c0_i32_0 = arith.constant 0 : i32
    %c0_i32_1 = arith.constant 0 : i32
    return %c0_i32, %c0_i32_0 : i32, i32
  }
  func.func @transform_11(%arg0: i32) -> (i32, i32) {
    %c0_i32 = arith.constant 0 : i32
    %c0_i32_0 = arith.constant 0 : i32
    %c0_i32_1 = arith.constant 0 : i32
    return %c0_i32, %c0_i32_0 : i32, i32
  }
  func.func @transform_12(%arg0: i32) -> (i32, i32) {
    %c0_i32 = arith.constant 0 : i32
    %c0_i32_0 = arith.constant 0 : i32
    %c0_i32_1 = arith.constant 0 : i32
    return %c0_i32, %c0_i32_0 : i32, i32
  }
  func.func @transform_13(%arg0: i32) -> (i32, i32) {
    %c0_i32 = arith.constant 0 : i32
    %c0_i32_0 = arith.constant 0 : i32
    %c0_i32_1 = arith.constant 0 : i32
    return %c0_i32, %c0_i32_0 : i32, i32
  }
  func.func @transform_14(%arg0: i32) -> (i32, i32) {
    %c0_i32 = arith.constant 0 : i32
    %c0_i32_0 = arith.constant 0 : i32
    %c0_i32_1 = arith.constant 0 : i32
    return %c0_i32, %c0_i32_0 : i32, i32
  }
  func.func @transform_15(%arg0: i32) -> (i32, i32) {
    %c0_i32 = arith.constant 0 : i32
    %c0_i32_0 = arith.constant 0 : i32
    %c0_i32_1 = arith.constant 0 : i32
    return %c0_i32, %c0_i32_0 : i32, i32
  }
  func.func @transform_16(%arg0: i32) -> (i32, i32) {
    %c0_i32 = arith.constant 0 : i32
    %c0_i32_0 = arith.constant 0 : i32
    %c0_i32_1 = arith.constant 0 : i32
    return %c0_i32, %c0_i32_0 : i32, i32
  }
}

</mosaic_0001>

<llo_original>
// kernel: mobile_mamba_forward.2
$region0: #{mobile_mamba_forward.2}
  #allocation0 [shape = 'u32[]', space=smem, size = 0x4, offset = 0x4, fixed_abs, tag = 'smem constant byte address 0x4 - core index']
  #allocation1 [shape = 'u32[144,128]{1,0:T(1,128)}', space=vmem, size = 0x12000, scoped, tag = 'internal scratch']
  %s0 = inlined_call_operand.vmem [shape: f32[2,8,256], index: 0, kind: input, shape index: {}]
  %s1 = inlined_call_operand.vmem [shape: f32[9,8,256], index: 1, kind: input, shape index: {}]
  %s2 = inlined_call_operand.vmem [shape: f32[9,8,256], index: 2, kind: input, shape index: {}]
  %s3 = inlined_call_operand.hbm [shape: f32[49,8,256], index: 3, kind: input, shape index: {}]
  %s4 = inlined_call_operand.vmem [shape: f32[8,8], index: 4, kind: input, shape index: {}]
  %s5 = inlined_call_operand.hbm [shape: f32[9,8,256], index: 5, kind: input, shape index: {}]
  %s6 = inlined_call_operand.hbm [shape: f32[256,256], index: 6, kind: input, shape index: {}]
  %s7 = inlined_call_operand.hbm [shape: f32[256,256], index: 7, kind: input, shape index: {}]
  %s8 = inlined_call_operand.hbm [shape: f32[9,8,256], index: 8, kind: input, shape index: {}]
  %s9 = inlined_call_operand.vmem [shape: f32[2,8,256], index: 9, kind: output, shape index: {0}]
  %s10 = inlined_call_operand.vmem [shape: f32[2,8,256], index: 10, kind: output, shape index: {1}]
  %11 = xla_tuple %s9, %s10
  %s12 = sld [smem:[#allocation0]]
  $region97: #{mobile_mamba_forward.2} parent=0
    _
  %s14 = ssub.s32 1, %s12
  %s15 = scalar_select 0, %s14, %s12
  $region1: #{mobile_mamba_forward.2} parent=0
    #allocation2 [shape = 'u8[401408]{0}', space=vmem, size = 0x62000, scoped, tag = 'input window, operand 3, single buffered']
    #allocation3 [shape = 's32[2]{0}', space=sflag, size = 0x8, scoped, tag = 'scoped memory for mobile_mamba_forward.2']
    #allocation4 [shape = 'u8[73728]{0}', space=vmem, size = 0x12000, scoped, tag = 'input window, operand 5, single buffered']
    #allocation5 [shape = 's32[1]{0}', space=sflag, size = 0x4, scoped, tag = 'scoped memory for mobile_mamba_forward.2']
    #allocation6 [shape = 'u8[262144]{0}', space=vmem, size = 0x40000, scoped, tag = 'input window, operand 6, single buffered']
    #allocation7 [shape = 'u8[262144]{0}', space=vmem, size = 0x40000, scoped, tag = 'input window, operand 7, single buffered']
    #allocation8 [shape = 's32[1]{0}', space=sflag, size = 0x4, scoped, tag = 'scoped memory for mobile_mamba_forward.2']
    #allocation9 [shape = 'u8[73728]{0}', space=vmem, size = 0x12000, scoped, tag = 'input window, operand 8, single buffered']
    %16 = vsyncpa [#allocation3], 0
    %17 = vsyncpa [#allocation5], 0
    %18 = vsyncpa [#allocation8], 0
    loop: start=0, step=1, limit=4
    $region2: #{mobile_mamba_forward.2} parent=1 // loop_pre_header
      _
    $region3: #{mobile_mamba_forward.2} parent=1 // loop_header
      %s20 = sphi 0, %s24
      %p21 = scmp.ge.s32.totalorder %s20, 4
      %s30 = sphi 0, %s32
      %s33 = sphi 0, %s30
      %s34 = sphi 0, %s33
      %s50 = sphi 0, %s34
      %s54 = sphi 0, %s54
      %s56 = sphi 0, %s54
      %s57 = sphi 0, %s56
      %s71 = sphi 0, %s57
      %s75 = sphi 0, %s75
      %s77 = sphi 0, %s75
      %s78 = sphi 0, %s77
      %s92 = sphi 0, %s78
      %s96 = sphi 0, %s96
      %s98 = sphi 0, %s96
      %s99 = sphi 0, %s98
      %s113 = sphi 0, %s99
      %s117 = sphi 0, %s117
      %s119 = sphi 0, %s117
      %s120 = sphi 0, %s119
      %s134 = sphi 0, %s120
      %s138 = sphi 0, %s138
      %s140 = sphi 0, %s138
      %s141 = sphi 0, %s140
      %s155 = sphi 0, %s141
      %s159 = sphi 0, %s159
      %s161 = sphi 0, %s159
      %s162 = sphi 0, %s161
      %s176 = sphi 0, %s162
      %s180 = sphi 0, %s180
      %s182 = sphi 0, %s180
      %s183 = sphi 0, %s182
      %s197 = sphi 0, %s183
      %s201 = sphi 0, %s201
      %s203 = sphi 0, %s201
      %s204 = sphi 0, %s203
      %s218 = sphi 0, %s204
      %s224 = sphi 0, %s226
      %s227 = sphi 0, %s224
      %s228 = sphi 0, %s227
      %s244 = sphi 0, %s228
      %s250 = sphi 0, %s252
      %s253 = sphi 0, %s250
      %s254 = sphi 0, %s253
      %s270 = sphi 0, %s254
    $region4: #{mobile_mamba_forward.2} parent=1 // loop_header_branch
      %23 = sbr.rel (%p21) target = $region8
    $region5: #{mobile_mamba_forward.2} parent=1 // loop_body
      %s25 = ssub.s32 %s20, 1
      %s26 = ssub.s32 %s20, 2
      %s27 = sadd.s32 %s20, 1
      %s28 = ssub.s32 %s20, %s27
      %p29 = scmp.eq.s32.totalorder %s28, 0
      %s31 = sadd.s32 %s30, 1
      %s32 = scalar_select %p29, %s30, %s31
      %p35 = pneg %p29
      %p36 = scmp.eq.s32.totalorder %s20, 1
      %p37 = por %p35, %p36
      %p38 = scmp.ne.s32.totalorder %s30, %s33
      %p39 = scmp.eq.s32.totalorder %s20, 0
      %p40 = por %p38, %p39
      %p41 = scmp.ne.s32.totalorder %s30, %s33
      %p42 = scmp.eq.s32.totalorder %s25, 1
      %p43 = por %p41, %p42
      %p44 = scmp.ne.s32.totalorder %s33, %s34
      %p45 = scmp.eq.s32.totalorder %s25, 0
      %p46 = por %p44, %p45
      %p47 = scmp.ne.s32.totalorder %s33, %s34
      %p48 = scmp.eq.s32.totalorder %s26, 1
      %p49 = por %p47, %p48
      %p51 = scmp.ne.s32.totalorder %s34, %s50
      %p52 = scmp.eq.s32.totalorder %s26, 0
      %p53 = por %p51, %p52
      %s55 = sadd.s32 %s54, 1
      %p58 = scmp.eq.s32.totalorder %s20, 1
      %p59 = scmp.ne.s32.totalorder %s54, %s56
      %p60 = scmp.eq.s32.totalorder %s20, 0
      %p61 = por %p59, %p60
      %p62 = scmp.ne.s32.totalorder %s54, %s56
      %p63 = scmp.eq.s32.totalorder %s25, 1
      %p64 = por %p62, %p63
      %p65 = scmp.ne.s32.totalorder %s56, %s57
      %p66 = scmp.eq.s32.totalorder %s25, 0
      %p67 = por %p65, %p66
      %p68 = scmp.ne.s32.totalorder %s56, %s57
      %p69 = scmp.eq.s32.totalorder %s26, 1
      %p70 = por %p68, %p69
      %p72 = scmp.ne.s32.totalorder %s57, %s71
      %p73 = scmp.eq.s32.totalorder %s26, 0
      %p74 = por %p72, %p73
      %s76 = sadd.s32 %s75, 1
      %p79 = scmp.eq.s32.totalorder %s20, 1
      %p80 = scmp.ne.s32.totalorder %s75, %s77
      %p81 = scmp.eq.s32.totalorder %s20, 0
      %p82 = por %p80, %p81
      %p83 = scmp.ne.s32.totalorder %s75, %s77
      %p84 = scmp.eq.s32.totalorder %s25, 1
      %p85 = por %p83, %p84
      %p86 = scmp.ne.s32.totalorder %s77, %s78
      %p87 = scmp.eq.s32.totalorder %s25, 0
      %p88 = por %p86, %p87
      %p89 = scmp.ne.s32.totalorder %s77, %s78
      %p90 = scmp.eq.s32.totalorder %s26, 1
      %p91 = por %p89, %p90
      %p93 = scmp.ne.s32.totalorder %s78, %s92
      %p94 = scmp.eq.s32.totalorder %s26, 0
      %p95 = por %p93, %p94
      %s97 = sadd.s32 %s96, 1
      %p100 = scmp.eq.s32.totalorder %s20, 1
      %p101 = scmp.ne.s32.totalorder %s96, %s98
      %p102 = scmp.eq.s32.totalorder %s20, 0
      %p103 = por %p101, %p102
      %p104 = scmp.ne.s32.totalorder %s96, %s98
      %p105 = scmp.eq.s32.totalorder %s25, 1
      %p106 = por %p104, %p105
      %p107 = scmp.ne.s32.totalorder %s98, %s99
      %p108 = scmp.eq.s32.totalorder %s25, 0
      %p109 = por %p107, %p108
      %p110 = scmp.ne.s32.totalorder %s98, %s99
      %p111 = scmp.eq.s32.totalorder %s26, 1
      %p112 = por %p110, %p111
      %p114 = scmp.ne.s32.totalorder %s99, %s113
      %p115 = scmp.eq.s32.totalorder %s26, 0
      %p116 = por %p114, %p115
      %s118 = sadd.s32 %s117, 1
      %p121 = scmp.eq.s32.totalorder %s20, 1
      %p122 = scmp.ne.s32.totalorder %s117, %s119
      %p123 = scmp.eq.s32.totalorder %s20, 0
      %p124 = por %p122, %p123
      %p125 = scmp.ne.s32.totalorder %s117, %s119
      %p126 = scmp.eq.s32.totalorder %s25, 1
      %p127 = por %p125, %p126
      %p128 = scmp.ne.s32.totalorder %s119, %s120
      %p129 = scmp.eq.s32.totalorder %s25, 0
      %p130 = por %p128, %p129
      %p131 = scmp.ne.s32.totalorder %s119, %s120
      %p132 = scmp.eq.s32.totalorder %s26, 1
      %p133 = por %p131, %p132
      %p135 = scmp.ne.s32.totalorder %s120, %s134
      %p136 = scmp.eq.s32.totalorder %s26, 0
      %p137 = por %p135, %p136
      %s139 = sadd.s32 %s138, 1
      %p142 = scmp.eq.s32.totalorder %s20, 1
      %p143 = scmp.ne.s32.totalorder %s138, %s140
      %p144 = scmp.eq.s32.totalorder %s20, 0
      %p145 = por %p143, %p144
      %p146 = scmp.ne.s32.totalorder %s138, %s140
      %p147 = scmp.eq.s32.totalorder %s25, 1
      %p148 = por %p146, %p147
      %p149 = scmp.ne.s32.totalorder %s140, %s141
      %p150 = scmp.eq.s32.totalorder %s25, 0
      %p151 = por %p149, %p150
      %p152 = scmp.ne.s32.totalorder %s140, %s141
      %p153 = scmp.eq.s32.totalorder %s26, 1
      %p154 = por %p152, %p153
      %p156 = scmp.ne.s32.totalorder %s141, %s155
      %p157 = scmp.eq.s32.totalorder %s26, 0
      %p158 = por %p156, %p157
      %s160 = sadd.s32 %s159, 1
      %p163 = scmp.eq.s32.totalorder %s20, 1
      %p164 = scmp.ne.s32.totalorder %s159, %s161
      %p165 = scmp.eq.s32.totalorder %s20, 0
      %p166 = por %p164, %p165
      %p167 = scmp.ne.s32.totalorder %s159, %s161
      %p168 = scmp.eq.s32.totalorder %s25, 1
      %p169 = por %p167, %p168
      %p170 = scmp.ne.s32.totalorder %s161, %s162
      %p171 = scmp.eq.s32.totalorder %s25, 0
      %p172 = por %p170, %p171
      %p173 = scmp.ne.s32.totalorder %s161, %s162
      %p174 = scmp.eq.s32.totalorder %s26, 1
      %p175 = por %p173, %p174
      %p177 = scmp.ne.s32.totalorder %s162, %s176
      %p178 = scmp.eq.s32.totalorder %s26, 0
      %p179 = por %p177, %p178
      %s181 = sadd.s32 %s180, 1
      %p184 = scmp.eq.s32.totalorder %s20, 1
      %p185 = scmp.ne.s32.totalorder %s180, %s182
      %p186 = scmp.eq.s32.totalorder %s20, 0
      %p187 = por %p185, %p186
      %p188 = scmp.ne.s32.totalorder %s180, %s182
      %p189 = scmp.eq.s32.totalorder %s25, 1
      %p190 = por %p188, %p189
      %p191 = scmp.ne.s32.totalorder %s182, %s183
      %p192 = scmp.eq.s32.totalorder %s25, 0
      %p193 = por %p191, %p192
      %p194 = scmp.ne.s32.totalorder %s182, %s183
      %p195 = scmp.eq.s32.totalorder %s26, 1
      %p196 = por %p194, %p195
      %p198 = scmp.ne.s32.totalorder %s183, %s197
      %p199 = scmp.eq.s32.totalorder %s26, 0
      %p200 = por %p198, %p199
      %s202 = sadd.s32 %s201, 1
      %p205 = scmp.eq.s32.totalorder %s20, 1
      %p206 = scmp.ne.s32.totalorder %s201, %s203
      %p207 = scmp.eq.s32.totalorder %s20, 0
      %p208 = por %p206, %p207
      %p209 = scmp.ne.s32.totalorder %s201, %s203
      %p210 = scmp.eq.s32.totalorder %s25, 1
      %p211 = por %p209, %p210
      %p212 = scmp.ne.s32.totalorder %s203, %s204
      %p213 = scmp.eq.s32.totalorder %s25, 0
      %p214 = por %p212, %p213
      %p215 = scmp.ne.s32.totalorder %s203, %s204
      %p216 = scmp.eq.s32.totalorder %s26, 1
      %p217 = por %p215, %p216
      %p219 = scmp.ne.s32.totalorder %s204, %s218
      %p220 = scmp.eq.s32.totalorder %s26, 0
      %p221 = por %p219, %p220
      %s222 = ssub.s32 %s20, %s27
      %p223 = scmp.eq.s32.totalorder %s222, 0
      %s225 = sadd.s32 %s224, 1
      %s226 = scalar_select %p223, %s224, %s225
      %p229 = pneg %p223
      %p230 = scmp.eq.s32.totalorder %s20, 1
      %p231 = por %p229, %p230
      %p232 = scmp.ne.s32.totalorder %s224, %s227
      %p233 = scmp.eq.s32.totalorder %s20, 0
      %p234 = por %p232, %p233
      %p235 = scmp.ne.s32.totalorder %s224, %s227
      %p236 = scmp.eq.s32.totalorder %s25, 1
      %p237 = por %p235, %p236
      %p238 = scmp.ne.s32.totalorder %s227, %s228
      %p239 = scmp.eq.s32.totalorder %s25, 0
      %p240 = por %p238, %p239
      %p241 = scmp.ne.s32.totalorder %s227, %s228
      %p242 = scmp.eq.s32.totalorder %s26, 1
      %p243 = por %p241, %p242
      %p245 = scmp.ne.s32.totalorder %s228, %s244
      %p246 = scmp.eq.s32.totalorder %s26, 0
      %p247 = por %p245, %p246
      %s248 = ssub.s32 %s20, %s27
      %p249 = scmp.eq.s32.totalorder %s248, 0
      %s251 = sadd.s32 %s250, 1
      %s252 = scalar_select %p249, %s250, %s251
      %p255 = pneg %p249
      %p256 = scmp.eq.s32.totalorder %s20, 1
      %p257 = por %p255, %p256
      %p258 = scmp.ne.s32.totalorder %s250, %s253
      %p259 = scmp.eq.s32.totalorder %s20, 0
      %p260 = por %p258, %p259
      %p261 = scmp.ne.s32.totalorder %s250, %s253
      %p262 = scmp.eq.s32.totalorder %s25, 1
      %p263 = por %p261, %p262
      %p264 = scmp.ne.s32.totalorder %s253, %s254
      %p265 = scmp.eq.s32.totalorder %s25, 0
      %p266 = por %p264, %p265
      %p267 = scmp.ne.s32.totalorder %s253, %s254
      %p268 = scmp.eq.s32.totalorder %s26, 1
      %p269 = por %p267, %p268
      %p271 = scmp.ne.s32.totalorder %s254, %s270
      %p272 = scmp.eq.s32.totalorder %s26, 0
      %p273 = por %p271, %p272
      %p274 = scmp.le.s32.totalorder 1, %s20
      %p275 = scmp.lt.s32.totalorder %s20, 3
      %p276 = pnand %p274, %p275
      %p277 = pneg %p276
      // Predicated region
      $region9: #{mobile_mamba_forward.2} parent=5 // pred_check
        _
      $region10: #{mobile_mamba_forward.2} parent=5 // pred_check_branch
        %279 = sbr.rel (%p276) target = $region12
      $region11: #{mobile_mamba_forward.2} parent=5 // pred_region
        %s280 = ssub.s32 %s20, 1
        // Predicated region
        $region13: #{mobile_mamba_forward.2} parent=11 // pred_check
          %p281 = pneg %p67
        $region14: #{mobile_mamba_forward.2} parent=11 // pred_check_branch
          %283 = sbr.rel (%p281) target = $region16
        $region15: #{mobile_mamba_forward.2} parent=11 // pred_region
          _
        $region16: #{mobile_mamba_forward.2} parent=11 // pred_fallthru
          _
        // Predicated region
        $region17: #{mobile_mamba_forward.2} parent=11 // pred_check
          %p284 = pneg %p88
        $region18: #{mobile_mamba_forward.2} parent=11 // pred_check_branch
          %286 = sbr.rel (%p284) target = $region20
        $region19: #{mobile_mamba_forward.2} parent=11 // pred_region
          _
        $region20: #{mobile_mamba_forward.2} parent=11 // pred_fallthru
          _
        // Predicated region
        $region21: #{mobile_mamba_forward.2} parent=11 // pred_check
          %p287 = pneg %p109
        $region22: #{mobile_mamba_forward.2} parent=11 // pred_check_branch
          %289 = sbr.rel (%p287) target = $region24
        $region23: #{mobile_mamba_forward.2} parent=11 // pred_region
          %s291 = ssub.s32 12544, 12544
          %292 = vsyncadd [#allocation3], %s291
          %s293 = sshll.u32 [#allocation2], 4
          %s294 = int_to_ptr.vmem [resolvable:$true] %s293
          %299 = dma.hbm_to_vmem [thread:$0]  %s3, 12544, %s294, [#allocation3], 256, 256, 16
        $region24: #{mobile_mamba_forward.2} parent=11 // pred_fallthru
          _
        // Predicated region
        $region25: #{mobile_mamba_forward.2} parent=11 // pred_check
          %p300 = pneg %p130
        $region26: #{mobile_mamba_forward.2} parent=11 // pred_check_branch
          %302 = sbr.rel (%p300) target = $region28
        $region27: #{mobile_mamba_forward.2} parent=11 // pred_region
          _
        $region28: #{mobile_mamba_forward.2} parent=11 // pred_fallthru
          _
        // Predicated region
        $region29: #{mobile_mamba_forward.2} parent=11 // pred_check
          %p303 = pneg %p151
        $region30: #{mobile_mamba_forward.2} parent=11 // pred_check_branch
          %305 = sbr.rel (%p303) target = $region32
        $region31: #{mobile_mamba_forward.2} parent=11 // pred_region
          %s307 = ssub.s32 2304, 2304
          %308 = vsyncadd [#allocation5], %s307
          %s309 = sshll.u32 [#allocation4], 4
          %s310 = int_to_ptr.vmem [resolvable:$true] %s309
          %315 = dma.hbm_to_vmem [thread:$0]  %s5, 2304, %s310, [#allocation5], 256, 256, 16
        $region32: #{mobile_mamba_forward.2} parent=11 // pred_fallthru
          _
        // Predicated region
        $region33: #{mobile_mamba_forward.2} parent=11 // pred_check
          %p316 = pneg %p172
        $region34: #{mobile_mamba_forward.2} parent=11 // pred_check_branch
          %318 = sbr.rel (%p316) target = $region36
        $region35: #{mobile_mamba_forward.2} parent=11 // pred_region
          %s320 = ssub.s32 8192, 8192
          %321 = vsyncadd [#allocation5], %s320
          %s322 = sshll.u32 [#allocation6], 4
          %s323 = int_to_ptr.vmem [resolvable:$true] %s322
          %328 = dma.hbm_to_vmem [thread:$0]  %s6, 8192, %s323, [#allocation5], 256, 256, 16
        $region36: #{mobile_mamba_forward.2} parent=11 // pred_fallthru
          _
        // Predicated region
        $region37: #{mobile_mamba_forward.2} parent=11 // pred_check
          %p329 = pneg %p193
        $region38: #{mobile_mamba_forward.2} parent=11 // pred_check_branch
          %331 = sbr.rel (%p329) target = $region40
        $region39: #{mobile_mamba_forward.2} parent=11 // pred_region
          %s333 = ssub.s32 8192, 8192
          %334 = vsyncadd [#allocation8], %s333
          %s335 = sshll.u32 [#allocation7], 4
          %s336 = int_to_ptr.vmem [resolvable:$true] %s335
          %341 = dma.hbm_to_vmem [thread:$0]  %s7, 8192, %s336, [#allocation8], 256, 256, 16
        $region40: #{mobile_mamba_forward.2} parent=11 // pred_fallthru
          _
        // Predicated region
        $region41: #{mobile_mamba_forward.2} parent=11 // pred_check
          %p342 = pneg %p214
        $region42: #{mobile_mamba_forward.2} parent=11 // pred_check_branch
          %344 = sbr.rel (%p342) target = $region44
        $region43: #{mobile_mamba_forward.2} parent=11 // pred_region
          %s346 = ssub.s32 2304, 2304
          %347 = vsyncadd [#allocation8], %s346
          %s348 = sshll.u32 [#allocation9], 4
          %s349 = int_to_ptr.vmem [resolvable:$true] %s348
          %354 = dma.hbm_to_vmem [thread:$0]  %s8, 2304, %s349, [#allocation8], 256, 256, 16
        $region44: #{mobile_mamba_forward.2} parent=11 // pred_fallthru
          _
      $region12: #{mobile_mamba_forward.2} parent=5 // pred_fallthru
        _
      %p355 = scmp.lt.s32.totalorder %s20, 2
      // Predicated region
      $region45: #{mobile_mamba_forward.2} parent=5 // pred_check
        %p356 = pneg %p355
      $region46: #{mobile_mamba_forward.2} parent=5 // pred_check_branch
        %358 = sbr.rel (%p356) target = $region48
      $region47: #{mobile_mamba_forward.2} parent=5 // pred_region
        // Predicated region
        $region49: #{mobile_mamba_forward.2} parent=47 // pred_check
          %p359 = pneg %p40
        $region50: #{mobile_mamba_forward.2} parent=47 // pred_check_branch
          %361 = sbr.rel (%p359) target = $region52
        $region51: #{mobile_mamba_forward.2} parent=47 // pred_region
          %p362 = scmp.lt.s32.totalorder %s20, 1
          %s363 = scalar_select %p362, %s20, 1
          %s364 = smul.addr %s363, 2
          %s365 = smul.addr %s364, 8
          %s366 = scalar_lea.vmem %s0, %s365
        $region52: #{mobile_mamba_forward.2} parent=47 // pred_fallthru
          _
      $region48: #{mobile_mamba_forward.2} parent=5 // pred_fallthru
        _
      %p367 = scmp.le.s32.totalorder 1, %s20
      %p368 = scmp.lt.s32.totalorder %s20, 3
      %p369 = pnand %p367, %p368
      %p370 = pneg %p369
      // Predicated region
      $region53: #{mobile_mamba_forward.2} parent=5 // pred_check
        _
      $region54: #{mobile_mamba_forward.2} parent=5 // pred_check_branch
        %372 = sbr.rel (%p369) target = $region56
      $region55: #{mobile_mamba_forward.2} parent=5 // pred_region
        %s373 = ssub.s32 %s20, 1
        // Predicated region
        $region57: #{mobile_mamba_forward.2} parent=55 // pred_check
          %p374 = pneg %p109
        $region58: #{mobile_mamba_forward.2} parent=55 // pred_check_branch
          %376 = sbr.rel (%p374) target = $region60
        $region59: #{mobile_mamba_forward.2} parent=55 // pred_region
          %377 = dma.done [#allocation3], 12544
        $region60: #{mobile_mamba_forward.2} parent=55 // pred_fallthru
          _
        // Predicated region
        $region61: #{mobile_mamba_forward.2} parent=55 // pred_check
          %p378 = pneg %p151
        $region62: #{mobile_mamba_forward.2} parent=55 // pred_check_branch
          %380 = sbr.rel (%p378) target = $region64
        $region63: #{mobile_mamba_forward.2} parent=55 // pred_region
          %381 = dma.done [#allocation5], 2304
        $region64: #{mobile_mamba_forward.2} parent=55 // pred_fallthru
          _
        // Predicated region
        $region65: #{mobile_mamba_forward.2} parent=55 // pred_check
          %p382 = pneg %p172
        $region66: #{mobile_mamba_forward.2} parent=55 // pred_check_branch
          %384 = sbr.rel (%p382) target = $region68
        $region67: #{mobile_mamba_forward.2} parent=55 // pred_region
          %385 = dma.done [#allocation5], 8192
        $region68: #{mobile_mamba_forward.2} parent=55 // pred_fallthru
          _
        // Predicated region
        $region69: #{mobile_mamba_forward.2} parent=55 // pred_check
          %p386 = pneg %p193
        $region70: #{mobile_mamba_forward.2} parent=55 // pred_check_branch
          %388 = sbr.rel (%p386) target = $region72
        $region71: #{mobile_mamba_forward.2} parent=55 // pred_region
          %389 = dma.done [#allocation8], 8192
        $region72: #{mobile_mamba_forward.2} parent=55 // pred_fallthru
          _
        // Predicated region
        $region73: #{mobile_mamba_forward.2} parent=55 // pred_check
          %p390 = pneg %p214
        $region74: #{mobile_mamba_forward.2} parent=55 // pred_check_branch
          %392 = sbr.rel (%p390) target = $region76
        $region75: #{mobile_mamba_forward.2} parent=55 // pred_region
          %393 = dma.done [#allocation8], 2304
        $region76: #{mobile_mamba_forward.2} parent=55 // pred_fallthru
          _
        %p394 = scmp.lt.s32.totalorder %s25, 1
        %s395 = scalar_select %p394, %s25, 1
        %s396 = smul.addr %s395, 2
        %s397 = smul.addr %s396, 8
        %s398 = scalar_lea.vmem %s0, %s397
        %p399 = pneg %p46
        %p400 = pneg %p43
        %p401 = pneg %p67
        %p402 = pneg %p64
        %p403 = pneg %p88
        %p404 = pneg %p85
        %p405 = pneg %p109
        %p406 = pneg %p106
        %p407 = pneg %p130
        %p408 = pneg %p127
        %p409 = pneg %p151
        %p410 = pneg %p148
        %p411 = pneg %p172
        %p412 = pneg %p169
        %p413 = pneg %p193
        %p414 = pneg %p190
        %p415 = pneg %p214
        %p416 = pneg %p211
        %p417 = pneg %p240
        %p418 = pneg %p237
        %p419 = scmp.lt.s32.totalorder %s25, 1
        %s420 = scalar_select %p419, %s25, 1
        %s421 = smul.addr %s420, 2
        %s422 = smul.addr %s421, 8
        %s423 = scalar_lea.vmem %s9, %s422
        %p424 = pneg %p266
        %p425 = pneg %p263
        %p426 = scmp.lt.s32.totalorder %s25, 1
        %s427 = scalar_select %p426, %s25, 1
        %s428 = smul.addr %s427, 2
        %s429 = smul.addr %s428, 8
        %s430 = scalar_lea.vmem %s10, %s429
        %p431 = scmp.lt.s32.totalorder %s25, 1
        %s432 = scalar_select %p431, %s25, 1
        %s433 = smul.addr %s432, 2
        %s434 = smul.addr %s433, 8
        %s435 = scalar_lea.vmem %s0, %s434
        %p436 = scmp.lt.s32.totalorder %s25, 1
        %s437 = scalar_select %p436, %s25, 1
        %s438 = smul.addr %s437, 2
        %s439 = smul.addr %s438, 8
        %s440 = scalar_lea.vmem %s9, %s439
        %p441 = scmp.lt.s32.totalorder %s25, 1
        %s442 = scalar_select %p441, %s25, 1
        %s443 = smul.addr %s442, 2
        %s444 = smul.addr %s443, 8
        %s445 = scalar_lea.vmem %s10, %s444
        %v446 = vld [vmem:[%s435] sm:$0xff]
        %v447 = vld [vmem:[%s435 + $0x8] sm:$0xff]
        %448 = vrot.lane.b32.xlu0 %v446, 17
        %v449 = vpop.permute.xlu0 %448
        %450 = vrot.lane.b32.xlu0 %v447, 17
        %v451 = vpop.permute.xlu0 %450
        %v452 = vlaneseq
        %v453 = vand.u32 %v452, 127
        %vm454 = vcmp.lt.s32.totalorder %v453, 17
        %v455 = vsel %vm454, %v449, %v451
        %v456 = vsel %vm454, %v451, %v449
        %v457 = vld [vmem:[%s1] sm:$0xff]
        %v458 = vld [vmem:[%s1 + $0x8] sm:$0xff]
        %v459 = vmul.f32 %v456, %v457
        %v460 = vmul.f32 %v455, %v458
        %461 = vrot.lane.b32.xlu0 %v446, 16
        %v462 = vpop.permute.xlu0 %461
        %463 = vrot.lane.b32.xlu0 %v447, 16
        %v464 = vpop.permute.xlu0 %463
        %vm465 = vcmp.lt.s32.totalorder %v453, 16
        %v466 = vsel %vm465, %v462, %v464
        %v467 = vsel %vm465, %v464, %v462
        %s468 = scalar_lea.vmem %s1, 16
        %v469 = vld [vmem:[%s468] sm:$0xff]
        %v470 = vld [vmem:[%s468 + $0x8] sm:$0xff]
        %v471 = vmul.f32 %v467, %v469
        %v472 = vmul.f32 %v466, %v470
        %v473 = vadd.f32 %v459, %v471
        %v474 = vadd.f32 %v460, %v472
        %475 = vrot.lane.b32.xlu0 %v446, 15
        %v476 = vpop.permute.xlu0 %475
        %477 = vrot.lane.b32.xlu0 %v447, 15
        %v478 = vpop.permute.xlu0 %477
        %vm479 = vcmp.lt.s32.totalorder %v453, 15
        %v480 = vsel %vm479, %v476, %v478
        %v481 = vsel %vm479, %v478, %v476
        %s482 = scalar_lea.vmem %s1, 32
        %v483 = vld [vmem:[%s482] sm:$0xff]
        %v484 = vld [vmem:[%s482 + $0x8] sm:$0xff]
        %v485 = vmul.f32 %v481, %v483
        %v486 = vmul.f32 %v480, %v484
        %v487 = vadd.f32 %v473, %v485
        %v488 = vadd.f32 %v474, %v486
        %489 = vrot.lane.b32.xlu0 %v446, 1
        %v490 = vpop.permute.xlu0 %489
        %491 = vrot.lane.b32.xlu0 %v447, 1
        %v492 = vpop.permute.xlu0 %491
        %vm493 = vcmp.lt.s32.totalorder %v453, 1
        %v494 = vsel %vm493, %v490, %v492
        %v495 = vsel %vm493, %v492, %v490
        %s496 = scalar_lea.vmem %s1, 48
        %v497 = vld [vmem:[%s496] sm:$0xff]
        %v498 = vld [vmem:[%s496 + $0x8] sm:$0xff]
        %v499 = vmul.f32 %v495, %v497
        %v500 = vmul.f32 %v494, %v498
        %v501 = vadd.f32 %v487, %v499
        %v502 = vadd.f32 %v488, %v500
        %s503 = scalar_lea.vmem %s1, 64
        %v504 = vld [vmem:[%s503] sm:$0xff]
        %v505 = vld [vmem:[%s503 + $0x8] sm:$0xff]
        %v506 = vmul.f32 %v446, %v504
        %v507 = vmul.f32 %v447, %v505
        %v508 = vadd.f32 %v501, %v506
        %v509 = vadd.f32 %v502, %v507
        %510 = vrot.lane.b32.xlu0 %v446, 127
        %v511 = vpop.permute.xlu0 %510
        %512 = vrot.lane.b32.xlu0 %v447, 127
        %v513 = vpop.permute.xlu0 %512
        %vm514 = vcmp.lt.s32.totalorder %v453, 127
        %v515 = vsel %vm514, %v511, %v513
        %v516 = vsel %vm514, %v513, %v511
        %s517 = scalar_lea.vmem %s1, 80
        %v518 = vld [vmem:[%s517] sm:$0xff]
        %v519 = vld [vmem:[%s517 + $0x8] sm:$0xff]
        %v520 = vmul.f32 %v515, %v518
        %v521 = vmul.f32 %v516, %v519
        %v522 = vadd.f32 %v508, %v520
        %v523 = vadd.f32 %v509, %v521
        %524 = vrot.lane.b32.xlu0 %v446, 113
        %v525 = vpop.permute.xlu0 %524
        %526 = vrot.lane.b32.xlu0 %v447, 113
        %v527 = vpop.permute.xlu0 %526
        %vm528 = vcmp.lt.s32.totalorder %v453, 113
        %v529 = vsel %vm528, %v525, %v527
        %v530 = vsel %vm528, %v527, %v525
        %s531 = scalar_lea.vmem %s1, 96
        %v532 = vld [vmem:[%s531] sm:$0xff]
        %v533 = vld [vmem:[%s531 + $0x8] sm:$0xff]
        %v534 = vmul.f32 %v529, %v532
        %v535 = vmul.f32 %v530, %v533
        %v536 = vadd.f32 %v522, %v534
        %v537 = vadd.f32 %v523, %v535
        %538 = vrot.lane.b32.xlu0 %v446, 112
        %v539 = vpop.permute.xlu0 %538
        %540 = vrot.lane.b32.xlu0 %v447, 112
        %v541 = vpop.permute.xlu0 %540
        %vm542 = vcmp.lt.s32.totalorder %v453, 112
        %v543 = vsel %vm542, %v539, %v541
        %v544 = vsel %vm542, %v541, %v539
        %s545 = scalar_lea.vmem %s1, 112
        %v546 = vld [vmem:[%s545] sm:$0xff]
        %v547 = vld [vmem:[%s545 + $0x8] sm:$0xff]
        %v548 = vmul.f32 %v543, %v546
        %v549 = vmul.f32 %v544, %v547
        %v550 = vadd.f32 %v536, %v548
        %v551 = vadd.f32 %v537, %v549
        %552 = vrot.lane.b32.xlu0 %v446, 111
        %v553 = vpop.permute.xlu0 %552
        %554 = vrot.lane.b32.xlu0 %v447, 111
        %v555 = vpop.permute.xlu0 %554
        %vm556 = vcmp.lt.s32.totalorder %v453, 111
        %v557 = vsel %vm556, %v553, %v555
        %v558 = vsel %vm556, %v555, %v553
        %s559 = scalar_lea.vmem %s1, 128
        %v560 = vld [vmem:[%s559] sm:$0xff]
        %v561 = vld [vmem:[%s559 + $0x8] sm:$0xff]
        %v562 = vmul.f32 %v557, %v560
        %v563 = vmul.f32 %v558, %v561
        %v564 = vadd.f32 %v550, %v562
        %v565 = vadd.f32 %v551, %v563
        %v566 = vld [vmem:[#allocation9] sm:$0xff]
        %v567 = vld [vmem:[#allocation9 + $0x8] sm:$0xff]
        %v568 = vadd.f32 %v564, %v566
        %v569 = vadd.f32 %v565, %v567
        %v570 = vmax.f32 %v568, 0.0
        %v571 = vmax.f32 %v569, 0.0
        %s572 = scalar_lea.vmem [#allocation9], 16
        %v573 = vld [vmem:[%s572] sm:$0xff]
        %v574 = vld [vmem:[%s572 + $0x8] sm:$0xff]
        %v575 = vmul.f32 %v570, %v573
        %v576 = vmul.f32 %v571, %v574
        %s577 = scalar_lea.vmem [#allocation9], 32
        %v578 = vld [vmem:[%s577] sm:$0xff]
        %v579 = vld [vmem:[%s577 + $0x8] sm:$0xff]
        %v580 = vadd.f32 %v575, %v578
        %v581 = vadd.f32 %v576, %v579
        %582 = vrot.lane.b32.xlu0 %v580, 17
        %v583 = vpop.permute.xlu0 %582
        %584 = vrot.lane.b32.xlu0 %v581, 17
        %v585 = vpop.permute.xlu0 %584
        %v586 = vsel %vm454, %v583, %v585
        %v587 = vsel %vm454, %v585, %v583
        %v588 = vld [vmem:[%s2] sm:$0xff]
        %v589 = vld [vmem:[%s2 + $0x8] sm:$0xff]
        %v590 = vmul.f32 %v587, %v588
        %v591 = vmul.f32 %v586, %v589
        %592 = vrot.lane.b32.xlu0 %v580, 16
        %v593 = vpop.permute.xlu0 %592
        %594 = vrot.lane.b32.xlu0 %v581, 16
        %v595 = vpop.permute.xlu0 %594
        %v596 = vsel %vm465, %v593, %v595
        %v597 = vsel %vm465, %v595, %v593
        %s598 = scalar_lea.vmem %s2, 16
        %v599 = vld [vmem:[%s598] sm:$0xff]
        %v600 = vld [vmem:[%s598 + $0x8] sm:$0xff]
        %v601 = vmul.f32 %v597, %v599
        %v602 = vmul.f32 %v596, %v600
        %v603 = vadd.f32 %v590, %v601
        %v604 = vadd.f32 %v591, %v602
        %605 = vrot.lane.b32.xlu0 %v580, 15
        %v606 = vpop.permute.xlu0 %605
        %607 = vrot.lane.b32.xlu0 %v581, 15
        %v608 = vpop.permute.xlu0 %607
        %v609 = vsel %vm479, %v606, %v608
        %v610 = vsel %vm479, %v608, %v606
        %s611 = scalar_lea.vmem %s2, 32
        %v612 = vld [vmem:[%s611] sm:$0xff]
        %v613 = vld [vmem:[%s611 + $0x8] sm:$0xff]
        %v614 = vmul.f32 %v610, %v612
        %v615 = vmul.f32 %v609, %v613
        %v616 = vadd.f32 %v603, %v614
        %v617 = vadd.f32 %v604, %v615
        %618 = vrot.lane.b32.xlu0 %v580, 1
        %v619 = vpop.permute.xlu0 %618
        %620 = vrot.lane.b32.xlu0 %v581, 1
        %v621 = vpop.permute.xlu0 %620
        %v622 = vsel %vm493, %v619, %v621
        %v623 = vsel %vm493, %v621, %v619
        %s624 = scalar_lea.vmem %s2, 48
        %v625 = vld [vmem:[%s624] sm:$0xff]
        %v626 = vld [vmem:[%s624 + $0x8] sm:$0xff]
        %v627 = vmul.f32 %v623, %v625
        %v628 = vmul.f32 %v622, %v626
        %v629 = vadd.f32 %v616, %v627
        %v630 = vadd.f32 %v617, %v628
        %s631 = scalar_lea.vmem %s2, 64
        %v632 = vld [vmem:[%s631] sm:$0xff]
        %v633 = vld [vmem:[%s631 + $0x8] sm:$0xff]
        %v634 = vmul.f32 %v580, %v632
        %v635 = vmul.f32 %v581, %v633
        %v636 = vadd.f32 %v629, %v634
        %v637 = vadd.f32 %v630, %v635
        %638 = vrot.lane.b32.xlu0 %v580, 127
        %v639 = vpop.permute.xlu0 %638
        %640 = vrot.lane.b32.xlu0 %v581, 127
        %v641 = vpop.permute.xlu0 %640
        %v642 = vsel %vm514, %v639, %v641
        %v643 = vsel %vm514, %v641, %v639
        %s644 = scalar_lea.vmem %s2, 80
        %v645 = vld [vmem:[%s644] sm:$0xff]
        %v646 = vld [vmem:[%s644 + $0x8] sm:$0xff]
        %v647 = vmul.f32 %v642, %v645
        %v648 = vmul.f32 %v643, %v646
        %v649 = vadd.f32 %v636, %v647
        %v650 = vadd.f32 %v637, %v648
        %651 = vrot.lane.b32.xlu0 %v580, 113
        %v652 = vpop.permute.xlu0 %651
        %653 = vrot.lane.b32.xlu0 %v581, 113
        %v654 = vpop.permute.xlu0 %653
        %v655 = vsel %vm528, %v652, %v654
        %v656 = vsel %vm528, %v654, %v652
        %s657 = scalar_lea.vmem %s2, 96
        %v658 = vld [vmem:[%s657] sm:$0xff]
        %v659 = vld [vmem:[%s657 + $0x8] sm:$0xff]
        %v660 = vmul.f32 %v655, %v658
        %v661 = vmul.f32 %v656, %v659
        %v662 = vadd.f32 %v649, %v660
        %v663 = vadd.f32 %v650, %v661
        %664 = vrot.lane.b32.xlu0 %v580, 112
        %v665 = vpop.permute.xlu0 %664
        %666 = vrot.lane.b32.xlu0 %v581, 112
        %v667 = vpop.permute.xlu0 %666
        %v668 = vsel %vm542, %v665, %v667
        %v669 = vsel %vm542, %v667, %v665
        %s670 = scalar_lea.vmem %s2, 112
        %v671 = vld [vmem:[%s670] sm:$0xff]
        %v672 = vld [vmem:[%s670 + $0x8] sm:$0xff]
        %v673 = vmul.f32 %v668, %v671
        %v674 = vmul.f32 %v669, %v672
        %v675 = vadd.f32 %v662, %v673
        %v676 = vadd.f32 %v663, %v674
        %677 = vrot.lane.b32.xlu0 %v580, 111
        %v678 = vpop.permute.xlu0 %677
        %679 = vrot.lane.b32.xlu0 %v581, 111
        %v680 = vpop.permute.xlu0 %679
        %v681 = vsel %vm556, %v678, %v680
        %v682 = vsel %vm556, %v680, %v678
        %s683 = scalar_lea.vmem %s2, 128
        %v684 = vld [vmem:[%s683] sm:$0xff]
        %v685 = vld [vmem:[%s683 + $0x8] sm:$0xff]
        %v686 = vmul.f32 %v681, %v684
        %v687 = vmul.f32 %v682, %v685
        %v688 = vadd.f32 %v675, %v686
        %v689 = vadd.f32 %v676, %v687
        %s690 = scalar_lea.vmem [#allocation9], 48
        %v691 = vld [vmem:[%s690] sm:$0xff]
        %v692 = vld [vmem:[%s690 + $0x8] sm:$0xff]
        %v693 = vadd.f32 %v688, %v691
        %v694 = vadd.f32 %v689, %v692
        %v695 = vld [vmem:[%s4] sm:$0xff]
        %s696 = scalar_lea.vmem [#allocation9], 64
        %v697 = vld [vmem:[%s696] sm:$0xff]
        %v698 = vld [vmem:[%s696 + $0x8] sm:$0xff]
        %vm699 = vcmask 64512
        %v701 = vsel %vm699, %v695, 0
        %703 = vmatprep.subr.mxu0 0.0
        %704 = vmatpush1.msra.mxu0 0.0
        %705 = vmatprep.subr.mxu0 0.0
        %706 = vmatpush1.msra.mxu0 0.0
        %707 = vmatprep.subr.mxu0 0.0
        %708 = vmatpush1.msra.mxu0 0.0
        %709 = vmatprep.subr.mxu0 0.0
        %710 = vmatpush1.msra.mxu0 0.0
        %711 = vmatprep.subr.mxu0 0.0
        %712 = vmatpush1.msra.mxu0 0.0
        %713 = vmatprep.subr.mxu0 0.0
        %714 = vmatpush1.msra.mxu0 0.0
        %715 = vmatprep.subr.mxu0 0.0
        %716 = vmatpush1.msra.mxu0 0.0
        %717 = vmatprep.subr.mxu0 0.0
        %718 = vmatpush1.msra.mxu0 0.0
        %719 = vmatprep.subr.mxu0 0.0
        %720 = vmatpush1.msra.mxu0 0.0
        %721 = vmatprep.subr.mxu0 0.0
        %722 = vmatpush1.msra.mxu0 0.0
        %723 = vmatprep.subr.mxu0 0.0
        %724 = vmatpush1.msra.mxu0 0.0
        %725 = vmatprep.subr.mxu0 0.0
        %726 = vmatpush1.msra.mxu0 0.0
        %727 = vmatprep.subr.mxu0 0.0
        %728 = vmatpush1.msra.mxu0 0.0
        %729 = vmatprep.subr.mxu0 0.0
        %730 = vmatpush1.msra.mxu0 0.0
        %731 = vmatprep.subr.mxu0 0.0
        %732 = vmatpush1.msra.mxu0 0.0
        %733 = vmatprep.subr.mxu0 %v694
        %734 = vmatpush1.msra.mxu0 %v693
        %735 = vmatprep.subr.mxu0 0.0
        %736 = vmatpush2.msra.mxu0 0.0
        %737 = vmatprep.subr.mxu0 0.0
        %738 = vmatpush2.msra.mxu0 0.0
        %739 = vmatprep.subr.mxu0 0.0
        %740 = vmatpush2.msra.mxu0 0.0
        %741 = vmatprep.subr.mxu0 0.0
        %742 = vmatpush2.msra.mxu0 0.0
        %743 = vmatprep.subr.mxu0 0.0
        %744 = vmatpush2.msra.mxu0 0.0
        %745 = vmatprep.subr.mxu0 0.0
        %746 = vmatpush2.msra.mxu0 0.0
        %747 = vmatprep.subr.mxu0 0.0
        %748 = vmatpush2.msra.mxu0 0.0
        %749 = vmatprep.subr.mxu0 0.0
        %750 = vmatpush2.msra.mxu0 0.0
        %751 = vmatprep.subr.mxu0 0.0
        %752 = vmatpush2.msra.mxu0 0.0
        %753 = vmatprep.subr.mxu0 0.0
        %754 = vmatpush2.msra.mxu0 0.0
        %755 = vmatprep.subr.mxu0 0.0
        %756 = vmatpush2.msra.mxu0 0.0
        %757 = vmatprep.subr.mxu0 0.0
        %758 = vmatpush2.msra.mxu0 0.0
        %759 = vmatprep.subr.mxu0 0.0
        %760 = vmatpush2.msra.mxu0 0.0
        %761 = vmatprep.subr.mxu0 0.0
        %762 = vmatpush2.msra.mxu0 0.0
        %763 = vmatprep.subr.mxu0 0.0
        %764 = vmatpush2.msra.mxu0 0.0
        %765 = vmatprep.subr.mxu0 0.0
        %766 = vmatpush2.msra.mxu0 0.0
        %767 = vmatprep.mubr.f32.mxu0 0.0
        %768 = vmatmul.mubr.f32.gmra.mxu0 %v701
        %v769 = vpop.f32.mrf.mxu0
        %v770 = vadd.f32 %v697, %v769
        %v771 = vpop.f32.mrf.mxu0
        %v772 = vadd.f32 %v698, %v771
        %773 = vdwg.mxu0
        %774 = vrot.lane.b32.xlu0 %v580, 51
        %v775 = vpop.permute.xlu0 %774
        %776 = vrot.lane.b32.xlu0 %v581, 51
        %v777 = vpop.permute.xlu0 %776
        %vm778 = vcmp.lt.s32.totalorder %v453, 51
        %v779 = vsel %vm778, %v775, %v777
        %v780 = vsel %vm778, %v777, %v775
        %v781 = vld [vmem:[#allocation2] sm:$0xff]
        %v782 = vld [vmem:[#allocation2 + $0x8] sm:$0xff]
        %v783 = vmul.f32 %v780, %v781
        %v784 = vmul.f32 %v779, %v782
        %785 = vrot.lane.b32.xlu0 %v580, 50
        %v786 = vpop.permute.xlu0 %785
        %787 = vrot.lane.b32.xlu0 %v581, 50
        %v788 = vpop.permute.xlu0 %787
        %vm789 = vcmp.lt.s32.totalorder %v453, 50
        %v790 = vsel %vm789, %v786, %v788
        %v791 = vsel %vm789, %v788, %v786
        %s792 = scalar_lea.vmem [#allocation2], 16
        %v793 = vld [vmem:[%s792] sm:$0xff]
        %v794 = vld [vmem:[%s792 + $0x8] sm:$0xff]
        %v795 = vmul.f32 %v791, %v793
        %v796 = vmul.f32 %v790, %v794
        %v797 = vadd.f32 %v783, %v795
        %v798 = vadd.f32 %v784, %v796
        %799 = vrot.lane.b32.xlu0 %v580, 49
        %v800 = vpop.permute.xlu0 %799
        %801 = vrot.lane.b32.xlu0 %v581, 49
        %v802 = vpop.permute.xlu0 %801
        %vm803 = vcmp.lt.s32.totalorder %v453, 49
        %v804 = vsel %vm803, %v800, %v802
        %v805 = vsel %vm803, %v802, %v800
        %s806 = scalar_lea.vmem [#allocation2], 32
        %v807 = vld [vmem:[%s806] sm:$0xff]
        %v808 = vld [vmem:[%s806 + $0x8] sm:$0xff]
        %v809 = vmul.f32 %v805, %v807
        %v810 = vmul.f32 %v804, %v808
        %v811 = vadd.f32 %v797, %v809
        %v812 = vadd.f32 %v798, %v810
        %813 = vrot.lane.b32.xlu0 %v580, 48
        %v814 = vpop.permute.xlu0 %813
        %815 = vrot.lane.b32.xlu0 %v581, 48
        %v816 = vpop.permute.xlu0 %815
        %vm817 = vcmp.lt.s32.totalorder %v453, 48
        %v818 = vsel %vm817, %v814, %v816
        %v819 = vsel %vm817, %v816, %v814
        %s820 = scalar_lea.vmem [#allocation2], 48
        %v821 = vld [vmem:[%s820] sm:$0xff]
        %v822 = vld [vmem:[%s820 + $0x8] sm:$0xff]
        %v823 = vmul.f32 %v819, %v821
        %v824 = vmul.f32 %v818, %v822
        %v825 = vadd.f32 %v811, %v823
        %v826 = vadd.f32 %v812, %v824
        %827 = vrot.lane.b32.xlu0 %v580, 47
        %v828 = vpop.permute.xlu0 %827
        %829 = vrot.lane.b32.xlu0 %v581, 47
        %v830 = vpop.permute.xlu0 %829
        %vm831 = vcmp.lt.s32.totalorder %v453, 47
        %v832 = vsel %vm831, %v828, %v830
        %v833 = vsel %vm831, %v830, %v828
        %s834 = scalar_lea.vmem [#allocation2], 64
        %v835 = vld [vmem:[%s834] sm:$0xff]
        %v836 = vld [vmem:[%s834 + $0x8] sm:$0xff]
        %v837 = vmul.f32 %v833, %v835
        %v838 = vmul.f32 %v832, %v836
        %v839 = vadd.f32 %v825, %v837
        %v840 = vadd.f32 %v826, %v838
        %841 = vrot.lane.b32.xlu0 %v580, 46
        %v842 = vpop.permute.xlu0 %841
        %843 = vrot.lane.b32.xlu0 %v581, 46
        %v844 = vpop.permute.xlu0 %843
        %vm845 = vcmp.lt.s32.totalorder %v453, 46
        %v846 = vsel %vm845, %v842, %v844
        %v847 = vsel %vm845, %v844, %v842
        %s848 = scalar_lea.vmem [#allocation2], 80
        %v849 = vld [vmem:[%s848] sm:$0xff]
        %v850 = vld [vmem:[%s848 + $0x8] sm:$0xff]
        %v851 = vmul.f32 %v847, %v849
        %v852 = vmul.f32 %v846, %v850
        %v853 = vadd.f32 %v839, %v851
        %v854 = vadd.f32 %v840, %v852
        %855 = vrot.lane.b32.xlu0 %v580, 45
        %v856 = vpop.permute.xlu0 %855
        %857 = vrot.lane.b32.xlu0 %v581, 45
        %v858 = vpop.permute.xlu0 %857
        %vm859 = vcmp.lt.s32.totalorder %v453, 45
        %v860 = vsel %vm859, %v856, %v858
        %v861 = vsel %vm859, %v858, %v856
        %s862 = scalar_lea.vmem [#allocation2], 96
        %v863 = vld [vmem:[%s862] sm:$0xff]
        %v864 = vld [vmem:[%s862 + $0x8] sm:$0xff]
        %v865 = vmul.f32 %v861, %v863
        %v866 = vmul.f32 %v860, %v864
        %v867 = vadd.f32 %v853, %v865
        %v868 = vadd.f32 %v854, %v866
        %869 = vrot.lane.b32.xlu0 %v580, 35
        %v870 = vpop.permute.xlu0 %869
        %871 = vrot.lane.b32.xlu0 %v581, 35
        %v872 = vpop.permute.xlu0 %871
        %vm873 = vcmp.lt.s32.totalorder %v453, 35
        %v874 = vsel %vm873, %v870, %v872
        %v875 = vsel %vm873, %v872, %v870
        %s876 = scalar_lea.vmem [#allocation2], 112
        %v877 = vld [vmem:[%s876] sm:$0xff]
        %v878 = vld [vmem:[%s876 + $0x8] sm:$0xff]
        %v879 = vmul.f32 %v875, %v877
        %v880 = vmul.f32 %v874, %v878
        %v881 = vadd.f32 %v867, %v879
        %v882 = vadd.f32 %v868, %v880
        %883 = vrot.lane.b32.xlu0 %v580, 34
        %v884 = vpop.permute.xlu0 %883
        %885 = vrot.lane.b32.xlu0 %v581, 34
        %v886 = vpop.permute.xlu0 %885
        %vm887 = vcmp.lt.s32.totalorder %v453, 34
        %v888 = vsel %vm887, %v884, %v886
        %v889 = vsel %vm887, %v886, %v884
        %s890 = scalar_lea.vmem [#allocation2], 128
        %v891 = vld [vmem:[%s890] sm:$0xff]
        %v892 = vld [vmem:[%s890 + $0x8] sm:$0xff]
        %v893 = vmul.f32 %v889, %v891
        %v894 = vmul.f32 %v888, %v892
        %v895 = vadd.f32 %v881, %v893
        %v896 = vadd.f32 %v882, %v894
        %897 = vrot.lane.b32.xlu0 %v580, 33
        %v898 = vpop.permute.xlu0 %897
        %899 = vrot.lane.b32.xlu0 %v581, 33
        %v900 = vpop.permute.xlu0 %899
        %vm901 = vcmp.lt.s32.totalorder %v453, 33
        %v902 = vsel %vm901, %v898, %v900
        %v903 = vsel %vm901, %v900, %v898
        %s904 = scalar_lea.vmem [#allocation2], 144
        %v905 = vld [vmem:[%s904] sm:$0xff]
        %v906 = vld [vmem:[%s904 + $0x8] sm:$0xff]
        %v907 = vmul.f32 %v903, %v905
        %v908 = vmul.f32 %v902, %v906
        %v909 = vadd.f32 %v895, %v907
        %v910 = vadd.f32 %v896, %v908
        %911 = vrot.lane.b32.xlu0 %v580, 32
        %v912 = vpop.permute.xlu0 %911
        %913 = vrot.lane.b32.xlu0 %v581, 32
        %v914 = vpop.permute.xlu0 %913
        %vm915 = vcmp.lt.s32.totalorder %v453, 32
        %v916 = vsel %vm915, %v912, %v914
        %v917 = vsel %vm915, %v914, %v912
        %s918 = scalar_lea.vmem [#allocation2], 160
        %v919 = vld [vmem:[%s918] sm:$0xff]
        %v920 = vld [vmem:[%s918 + $0x8] sm:$0xff]
        %v921 = vmul.f32 %v917, %v919
        %v922 = vmul.f32 %v916, %v920
        %v923 = vadd.f32 %v909, %v921
        %v924 = vadd.f32 %v910, %v922
        %925 = vrot.lane.b32.xlu0 %v580, 31
        %v926 = vpop.permute.xlu0 %925
        %927 = vrot.lane.b32.xlu0 %v581, 31
        %v928 = vpop.permute.xlu0 %927
        %vm929 = vcmp.lt.s32.totalorder %v453, 31
        %v930 = vsel %vm929, %v926, %v928
        %v931 = vsel %vm929, %v928, %v926
        %s932 = scalar_lea.vmem [#allocation2], 176
        %v933 = vld [vmem:[%s932] sm:$0xff]
        %v934 = vld [vmem:[%s932 + $0x8] sm:$0xff]
        %v935 = vmul.f32 %v931, %v933
        %v936 = vmul.f32 %v930, %v934
        %v937 = vadd.f32 %v923, %v935
        %v938 = vadd.f32 %v924, %v936
        %939 = vrot.lane.b32.xlu0 %v580, 30
        %v940 = vpop.permute.xlu0 %939
        %941 = vrot.lane.b32.xlu0 %v581, 30
        %v942 = vpop.permute.xlu0 %941
        %vm943 = vcmp.lt.s32.totalorder %v453, 30
        %v944 = vsel %vm943, %v940, %v942
        %v945 = vsel %vm943, %v942, %v940
        %s946 = scalar_lea.vmem [#allocation2], 192
        %v947 = vld [vmem:[%s946] sm:$0xff]
        %v948 = vld [vmem:[%s946 + $0x8] sm:$0xff]
        %v949 = vmul.f32 %v945, %v947
        %v950 = vmul.f32 %v944, %v948
        %v951 = vadd.f32 %v937, %v949
        %v952 = vadd.f32 %v938, %v950
        %953 = vrot.lane.b32.xlu0 %v580, 29
        %v954 = vpop.permute.xlu0 %953
        %955 = vrot.lane.b32.xlu0 %v581, 29
        %v956 = vpop.permute.xlu0 %955
        %vm957 = vcmp.lt.s32.totalorder %v453, 29
        %v958 = vsel %vm957, %v954, %v956
        %v959 = vsel %vm957, %v956, %v954
        %s960 = scalar_lea.vmem [#allocation2], 208
        %v961 = vld [vmem:[%s960] sm:$0xff]
        %v962 = vld [vmem:[%s960 + $0x8] sm:$0xff]
        %v963 = vmul.f32 %v959, %v961
        %v964 = vmul.f32 %v958, %v962
        %v965 = vadd.f32 %v951, %v963
        %v966 = vadd.f32 %v952, %v964
        %967 = vrot.lane.b32.xlu0 %v580, 19
        %v968 = vpop.permute.xlu0 %967
        %969 = vrot.lane.b32.xlu0 %v581, 19
        %v970 = vpop.permute.xlu0 %969
        %vm971 = vcmp.lt.s32.totalorder %v453, 19
        %v972 = vsel %vm971, %v968, %v970
        %v973 = vsel %vm971, %v970, %v968
        %s974 = scalar_lea.vmem [#allocation2], 224
        %v975 = vld [vmem:[%s974] sm:$0xff]
        %v976 = vld [vmem:[%s974 + $0x8] sm:$0xff]
        %v977 = vmul.f32 %v973, %v975
        %v978 = vmul.f32 %v972, %v976
        %v979 = vadd.f32 %v965, %v977
        %v980 = vadd.f32 %v966, %v978
        %981 = vrot.lane.b32.xlu0 %v580, 18
        %v982 = vpop.permute.xlu0 %981
        %983 = vrot.lane.b32.xlu0 %v581, 18
        %v984 = vpop.permute.xlu0 %983
        %vm985 = vcmp.lt.s32.totalorder %v453, 18
        %v986 = vsel %vm985, %v982, %v984
        %v987 = vsel %vm985, %v984, %v982
        %s988 = scalar_lea.vmem [#allocation2], 240
        %v989 = vld [vmem:[%s988] sm:$0xff]
        %v990 = vld [vmem:[%s988 + $0x8] sm:$0xff]
        %v991 = vmul.f32 %v987, %v989
        %v992 = vmul.f32 %v986, %v990
        %v993 = vadd.f32 %v979, %v991
        %v994 = vadd.f32 %v980, %v992
        %s995 = scalar_lea.vmem [#allocation2], 256
        %v996 = vld [vmem:[%s995] sm:$0xff]
        %v997 = vld [vmem:[%s995 + $0x8] sm:$0xff]
        %v998 = vmul.f32 %v587, %v996
        %v999 = vmul.f32 %v586, %v997
        %v1000 = vadd.f32 %v993, %v998
        %v1001 = vadd.f32 %v994, %v999
        %s1002 = scalar_lea.vmem [#allocation2], 272
        %v1003 = vld [vmem:[%s1002] sm:$0xff]
        %v1004 = vld [vmem:[%s1002 + $0x8] sm:$0xff]
        %v1005 = vmul.f32 %v597, %v1003
        %v1006 = vmul.f32 %v596, %v1004
        %v1007 = vadd.f32 %v1000, %v1005
        %v1008 = vadd.f32 %v1001, %v1006
        %s1009 = scalar_lea.vmem [#allocation2], 288
        %v1010 = vld [vmem:[%s1009] sm:$0xff]
        %v1011 = vld [vmem:[%s1009 + $0x8] sm:$0xff]
        %v1012 = vmul.f32 %v610, %v1010
        %v1013 = vmul.f32 %v609, %v1011
        %v1014 = vadd.f32 %v1007, %v1012
        %v1015 = vadd.f32 %v1008, %v1013
        %1016 = vrot.lane.b32.xlu0 %v580, 14
        %v1017 = vpop.permute.xlu0 %1016
        %1018 = vrot.lane.b32.xlu0 %v581, 14
        %v1019 = vpop.permute.xlu0 %1018
        %vm1020 = vcmp.lt.s32.totalorder %v453, 14
        %v1021 = vsel %vm1020, %v1017, %v1019
        %v1022 = vsel %vm1020, %v1019, %v1017
        %s1023 = scalar_lea.vmem [#allocation2], 304
        %v1024 = vld [vmem:[%s1023] sm:$0xff]
        %v1025 = vld [vmem:[%s1023 + $0x8] sm:$0xff]
        %v1026 = vmul.f32 %v1022, %v1024
        %v1027 = vmul.f32 %v1021, %v1025
        %v1028 = vadd.f32 %v1014, %v1026
        %v1029 = vadd.f32 %v1015, %v1027
        %1030 = vrot.lane.b32.xlu0 %v580, 13
        %v1031 = vpop.permute.xlu0 %1030
        %1032 = vrot.lane.b32.xlu0 %v581, 13
        %v1033 = vpop.permute.xlu0 %1032
        %vm1034 = vcmp.lt.s32.totalorder %v453, 13
        %v1035 = vsel %vm1034, %v1031, %v1033
        %v1036 = vsel %vm1034, %v1033, %v1031
        %s1037 = scalar_lea.vmem [#allocation2], 320
        %v1038 = vld [vmem:[%s1037] sm:$0xff]
        %v1039 = vld [vmem:[%s1037 + $0x8] sm:$0xff]
        %v1040 = vmul.f32 %v1036, %v1038
        %v1041 = vmul.f32 %v1035, %v1039
        %v1042 = vadd.f32 %v1028, %v1040
        %v1043 = vadd.f32 %v1029, %v1041
        %1044 = vrot.lane.b32.xlu0 %v580, 3
        %v1045 = vpop.permute.xlu0 %1044
        %1046 = vrot.lane.b32.xlu0 %v581, 3
        %v1047 = vpop.permute.xlu0 %1046
        %vm1048 = vcmp.lt.s32.totalorder %v453, 3
        %v1049 = vsel %vm1048, %v1045, %v1047
        %v1050 = vsel %vm1048, %v1047, %v1045
        %s1051 = scalar_lea.vmem [#allocation2], 336
        %v1052 = vld [vmem:[%s1051] sm:$0xff]
        %v1053 = vld [vmem:[%s1051 + $0x8] sm:$0xff]
        %v1054 = vmul.f32 %v1050, %v1052
        %v1055 = vmul.f32 %v1049, %v1053
        %v1056 = vadd.f32 %v1042, %v1054
        %v1057 = vadd.f32 %v1043, %v1055
        %1058 = vrot.lane.b32.xlu0 %v580, 2
        %v1059 = vpop.permute.xlu0 %1058
        %1060 = vrot.lane.b32.xlu0 %v581, 2
        %v1061 = vpop.permute.xlu0 %1060
        %vm1062 = vcmp.lt.s32.totalorder %v453, 2
        %v1063 = vsel %vm1062, %v1059, %v1061
        %v1064 = vsel %vm1062, %v1061, %v1059
        %s1065 = scalar_lea.vmem [#allocation2], 352
        %v1066 = vld [vmem:[%s1065] sm:$0xff]
        %v1067 = vld [vmem:[%s1065 + $0x8] sm:$0xff]
        %v1068 = vmul.f32 %v1064, %v1066
        %v1069 = vmul.f32 %v1063, %v1067
        %v1070 = vadd.f32 %v1056, %v1068
        %v1071 = vadd.f32 %v1057, %v1069
        %s1072 = scalar_lea.vmem [#allocation2], 368
        %v1073 = vld [vmem:[%s1072] sm:$0xff]
        %v1074 = vld [vmem:[%s1072 + $0x8] sm:$0xff]
        %v1075 = vmul.f32 %v623, %v1073
        %v1076 = vmul.f32 %v622, %v1074
        %v1077 = vadd.f32 %v1070, %v1075
        %v1078 = vadd.f32 %v1071, %v1076
        %s1079 = scalar_lea.vmem [#allocation2], 384
        %v1080 = vld [vmem:[%s1079] sm:$0xff]
        %v1081 = vld [vmem:[%s1079 + $0x8] sm:$0xff]
        %v1082 = vmul.f32 %v580, %v1080
        %v1083 = vmul.f32 %v581, %v1081
        %v1084 = vadd.f32 %v1077, %v1082
        %v1085 = vadd.f32 %v1078, %v1083
        %s1086 = scalar_lea.vmem [#allocation2], 400
        %v1087 = vld [vmem:[%s1086] sm:$0xff]
        %v1088 = vld [vmem:[%s1086 + $0x8] sm:$0xff]
        %v1089 = vmul.f32 %v642, %v1087
        %v1090 = vmul.f32 %v643, %v1088
        %v1091 = vadd.f32 %v1084, %v1089
        %v1092 = vadd.f32 %v1085, %v1090
        %1093 = vrot.lane.b32.xlu0 %v580, 126
        %v1094 = vpop.permute.xlu0 %1093
        %1095 = vrot.lane.b32.xlu0 %v581, 126
        %v1096 = vpop.permute.xlu0 %1095
        %vm1097 = vcmp.lt.s32.totalorder %v453, 126
        %v1098 = vsel %vm1097, %v1094, %v1096
        %v1099 = vsel %vm1097, %v1096, %v1094
        %s1100 = scalar_lea.vmem [#allocation2], 416
        %v1101 = vld [vmem:[%s1100] sm:$0xff]
        %v1102 = vld [vmem:[%s1100 + $0x8] sm:$0xff]
        %v1103 = vmul.f32 %v1098, %v1101
        %v1104 = vmul.f32 %v1099, %v1102
        %v1105 = vadd.f32 %v1091, %v1103
        %v1106 = vadd.f32 %v1092, %v1104
        %1107 = vrot.lane.b32.xlu0 %v580, 125
        %v1108 = vpop.permute.xlu0 %1107
        %1109 = vrot.lane.b32.xlu0 %v581, 125
        %v1110 = vpop.permute.xlu0 %1109
        %vm1111 = vcmp.lt.s32.totalorder %v453, 125
        %v1112 = vsel %vm1111, %v1108, %v1110
        %v1113 = vsel %vm1111, %v1110, %v1108
        %s1114 = scalar_lea.vmem [#allocation2], 432
        %v1115 = vld [vmem:[%s1114] sm:$0xff]
        %v1116 = vld [vmem:[%s1114 + $0x8] sm:$0xff]
        %v1117 = vmul.f32 %v1112, %v1115
        %v1118 = vmul.f32 %v1113, %v1116
        %v1119 = vadd.f32 %v1105, %v1117
        %v1120 = vadd.f32 %v1106, %v1118
        %1121 = vrot.lane.b32.xlu0 %v580, 115
        %v1122 = vpop.permute.xlu0 %1121
        %1123 = vrot.lane.b32.xlu0 %v581, 115
        %v1124 = vpop.permute.xlu0 %1123
        %vm1125 = vcmp.lt.s32.totalorder %v453, 115
        %v1126 = vsel %vm1125, %v1122, %v1124
        %v1127 = vsel %vm1125, %v1124, %v1122
        %s1128 = scalar_lea.vmem [#allocation2], 448
        %v1129 = vld [vmem:[%s1128] sm:$0xff]
        %v1130 = vld [vmem:[%s1128 + $0x8] sm:$0xff]
        %v1131 = vmul.f32 %v1126, %v1129
        %v1132 = vmul.f32 %v1127, %v1130
        %v1133 = vadd.f32 %v1119, %v1131
        %v1134 = vadd.f32 %v1120, %v1132
        %1135 = vrot.lane.b32.xlu0 %v580, 114
        %v1136 = vpop.permute.xlu0 %1135
        %1137 = vrot.lane.b32.xlu0 %v581, 114
        %v1138 = vpop.permute.xlu0 %1137
        %vm1139 = vcmp.lt.s32.totalorder %v453, 114
        %v1140 = vsel %vm1139, %v1136, %v1138
        %v1141 = vsel %vm1139, %v1138, %v1136
        %s1142 = scalar_lea.vmem [#allocation2], 464
        %v1143 = vld [vmem:[%s1142] sm:$0xff]
        %v1144 = vld [vmem:[%s1142 + $0x8] sm:$0xff]
        %v1145 = vmul.f32 %v1140, %v1143
        %v1146 = vmul.f32 %v1141, %v1144
        %v1147 = vadd.f32 %v1133, %v1145
        %v1148 = vadd.f32 %v1134, %v1146
        %s1149 = scalar_lea.vmem [#allocation2], 480
        %v1150 = vld [vmem:[%s1149] sm:$0xff]
        %v1151 = vld [vmem:[%s1149 + $0x8] sm:$0xff]
        %v1152 = vmul.f32 %v655, %v1150
        %v1153 = vmul.f32 %v656, %v1151
        %v1154 = vadd.f32 %v1147, %v1152
        %v1155 = vadd.f32 %v1148, %v1153
        %s1156 = scalar_lea.vmem [#allocation2], 496
        %v1157 = vld [vmem:[%s1156] sm:$0xff]
        %v1158 = vld [vmem:[%s1156 + $0x8] sm:$0xff]
        %v1159 = vmul.f32 %v668, %v1157
        %v1160 = vmul.f32 %v669, %v1158
        %v1161 = vadd.f32 %v1154, %v1159
        %v1162 = vadd.f32 %v1155, %v1160
        %s1163 = scalar_lea.vmem [#allocation2], 512
        %v1164 = vld [vmem:[%s1163] sm:$0xff]
        %v1165 = vld [vmem:[%s1163 + $0x8] sm:$0xff]
        %v1166 = vmul.f32 %v681, %v1164
        %v1167 = vmul.f32 %v682, %v1165
        %v1168 = vadd.f32 %v1161, %v1166
        %v1169 = vadd.f32 %v1162, %v1167
        %1170 = vrot.lane.b32.xlu0 %v580, 110
        %v1171 = vpop.permute.xlu0 %1170
        %1172 = vrot.lane.b32.xlu0 %v581, 110
        %v1173 = vpop.permute.xlu0 %1172
        %vm1174 = vcmp.lt.s32.totalorder %v453, 110
        %v1175 = vsel %vm1174, %v1171, %v1173
        %v1176 = vsel %vm1174, %v1173, %v1171
        %s1177 = scalar_lea.vmem [#allocation2], 528
        %v1178 = vld [vmem:[%s1177] sm:$0xff]
        %v1179 = vld [vmem:[%s1177 + $0x8] sm:$0xff]
        %v1180 = vmul.f32 %v1175, %v1178
        %v1181 = vmul.f32 %v1176, %v1179
        %v1182 = vadd.f32 %v1168, %v1180
        %v1183 = vadd.f32 %v1169, %v1181
        %1184 = vrot.lane.b32.xlu0 %v580, 109
        %v1185 = vpop.permute.xlu0 %1184
        %1186 = vrot.lane.b32.xlu0 %v581, 109
        %v1187 = vpop.permute.xlu0 %1186
        %vm1188 = vcmp.lt.s32.totalorder %v453, 109
        %v1189 = vsel %vm1188, %v1185, %v1187
        %v1190 = vsel %vm1188, %v1187, %v1185
        %s1191 = scalar_lea.vmem [#allocation2], 544
        %v1192 = vld [vmem:[%s1191] sm:$0xff]
        %v1193 = vld [vmem:[%s1191 + $0x8] sm:$0xff]
        %v1194 = vmul.f32 %v1189, %v1192
        %v1195 = vmul.f32 %v1190, %v1193
        %v1196 = vadd.f32 %v1182, %v1194
        %v1197 = vadd.f32 %v1183, %v1195
        %1198 = vrot.lane.b32.xlu0 %v580, 99
        %v1199 = vpop.permute.xlu0 %1198
        %1200 = vrot.lane.b32.xlu0 %v581, 99
        %v1201 = vpop.permute.xlu0 %1200
        %vm1202 = vcmp.lt.s32.totalorder %v453, 99
        %v1203 = vsel %vm1202, %v1199, %v1201
        %v1204 = vsel %vm1202, %v1201, %v1199
        %s1205 = scalar_lea.vmem [#allocation2], 560
        %v1206 = vld [vmem:[%s1205] sm:$0xff]
        %v1207 = vld [vmem:[%s1205 + $0x8] sm:$0xff]
        %v1208 = vmul.f32 %v1203, %v1206
        %v1209 = vmul.f32 %v1204, %v1207
        %v1210 = vadd.f32 %v1196, %v1208
        %v1211 = vadd.f32 %v1197, %v1209
        %1212 = vrot.lane.b32.xlu0 %v580, 98
        %v1213 = vpop.permute.xlu0 %1212
        %1214 = vrot.lane.b32.xlu0 %v581, 98
        %v1215 = vpop.permute.xlu0 %1214
        %vm1216 = vcmp.lt.s32.totalorder %v453, 98
        %v1217 = vsel %vm1216, %v1213, %v1215
        %v1218 = vsel %vm1216, %v1215, %v1213
        %s1219 = scalar_lea.vmem [#allocation2], 576
        %v1220 = vld [vmem:[%s1219] sm:$0xff]
        %v1221 = vld [vmem:[%s1219 + $0x8] sm:$0xff]
        %v1222 = vmul.f32 %v1217, %v1220
        %v1223 = vmul.f32 %v1218, %v1221
        %v1224 = vadd.f32 %v1210, %v1222
        %v1225 = vadd.f32 %v1211, %v1223
        %1226 = vrot.lane.b32.xlu0 %v580, 97
        %v1227 = vpop.permute.xlu0 %1226
        %1228 = vrot.lane.b32.xlu0 %v581, 97
        %v1229 = vpop.permute.xlu0 %1228
        %vm1230 = vcmp.lt.s32.totalorder %v453, 97
        %v1231 = vsel %vm1230, %v1227, %v1229
        %v1232 = vsel %vm1230, %v1229, %v1227
        %s1233 = scalar_lea.vmem [#allocation2], 592
        %v1234 = vld [vmem:[%s1233] sm:$0xff]
        %v1235 = vld [vmem:[%s1233 + $0x8] sm:$0xff]
        %v1236 = vmul.f32 %v1231, %v1234
        %v1237 = vmul.f32 %v1232, %v1235
        %v1238 = vadd.f32 %v1224, %v1236
        %v1239 = vadd.f32 %v1225, %v1237
        %1240 = vrot.lane.b32.xlu0 %v580, 96
        %v1241 = vpop.permute.xlu0 %1240
        %1242 = vrot.lane.b32.xlu0 %v581, 96
        %v1243 = vpop.permute.xlu0 %1242
        %vm1244 = vcmp.lt.s32.totalorder %v453, 96
        %v1245 = vsel %vm1244, %v1241, %v1243
        %v1246 = vsel %vm1244, %v1243, %v1241
        %s1247 = scalar_lea.vmem [#allocation2], 608
        %v1248 = vld [vmem:[%s1247] sm:$0xff]
        %v1249 = vld [vmem:[%s1247 + $0x8] sm:$0xff]
        %v1250 = vmul.f32 %v1245, %v1248
        %v1251 = vmul.f32 %v1246, %v1249
        %v1252 = vadd.f32 %v1238, %v1250
        %v1253 = vadd.f32 %v1239, %v1251
        %1254 = vrot.lane.b32.xlu0 %v580, 95
        %v1255 = vpop.permute.xlu0 %1254
        %1256 = vrot.lane.b32.xlu0 %v581, 95
        %v1257 = vpop.permute.xlu0 %1256
        %vm1258 = vcmp.lt.s32.totalorder %v453, 95
        %v1259 = vsel %vm1258, %v1255, %v1257
        %v1260 = vsel %vm1258, %v1257, %v1255
        %s1261 = scalar_lea.vmem [#allocation2], 624
        %v1262 = vld [vmem:[%s1261] sm:$0xff]
        %v1263 = vld [vmem:[%s1261 + $0x8] sm:$0xff]
        %v1264 = vmul.f32 %v1259, %v1262
        %v1265 = vmul.f32 %v1260, %v1263
        %v1266 = vadd.f32 %v1252, %v1264
        %v1267 = vadd.f32 %v1253, %v1265
        %1268 = vrot.lane.b32.xlu0 %v580, 94
        %v1269 = vpop.permute.xlu0 %1268
        %1270 = vrot.lane.b32.xlu0 %v581, 94
        %v1271 = vpop.permute.xlu0 %1270
        %vm1272 = vcmp.lt.s32.totalorder %v453, 94
        %v1273 = vsel %vm1272, %v1269, %v1271
        %v1274 = vsel %vm1272, %v1271, %v1269
        %s1275 = scalar_lea.vmem [#allocation2], 640
        %v1276 = vld [vmem:[%s1275] sm:$0xff]
        %v1277 = vld [vmem:[%s1275 + $0x8] sm:$0xff]
        %v1278 = vmul.f32 %v1273, %v1276
        %v1279 = vmul.f32 %v1274, %v1277
        %v1280 = vadd.f32 %v1266, %v1278
        %v1281 = vadd.f32 %v1267, %v1279
        %1282 = vrot.lane.b32.xlu0 %v580, 93
        %v1283 = vpop.permute.xlu0 %1282
        %1284 = vrot.lane.b32.xlu0 %v581, 93
        %v1285 = vpop.permute.xlu0 %1284
        %vm1286 = vcmp.lt.s32.totalorder %v453, 93
        %v1287 = vsel %vm1286, %v1283, %v1285
        %v1288 = vsel %vm1286, %v1285, %v1283
        %s1289 = scalar_lea.vmem [#allocation2], 656
        %v1290 = vld [vmem:[%s1289] sm:$0xff]
        %v1291 = vld [vmem:[%s1289 + $0x8] sm:$0xff]
        %v1292 = vmul.f32 %v1287, %v1290
        %v1293 = vmul.f32 %v1288, %v1291
        %v1294 = vadd.f32 %v1280, %v1292
        %v1295 = vadd.f32 %v1281, %v1293
        %1296 = vrot.lane.b32.xlu0 %v580, 83
        %v1297 = vpop.permute.xlu0 %1296
        %1298 = vrot.lane.b32.xlu0 %v581, 83
        %v1299 = vpop.permute.xlu0 %1298
        %vm1300 = vcmp.lt.s32.totalorder %v453, 83
        %v1301 = vsel %vm1300, %v1297, %v1299
        %v1302 = vsel %vm1300, %v1299, %v1297
        %s1303 = scalar_lea.vmem [#allocation2], 672
        %v1304 = vld [vmem:[%s1303] sm:$0xff]
        %v1305 = vld [vmem:[%s1303 + $0x8] sm:$0xff]
        %v1306 = vmul.f32 %v1301, %v1304
        %v1307 = vmul.f32 %v1302, %v1305
        %v1308 = vadd.f32 %v1294, %v1306
        %v1309 = vadd.f32 %v1295, %v1307
        %1310 = vrot.lane.b32.xlu0 %v580, 82
        %v1311 = vpop.permute.xlu0 %1310
        %1312 = vrot.lane.b32.xlu0 %v581, 82
        %v1313 = vpop.permute.xlu0 %1312
        %vm1314 = vcmp.lt.s32.totalorder %v453, 82
        %v1315 = vsel %vm1314, %v1311, %v1313
        %v1316 = vsel %vm1314, %v1313, %v1311
        %s1317 = scalar_lea.vmem [#allocation2], 688
        %v1318 = vld [vmem:[%s1317] sm:$0xff]
        %v1319 = vld [vmem:[%s1317 + $0x8] sm:$0xff]
        %v1320 = vmul.f32 %v1315, %v1318
        %v1321 = vmul.f32 %v1316, %v1319
        %v1322 = vadd.f32 %v1308, %v1320
        %v1323 = vadd.f32 %v1309, %v1321
        %1324 = vrot.lane.b32.xlu0 %v580, 81
        %v1325 = vpop.permute.xlu0 %1324
        %1326 = vrot.lane.b32.xlu0 %v581, 81
        %v1327 = vpop.permute.xlu0 %1326
        %vm1328 = vcmp.lt.s32.totalorder %v453, 81
        %v1329 = vsel %vm1328, %v1325, %v1327
        %v1330 = vsel %vm1328, %v1327, %v1325
        %s1331 = scalar_lea.vmem [#allocation2], 704
        %v1332 = vld [vmem:[%s1331] sm:$0xff]
        %v1333 = vld [vmem:[%s1331 + $0x8] sm:$0xff]
        %v1334 = vmul.f32 %v1329, %v1332
        %v1335 = vmul.f32 %v1330, %v1333
        %v1336 = vadd.f32 %v1322, %v1334
        %v1337 = vadd.f32 %v1323, %v1335
        %1338 = vrot.lane.b32.xlu0 %v580, 80
        %v1339 = vpop.permute.xlu0 %1338
        %1340 = vrot.lane.b32.xlu0 %v581, 80
        %v1341 = vpop.permute.xlu0 %1340
        %vm1342 = vcmp.lt.s32.totalorder %v453, 80
        %v1343 = vsel %vm1342, %v1339, %v1341
        %v1344 = vsel %vm1342, %v1341, %v1339
        %s1345 = scalar_lea.vmem [#allocation2], 720
        %v1346 = vld [vmem:[%s1345] sm:$0xff]
        %v1347 = vld [vmem:[%s1345 + $0x8] sm:$0xff]
        %v1348 = vmul.f32 %v1343, %v1346
        %v1349 = vmul.f32 %v1344, %v1347
        %v1350 = vadd.f32 %v1336, %v1348
        %v1351 = vadd.f32 %v1337, %v1349
        %1352 = vrot.lane.b32.xlu0 %v580, 79
        %v1353 = vpop.permute.xlu0 %1352
        %1354 = vrot.lane.b32.xlu0 %v581, 79
        %v1355 = vpop.permute.xlu0 %1354
        %vm1356 = vcmp.lt.s32.totalorder %v453, 79
        %v1357 = vsel %vm1356, %v1353, %v1355
        %v1358 = vsel %vm1356, %v1355, %v1353
        %s1359 = scalar_lea.vmem [#allocation2], 736
        %v1360 = vld [vmem:[%s1359] sm:$0xff]
        %v1361 = vld [vmem:[%s1359 + $0x8] sm:$0xff]
        %v1362 = vmul.f32 %v1357, %v1360
        %v1363 = vmul.f32 %v1358, %v1361
        %v1364 = vadd.f32 %v1350, %v1362
        %v1365 = vadd.f32 %v1351, %v1363
        %1366 = vrot.lane.b32.xlu0 %v580, 78
        %v1367 = vpop.permute.xlu0 %1366
        %1368 = vrot.lane.b32.xlu0 %v581, 78
        %v1369 = vpop.permute.xlu0 %1368
        %vm1370 = vcmp.lt.s32.totalorder %v453, 78
        %v1371 = vsel %vm1370, %v1367, %v1369
        %v1372 = vsel %vm1370, %v1369, %v1367
        %s1373 = scalar_lea.vmem [#allocation2], 752
        %v1374 = vld [vmem:[%s1373] sm:$0xff]
        %v1375 = vld [vmem:[%s1373 + $0x8] sm:$0xff]
        %v1376 = vmul.f32 %v1371, %v1374
        %v1377 = vmul.f32 %v1372, %v1375
        %v1378 = vadd.f32 %v1364, %v1376
        %v1379 = vadd.f32 %v1365, %v1377
        %1380 = vrot.lane.b32.xlu0 %v580, 77
        %v1381 = vpop.permute.xlu0 %1380
        %1382 = vrot.lane.b32.xlu0 %v581, 77
        %v1383 = vpop.permute.xlu0 %1382
        %vm1384 = vcmp.lt.s32.totalorder %v453, 77
        %v1385 = vsel %vm1384, %v1381, %v1383
        %v1386 = vsel %vm1384, %v1383, %v1381
        %s1387 = scalar_lea.vmem [#allocation2], 768
        %v1388 = vld [vmem:[%s1387] sm:$0xff]
        %v1389 = vld [vmem:[%s1387 + $0x8] sm:$0xff]
        %v1390 = vmul.f32 %v1385, %v1388
        %v1391 = vmul.f32 %v1386, %v1389
        %v1392 = vadd.f32 %v1378, %v1390
        %v1393 = vadd.f32 %v1379, %v1391
        %s1394 = scalar_lea.vmem [#allocation9], 80
        %v1395 = vld [vmem:[%s1394] sm:$0xff]
        %v1396 = vld [vmem:[%s1394 + $0x8] sm:$0xff]
        %v1397 = vadd.f32 %v1392, %v1395
        %v1398 = vadd.f32 %v1393, %v1396
        %v1399 = vadd.f32 %v770, %v1397
        %v1400 = vadd.f32 %v772, %v1398
        %v1401 = vadd.f32 %v1399, %v580
        %v1402 = vadd.f32 %v1400, %v581
        %s1403 = scalar_lea.vmem [#allocation9], 96
        %v1404 = vld [vmem:[%s1403] sm:$0xff]
        %v1405 = vld [vmem:[%s1403 + $0x8] sm:$0xff]
        %v1406 = vmul.f32 %v1401, %v1404
        %v1407 = vmul.f32 %v1402, %v1405
        %s1408 = scalar_lea.vmem [#allocation9], 112
        %v1409 = vld [vmem:[%s1408] sm:$0xff]
        %v1410 = vld [vmem:[%s1408 + $0x8] sm:$0xff]
        %v1411 = vadd.f32 %v1406, %v1409
        %v1412 = vadd.f32 %v1407, %v1410
        %v1413 = vmax.f32 %v1411, 0.0
        %v1414 = vmax.f32 %v1412, 0.0
        %1415 = vst [vmem:[%s440] sm:$0xff] %v1413
        %1416 = vst [vmem:[%s440 + $0x8] sm:$0xff] %v1414
        %v1417 = vld [vmem:[#allocation6] sm:$0xff]
        %v1418 = vld [vmem:[#allocation6 + $0x8] sm:$0xff]
        %v1419 = vld [vmem:[#allocation6 + $0x10] sm:$0xff]
        %v1420 = vld [vmem:[#allocation6 + $0x18] sm:$0xff]
        %v1421 = vld [vmem:[#allocation6 + $0x20] sm:$0xff]
        %v1422 = vld [vmem:[#allocation6 + $0x28] sm:$0xff]
        %v1423 = vld [vmem:[#allocation6 + $0x30] sm:$0xff]
        %v1424 = vld [vmem:[#allocation6 + $0x38] sm:$0xff]
        %v1425 = vld [vmem:[#allocation6 + $0x40] sm:$0xff]
        %v1426 = vld [vmem:[#allocation6 + $0x48] sm:$0xff]
        %v1427 = vld [vmem:[#allocation6 + $0x50] sm:$0xff]
        %v1428 = vld [vmem:[#allocation6 + $0x58] sm:$0xff]
        %v1429 = vld [vmem:[#allocation6 + $0x60] sm:$0xff]
        %v1430 = vld [vmem:[#allocation6 + $0x68] sm:$0xff]
        %v1431 = vld [vmem:[#allocation6 + $0x70] sm:$0xff]
        %v1432 = vld [vmem:[#allocation6 + $0x78] sm:$0xff]
        %v1433 = vld [vmem:[#allocation6 + $0x80] sm:$0xff]
        %v1434 = vld [vmem:[#allocation6 + $0x88] sm:$0xff]
        %v1435 = vld [vmem:[#allocation6 + $0x90] sm:$0xff]
        %v1436 = vld [vmem:[#allocation6 + $0x98] sm:$0xff]
        %v1437 = vld [vmem:[#allocation6 + $0xa0] sm:$0xff]
        %v1438 = vld [vmem:[#allocation6 + $0xa8] sm:$0xff]
        %v1439 = vld [vmem:[#allocation6 + $0xb0] sm:$0xff]
        %v1440 = vld [vmem:[#allocation6 + $0xb8] sm:$0xff]
        %v1441 = vld [vmem:[#allocation6 + $0xc0] sm:$0xff]
        %v1442 = vld [vmem:[#allocation6 + $0xc8] sm:$0xff]
        %v1443 = vld [vmem:[#allocation6 + $0xd0] sm:$0xff]
        %v1444 = vld [vmem:[#allocation6 + $0xd8] sm:$0xff]
        %v1445 = vld [vmem:[#allocation6 + $0xe0] sm:$0xff]
        %v1446 = vld [vmem:[#allocation6 + $0xe8] sm:$0xff]
        %v1447 = vld [vmem:[#allocation6 + $0xf0] sm:$0xff]
        %v1448 = vld [vmem:[#allocation6 + $0xf8] sm:$0xff]
        %v1449 = vld [vmem:[#allocation6 + $0x100] sm:$0xff]
        %v1450 = vld [vmem:[#allocation6 + $0x108] sm:$0xff]
        %v1451 = vld [vmem:[#allocation6 + $0x110] sm:$0xff]
        %v1452 = vld [vmem:[#allocation6 + $0x118] sm:$0xff]
        %v1453 = vld [vmem:[#allocation6 + $0x120] sm:$0xff]
        %v1454 = vld [vmem:[#allocation6 + $0x128] sm:$0xff]
        %v1455 = vld [vmem:[#allocation6 + $0x130] sm:$0xff]
        %v1456 = vld [vmem:[#allocation6 + $0x138] sm:$0xff]
        %v1457 = vld [vmem:[#allocation6 + $0x140] sm:$0xff]
        %v1458 = vld [vmem:[#allocation6 + $0x148] sm:$0xff]
        %v1459 = vld [vmem:[#allocation6 + $0x150] sm:$0xff]
        %v1460 = vld [vmem:[#allocation6 + $0x158] sm:$0xff]
        %v1461 = vld [vmem:[#allocation6 + $0x160] sm:$0xff]
        %v1462 = vld [vmem:[#allocation6 + $0x168] sm:$0xff]
        %v1463 = vld [vmem:[#allocation6 + $0x170] sm:$0xff]
        %v1464 = vld [vmem:[#allocation6 + $0x178] sm:$0xff]
        %v1465 = vld [vmem:[#allocation6 + $0x180] sm:$0xff]
        %v1466 = vld [vmem:[#allocation6 + $0x188] sm:$0xff]
        %v1467 = vld [vmem:[#allocation6 + $0x190] sm:$0xff]
        %v1468 = vld [vmem:[#allocation6 + $0x198] sm:$0xff]
        %v1469 = vld [vmem:[#allocation6 + $0x1a0] sm:$0xff]
        %v1470 = vld [vmem:[#allocation6 + $0x1a8] sm:$0xff]
        %v1471 = vld [vmem:[#allocation6 + $0x1b0] sm:$0xff]
        %v1472 = vld [vmem:[#allocation6 + $0x1b8] sm:$0xff]
        %v1473 = vld [vmem:[#allocation6 + $0x1c0] sm:$0xff]
        %v1474 = vld [vmem:[#allocation6 + $0x1c8] sm:$0xff]
        %v1475 = vld [vmem:[#allocation6 + $0x1d0] sm:$0xff]
        %v1476 = vld [vmem:[#allocation6 + $0x1d8] sm:$0xff]
        %v1477 = vld [vmem:[#allocation6 + $0x1e0] sm:$0xff]
        %v1478 = vld [vmem:[#allocation6 + $0x1e8] sm:$0xff]
        %v1479 = vld [vmem:[#allocation6 + $0x1f0] sm:$0xff]
        %v1480 = vld [vmem:[#allocation6 + $0x1f8] sm:$0xff]
        %1481 = vmatprep.subr.mxu0 %v1448
        %1482 = vmatpush1.msra.mxu0 %v1447
        %1483 = vmatprep.subr.mxu0 %v1446
        %1484 = vmatpush1.msra.mxu0 %v1445
        %1485 = vmatprep.subr.mxu0 %v1444
        %1486 = vmatpush1.msra.mxu0 %v1443
        %1487 = vmatprep.subr.mxu0 %v1442
        %1488 = vmatpush1.msra.mxu0 %v1441
        %1489 = vmatprep.subr.mxu0 %v1440
        %1490 = vmatpush1.msra.mxu0 %v1439
        %1491 = vmatprep.subr.mxu0 %v1438
        %1492 = vmatpush1.msra.mxu0 %v1437
        %1493 = vmatprep.subr.mxu0 %v1436
        %1494 = vmatpush1.msra.mxu0 %v1435
        %1495 = vmatprep.subr.mxu0 %v1434
        %1496 = vmatpush1.msra.mxu0 %v1433
        %1497 = vmatprep.subr.mxu0 %v1432
        %1498 = vmatpush1.msra.mxu0 %v1431
        %1499 = vmatprep.subr.mxu0 %v1430
        %1500 = vmatpush1.msra.mxu0 %v1429
        %1501 = vmatprep.subr.mxu0 %v1428
        %1502 = vmatpush1.msra.mxu0 %v1427
        %1503 = vmatprep.subr.mxu0 %v1426
        %1504 = vmatpush1.msra.mxu0 %v1425
        %1505 = vmatprep.subr.mxu0 %v1424
        %1506 = vmatpush1.msra.mxu0 %v1423
        %1507 = vmatprep.subr.mxu0 %v1422
        %1508 = vmatpush1.msra.mxu0 %v1421
        %1509 = vmatprep.subr.mxu0 %v1420
        %1510 = vmatpush1.msra.mxu0 %v1419
        %1511 = vmatprep.subr.mxu0 %v1418
        %1512 = vmatpush1.msra.mxu0 %v1417
        %1513 = vmatprep.subr.mxu0 %v1480
        %1514 = vmatpush2.msra.mxu0 %v1479
        %1515 = vmatprep.subr.mxu0 %v1478
        %1516 = vmatpush2.msra.mxu0 %v1477
        %1517 = vmatprep.subr.mxu0 %v1476
        %1518 = vmatpush2.msra.mxu0 %v1475
        %1519 = vmatprep.subr.mxu0 %v1474
        %1520 = vmatpush2.msra.mxu0 %v1473
        %1521 = vmatprep.subr.mxu0 %v1472
        %1522 = vmatpush2.msra.mxu0 %v1471
        %1523 = vmatprep.subr.mxu0 %v1470
        %1524 = vmatpush2.msra.mxu0 %v1469
        %1525 = vmatprep.subr.mxu0 %v1468
        %1526 = vmatpush2.msra.mxu0 %v1467
        %1527 = vmatprep.subr.mxu0 %v1466
        %1528 = vmatpush2.msra.mxu0 %v1465
        %1529 = vmatprep.subr.mxu0 %v1464
        %1530 = vmatpush2.msra.mxu0 %v1463
        %1531 = vmatprep.subr.mxu0 %v1462
        %1532 = vmatpush2.msra.mxu0 %v1461
        %1533 = vmatprep.subr.mxu0 %v1460
        %1534 = vmatpush2.msra.mxu0 %v1459
        %1535 = vmatprep.subr.mxu0 %v1458
        %1536 = vmatpush2.msra.mxu0 %v1457
        %1537 = vmatprep.subr.mxu0 %v1456
        %1538 = vmatpush2.msra.mxu0 %v1455
        %1539 = vmatprep.subr.mxu0 %v1454
        %1540 = vmatpush2.msra.mxu0 %v1453
        %1541 = vmatprep.subr.mxu0 %v1452
        %1542 = vmatpush2.msra.mxu0 %v1451
        %1543 = vmatprep.subr.mxu0 %v1450
        %1544 = vmatpush2.msra.mxu0 %v1449
        %1545 = vmatprep.mubr.f32.mxu0 %v447
        %1546 = vmatmul.mubr.f32.gmra.mxu0 %v446
        %v1547 = vpop.f32.mrf.mxu0
        %v1548 = vadd.f32 0.0, %v1547
        %v1549 = vpop.f32.mrf.mxu0
        %v1550 = vadd.f32 0.0, %v1549
        %1551 = vdwg.mxu0
        %1552 = vrot.lane.b32.xlu0 %v1548, 9
        %v1553 = vpop.permute.xlu0 %1552
        %1554 = vrot.lane.b32.xlu0 %v1550, 9
        %v1555 = vpop.permute.xlu0 %1554
        %vm1556 = vcmp.lt.s32.totalorder %v453, 9
        %v1557 = vsel %vm1556, %v1553, %v1555
        %v1558 = vsel %vm1556, %v1555, %v1553
        %v1559 = vld [vmem:[#allocation4] sm:$0xff]
        %v1560 = vld [vmem:[#allocation4 + $0x8] sm:$0xff]
        %v1561 = vmul.f32 %v1558, %v1559
        %v1562 = vmul.f32 %v1557, %v1560
        %1563 = vrot.lane.b32.xlu0 %v1548, 8
        %v1564 = vpop.permute.xlu0 %1563
        %1565 = vrot.lane.b32.xlu0 %v1550, 8
        %v1566 = vpop.permute.xlu0 %1565
        %vm1567 = vcmp.lt.s32.totalorder %v453, 8
        %v1568 = vsel %vm1567, %v1564, %v1566
        %v1569 = vsel %vm1567, %v1566, %v1564
        %s1570 = scalar_lea.vmem [#allocation4], 16
        %v1571 = vld [vmem:[%s1570] sm:$0xff]
        %v1572 = vld [vmem:[%s1570 + $0x8] sm:$0xff]
        %v1573 = vmul.f32 %v1569, %v1571
        %v1574 = vmul.f32 %v1568, %v1572
        %v1575 = vadd.f32 %v1561, %v1573
        %v1576 = vadd.f32 %v1562, %v1574
        %1577 = vrot.lane.b32.xlu0 %v1548, 7
        %v1578 = vpop.permute.xlu0 %1577
        %1579 = vrot.lane.b32.xlu0 %v1550, 7
        %v1580 = vpop.permute.xlu0 %1579
        %vm1581 = vcmp.lt.s32.totalorder %v453, 7
        %v1582 = vsel %vm1581, %v1578, %v1580
        %v1583 = vsel %vm1581, %v1580, %v1578
        %s1584 = scalar_lea.vmem [#allocation4], 32
        %v1585 = vld [vmem:[%s1584] sm:$0xff]
        %v1586 = vld [vmem:[%s1584 + $0x8] sm:$0xff]
        %v1587 = vmul.f32 %v1583, %v1585
        %v1588 = vmul.f32 %v1582, %v1586
        %v1589 = vadd.f32 %v1575, %v1587
        %v1590 = vadd.f32 %v1576, %v1588
        %1591 = vrot.lane.b32.xlu0 %v1548, 1
        %v1592 = vpop.permute.xlu0 %1591
        %1593 = vrot.lane.b32.xlu0 %v1550, 1
        %v1594 = vpop.permute.xlu0 %1593
        %v1595 = vsel %vm493, %v1592, %v1594
        %v1596 = vsel %vm493, %v1594, %v1592
        %s1597 = scalar_lea.vmem [#allocation4], 48
        %v1598 = vld [vmem:[%s1597] sm:$0xff]
        %v1599 = vld [vmem:[%s1597 + $0x8] sm:$0xff]
        %v1600 = vmul.f32 %v1596, %v1598
        %v1601 = vmul.f32 %v1595, %v1599
        %v1602 = vadd.f32 %v1589, %v1600
        %v1603 = vadd.f32 %v1590, %v1601
        %s1604 = scalar_lea.vmem [#allocation4], 64
        %v1605 = vld [vmem:[%s1604] sm:$0xff]
        %v1606 = vld [vmem:[%s1604 + $0x8] sm:$0xff]
        %v1607 = vmul.f32 %v1548, %v1605
        %v1608 = vmul.f32 %v1550, %v1606
        %v1609 = vadd.f32 %v1602, %v1607
        %v1610 = vadd.f32 %v1603, %v1608
        %1611 = vrot.lane.b32.xlu0 %v1548, 127
        %v1612 = vpop.permute.xlu0 %1611
        %1613 = vrot.lane.b32.xlu0 %v1550, 127
        %v1614 = vpop.permute.xlu0 %1613
        %v1615 = vsel %vm514, %v1612, %v1614
        %v1616 = vsel %vm514, %v1614, %v1612
        %s1617 = scalar_lea.vmem [#allocation4], 80
        %v1618 = vld [vmem:[%s1617] sm:$0xff]
        %v1619 = vld [vmem:[%s1617 + $0x8] sm:$0xff]
        %v1620 = vmul.f32 %v1615, %v1618
        %v1621 = vmul.f32 %v1616, %v1619
        %v1622 = vadd.f32 %v1609, %v1620
        %v1623 = vadd.f32 %v1610, %v1621
        %1624 = vrot.lane.b32.xlu0 %v1548, 121
        %v1625 = vpop.permute.xlu0 %1624
        %1626 = vrot.lane.b32.xlu0 %v1550, 121
        %v1627 = vpop.permute.xlu0 %1626
        %vm1628 = vcmp.lt.s32.totalorder %v453, 121
        %v1629 = vsel %vm1628, %v1625, %v1627
        %v1630 = vsel %vm1628, %v1627, %v1625
        %s1631 = scalar_lea.vmem [#allocation4], 96
        %v1632 = vld [vmem:[%s1631] sm:$0xff]
        %v1633 = vld [vmem:[%s1631 + $0x8] sm:$0xff]
        %v1634 = vmul.f32 %v1629, %v1632
        %v1635 = vmul.f32 %v1630, %v1633
        %v1636 = vadd.f32 %v1622, %v1634
        %v1637 = vadd.f32 %v1623, %v1635
        %1638 = vrot.lane.b32.xlu0 %v1548, 120
        %v1639 = vpop.permute.xlu0 %1638
        %1640 = vrot.lane.b32.xlu0 %v1550, 120
        %v1641 = vpop.permute.xlu0 %1640
        %vm1642 = vcmp.lt.s32.totalorder %v453, 120
        %v1643 = vsel %vm1642, %v1639, %v1641
        %v1644 = vsel %vm1642, %v1641, %v1639
        %s1645 = scalar_lea.vmem [#allocation4], 112
        %v1646 = vld [vmem:[%s1645] sm:$0xff]
        %v1647 = vld [vmem:[%s1645 + $0x8] sm:$0xff]
        %v1648 = vmul.f32 %v1643, %v1646
        %v1649 = vmul.f32 %v1644, %v1647
        %v1650 = vadd.f32 %v1636, %v1648
        %v1651 = vadd.f32 %v1637, %v1649
        %1652 = vrot.lane.b32.xlu0 %v1548, 119
        %v1653 = vpop.permute.xlu0 %1652
        %1654 = vrot.lane.b32.xlu0 %v1550, 119
        %v1655 = vpop.permute.xlu0 %1654
        %vm1656 = vcmp.lt.s32.totalorder %v453, 119
        %v1657 = vsel %vm1656, %v1653, %v1655
        %v1658 = vsel %vm1656, %v1655, %v1653
        %s1659 = scalar_lea.vmem [#allocation4], 128
        %v1660 = vld [vmem:[%s1659] sm:$0xff]
        %v1661 = vld [vmem:[%s1659 + $0x8] sm:$0xff]
        %v1662 = vmul.f32 %v1657, %v1660
        %v1663 = vmul.f32 %v1658, %v1661
        %v1664 = vadd.f32 %v1650, %v1662
        %v1665 = vadd.f32 %v1651, %v1663
        %v1666 = vld [vmem:[#allocation7] sm:$0xff]
        %v1667 = vld [vmem:[#allocation7 + $0x8] sm:$0xff]
        %v1668 = vld [vmem:[#allocation7 + $0x10] sm:$0xff]
        %v1669 = vld [vmem:[#allocation7 + $0x18] sm:$0xff]
        %v1670 = vld [vmem:[#allocation7 + $0x20] sm:$0xff]
        %v1671 = vld [vmem:[#allocation7 + $0x28] sm:$0xff]
        %v1672 = vld [vmem:[#allocation7 + $0x30] sm:$0xff]
        %v1673 = vld [vmem:[#allocation7 + $0x38] sm:$0xff]
        %v1674 = vld [vmem:[#allocation7 + $0x40] sm:$0xff]
        %v1675 = vld [vmem:[#allocation7 + $0x48] sm:$0xff]
        %v1676 = vld [vmem:[#allocation7 + $0x50] sm:$0xff]
        %v1677 = vld [vmem:[#allocation7 + $0x58] sm:$0xff]
        %v1678 = vld [vmem:[#allocation7 + $0x60] sm:$0xff]
        %v1679 = vld [vmem:[#allocation7 + $0x68] sm:$0xff]
        %v1680 = vld [vmem:[#allocation7 + $0x70] sm:$0xff]
        %v1681 = vld [vmem:[#allocation7 + $0x78] sm:$0xff]
        %v1682 = vld [vmem:[#allocation7 + $0x80] sm:$0xff]
        %v1683 = vld [vmem:[#allocation7 + $0x88] sm:$0xff]
        %v1684 = vld [vmem:[#allocation7 + $0x90] sm:$0xff]
        %v1685 = vld [vmem:[#allocation7 + $0x98] sm:$0xff]
        %v1686 = vld [vmem:[#allocation7 + $0xa0] sm:$0xff]
        %v1687 = vld [vmem:[#allocation7 + $0xa8] sm:$0xff]
        %v1688 = vld [vmem:[#allocation7 + $0xb0] sm:$0xff]
        %v1689 = vld [vmem:[#allocation7 + $0xb8] sm:$0xff]
        %v1690 = vld [vmem:[#allocation7 + $0xc0] sm:$0xff]
        %v1691 = vld [vmem:[#allocation7 + $0xc8] sm:$0xff]
        %v1692 = vld [vmem:[#allocation7 + $0xd0] sm:$0xff]
        %v1693 = vld [vmem:[#allocation7 + $0xd8] sm:$0xff]
        %v1694 = vld [vmem:[#allocation7 + $0xe0] sm:$0xff]
        %v1695 = vld [vmem:[#allocation7 + $0xe8] sm:$0xff]
        %v1696 = vld [vmem:[#allocation7 + $0xf0] sm:$0xff]
        %v1697 = vld [vmem:[#allocation7 + $0xf8] sm:$0xff]
        %v1698 = vld [vmem:[#allocation7 + $0x100] sm:$0xff]
        %v1699 = vld [vmem:[#allocation7 + $0x108] sm:$0xff]
        %v1700 = vld [vmem:[#allocation7 + $0x110] sm:$0xff]
        %v1701 = vld [vmem:[#allocation7 + $0x118] sm:$0xff]
        %v1702 = vld [vmem:[#allocation7 + $0x120] sm:$0xff]
        %v1703 = vld [vmem:[#allocation7 + $0x128] sm:$0xff]
        %v1704 = vld [vmem:[#allocation7 + $0x130] sm:$0xff]
        %v1705 = vld [vmem:[#allocation7 + $0x138] sm:$0xff]
        %v1706 = vld [vmem:[#allocation7 + $0x140] sm:$0xff]
        %v1707 = vld [vmem:[#allocation7 + $0x148] sm:$0xff]
        %v1708 = vld [vmem:[#allocation7 + $0x150] sm:$0xff]
        %v1709 = vld [vmem:[#allocation7 + $0x158] sm:$0xff]
        %v1710 = vld [vmem:[#allocation7 + $0x160] sm:$0xff]
        %v1711 = vld [vmem:[#allocation7 + $0x168] sm:$0xff]
        %v1712 = vld [vmem:[#allocation7 + $0x170] sm:$0xff]
        %v1713 = vld [vmem:[#allocation7 + $0x178] sm:$0xff]
        %v1714 = vld [vmem:[#allocation7 + $0x180] sm:$0xff]
        %v1715 = vld [vmem:[#allocation7 + $0x188] sm:$0xff]
        %v1716 = vld [vmem:[#allocation7 + $0x190] sm:$0xff]
        %v1717 = vld [vmem:[#allocation7 + $0x198] sm:$0xff]
        %v1718 = vld [vmem:[#allocation7 + $0x1a0] sm:$0xff]
        %v1719 = vld [vmem:[#allocation7 + $0x1a8] sm:$0xff]
        %v1720 = vld [vmem:[#allocation7 + $0x1b0] sm:$0xff]
        %v1721 = vld [vmem:[#allocation7 + $0x1b8] sm:$0xff]
        %v1722 = vld [vmem:[#allocation7 + $0x1c0] sm:$0xff]
        %v1723 = vld [vmem:[#allocation7 + $0x1c8] sm:$0xff]
        %v1724 = vld [vmem:[#allocation7 + $0x1d0] sm:$0xff]
        %v1725 = vld [vmem:[#allocation7 + $0x1d8] sm:$0xff]
        %v1726 = vld [vmem:[#allocation7 + $0x1e0] sm:$0xff]
        %v1727 = vld [vmem:[#allocation7 + $0x1e8] sm:$0xff]
        %v1728 = vld [vmem:[#allocation7 + $0x1f0] sm:$0xff]
        %v1729 = vld [vmem:[#allocation7 + $0x1f8] sm:$0xff]
        %1730 = vmatprep.subr.mxu0 %v1697
        %1731 = vmatpush1.msra.mxu0 %v1696
        %1732 = vmatprep.subr.mxu0 %v1695
        %1733 = vmatpush1.msra.mxu0 %v1694
        %1734 = vmatprep.subr.mxu0 %v1693
        %1735 = vmatpush1.msra.mxu0 %v1692
        %1736 = vmatprep.subr.mxu0 %v1691
        %1737 = vmatpush1.msra.mxu0 %v1690
        %1738 = vmatprep.subr.mxu0 %v1689
        %1739 = vmatpush1.msra.mxu0 %v1688
        %1740 = vmatprep.subr.mxu0 %v1687
        %1741 = vmatpush1.msra.mxu0 %v1686
        %1742 = vmatprep.subr.mxu0 %v1685
        %1743 = vmatpush1.msra.mxu0 %v1684
        %1744 = vmatprep.subr.mxu0 %v1683
        %1745 = vmatpush1.msra.mxu0 %v1682
        %1746 = vmatprep.subr.mxu0 %v1681
        %1747 = vmatpush1.msra.mxu0 %v1680
        %1748 = vmatprep.subr.mxu0 %v1679
        %1749 = vmatpush1.msra.mxu0 %v1678
        %1750 = vmatprep.subr.mxu0 %v1677
        %1751 = vmatpush1.msra.mxu0 %v1676
        %1752 = vmatprep.subr.mxu0 %v1675
        %1753 = vmatpush1.msra.mxu0 %v1674
        %1754 = vmatprep.subr.mxu0 %v1673
        %1755 = vmatpush1.msra.mxu0 %v1672
        %1756 = vmatprep.subr.mxu0 %v1671
        %1757 = vmatpush1.msra.mxu0 %v1670
        %1758 = vmatprep.subr.mxu0 %v1669
        %1759 = vmatpush1.msra.mxu0 %v1668
        %1760 = vmatprep.subr.mxu0 %v1667
        %1761 = vmatpush1.msra.mxu0 %v1666
        %1762 = vmatprep.subr.mxu0 %v1729
        %1763 = vmatpush2.msra.mxu0 %v1728
        %1764 = vmatprep.subr.mxu0 %v1727
        %1765 = vmatpush2.msra.mxu0 %v1726
        %1766 = vmatprep.subr.mxu0 %v1725
        %1767 = vmatpush2.msra.mxu0 %v1724
        %1768 = vmatprep.subr.mxu0 %v1723
        %1769 = vmatpush2.msra.mxu0 %v1722
        %1770 = vmatprep.subr.mxu0 %v1721
        %1771 = vmatpush2.msra.mxu0 %v1720
        %1772 = vmatprep.subr.mxu0 %v1719
        %1773 = vmatpush2.msra.mxu0 %v1718
        %1774 = vmatprep.subr.mxu0 %v1717
        %1775 = vmatpush2.msra.mxu0 %v1716
        %1776 = vmatprep.subr.mxu0 %v1715
        %1777 = vmatpush2.msra.mxu0 %v1714
        %1778 = vmatprep.subr.mxu0 %v1713
        %1779 = vmatpush2.msra.mxu0 %v1712
        %1780 = vmatprep.subr.mxu0 %v1711
        %1781 = vmatpush2.msra.mxu0 %v1710
        %1782 = vmatprep.subr.mxu0 %v1709
        %1783 = vmatpush2.msra.mxu0 %v1708
        %1784 = vmatprep.subr.mxu0 %v1707
        %1785 = vmatpush2.msra.mxu0 %v1706
        %1786 = vmatprep.subr.mxu0 %v1705
        %1787 = vmatpush2.msra.mxu0 %v1704
        %1788 = vmatprep.subr.mxu0 %v1703
        %1789 = vmatpush2.msra.mxu0 %v1702
        %1790 = vmatprep.subr.mxu0 %v1701
        %1791 = vmatpush2.msra.mxu0 %v1700
        %1792 = vmatprep.subr.mxu0 %v1699
        %1793 = vmatpush2.msra.mxu0 %v1698
        %1794 = vmatprep.mubr.f32.mxu0 %v1665
        %1795 = vmatmul.mubr.f32.gmra.mxu0 %v1664
        %v1796 = vpop.f32.mrf.mxu0
        %v1797 = vadd.f32 0.0, %v1796
        %v1798 = vpop.f32.mrf.mxu0
        %v1799 = vadd.f32 0.0, %v1798
        %1800 = vdwg.mxu0
        %s1801 = scalar_lea.vmem [#allocation9], 128
        %v1802 = vld [vmem:[%s1801] sm:$0xff]
        %v1803 = vld [vmem:[%s1801 + $0x8] sm:$0xff]
        %v1804 = vmul.f32 %v446, %v1802
        %v1805 = vmul.f32 %v447, %v1803
        %v1806 = vadd.f32 %v1804, %v1797
        %v1807 = vadd.f32 %v1805, %v1799
        %1808 = vst [vmem:[%s445] sm:$0xff] %v1806
        %1809 = vst [vmem:[%s445 + $0x8] sm:$0xff] %v1807
        %p1810 = scmp.lt.s32.totalorder %s25, 1
        %s1811 = scalar_select %p1810, %s25, 1
        %s1812 = smul.addr %s1811, 2
        %s1813 = smul.addr %s1812, 8
        %s1814 = scalar_lea.vmem %s9, %s1813
        %p1815 = scmp.lt.s32.totalorder %s25, 1
        %s1816 = scalar_select %p1815, %s25, 1
        %s1817 = smul.addr %s1816, 2
        %s1818 = smul.addr %s1817, 8
        %s1819 = scalar_lea.vmem %s10, %s1818
        // Predicated region
        $region77: #{mobile_mamba_forward.2} parent=55 // pred_check
          %p1820 = pneg %p237
        $region78: #{mobile_mamba_forward.2} parent=55 // pred_check_branch
          %1822 = sbr.rel (%p1820) target = $region80
        $region79: #{mobile_mamba_forward.2} parent=55 // pred_region
          _
        $region80: #{mobile_mamba_forward.2} parent=55 // pred_fallthru
          _
        // Predicated region
        $region81: #{mobile_mamba_forward.2} parent=55 // pred_check
          %p1823 = pneg %p263
        $region82: #{mobile_mamba_forward.2} parent=55 // pred_check_branch
          %1825 = sbr.rel (%p1823) target = $region84
        $region83: #{mobile_mamba_forward.2} parent=55 // pred_region
          _
        $region84: #{mobile_mamba_forward.2} parent=55 // pred_fallthru
          _
      $region56: #{mobile_mamba_forward.2} parent=5 // pred_fallthru
        _
      %p1826 = scmp.le.s32.totalorder 2, %s20
      // Predicated region
      $region85: #{mobile_mamba_forward.2} parent=5 // pred_check
        %p1827 = pneg %p1826
      $region86: #{mobile_mamba_forward.2} parent=5 // pred_check_branch
        %1829 = sbr.rel (%p1827) target = $region88
      $region87: #{mobile_mamba_forward.2} parent=5 // pred_region
        %s1830 = ssub.s32 %s20, 2
        // Predicated region
        $region89: #{mobile_mamba_forward.2} parent=87 // pred_check
          %p1831 = pneg %p243
        $region90: #{mobile_mamba_forward.2} parent=87 // pred_check_branch
          %1833 = sbr.rel (%p1831) target = $region92
        $region91: #{mobile_mamba_forward.2} parent=87 // pred_region
          %p1834 = scmp.lt.s32.totalorder %s26, 1
          %s1835 = scalar_select %p1834, %s26, 1
          %s1836 = smul.addr %s1835, 2
          %s1837 = smul.addr %s1836, 8
          %s1838 = scalar_lea.vmem %s9, %s1837
        $region92: #{mobile_mamba_forward.2} parent=87 // pred_fallthru
          _
        // Predicated region
        $region93: #{mobile_mamba_forward.2} parent=87 // pred_check
          %p1839 = pneg %p269
        $region94: #{mobile_mamba_forward.2} parent=87 // pred_check_branch
          %1841 = sbr.rel (%p1839) target = $region96
        $region95: #{mobile_mamba_forward.2} parent=87 // pred_region
          %p1842 = scmp.lt.s32.totalorder %s26, 1
          %s1843 = scalar_select %p1842, %s26, 1
          %s1844 = smul.addr %s1843, 2
          %s1845 = smul.addr %s1844, 8
          %s1846 = scalar_lea.vmem %s10, %s1845
        $region96: #{mobile_mamba_forward.2} parent=87 // pred_fallthru
          _
      $region88: #{mobile_mamba_forward.2} parent=5 // pred_fallthru
        _
    $region6: #{mobile_mamba_forward.2} parent=1 // loop_footer
      %s24 = sadd.s32 1, %s20
    $region7: #{mobile_mamba_forward.2} parent=1 // loop_footer_branch
      %19 = sbr.rel target = $region3
    $region8: #{mobile_mamba_forward.2} parent=1 // loop_exit
      _
    %1847 = vsyncpa [#allocation3], 1
    %s1848 = scalar_lea.sflag [#allocation3], 1
    %1849 = vsyncpa %s1848, 1
    %1850 = vsyncpa [#allocation5], 1
    %1851 = vsyncpa [#allocation8], 1

// kernel: mobile_mamba_forward.3
$region0: #{mobile_mamba_forward.3}
  #allocation0 [shape = 'u32[]', space=smem, size = 0x4, offset = 0x4, fixed_abs, tag = 'smem constant byte address 0x4 - core index']
  #allocation1 [shape = 'u32[144,128]{1,0:T(1,128)}', space=vmem, size = 0x12000, scoped, tag = 'internal scratch']
  %s0 = inlined_call_operand.vmem [shape: f32[16,256], index: 0, kind: input, shape index: {}]
  %s1 = inlined_call_operand.vmem [shape: f32[16,256], index: 1, kind: input, shape index: {}]
  %s2 = inlined_call_operand.vmem [shape: f32[16,256], index: 2, kind: input, shape index: {}]
  %s3 = inlined_call_operand.vmem [shape: bf16[256,768], index: 3, kind: input, shape index: {}]
  %s4 = inlined_call_operand.vmem [shape: f32[1,768], index: 4, kind: input, shape index: {}]
  %s5 = inlined_call_operand.vmem [shape: bf16[256,768], index: 5, kind: input, shape index: {}]
  %s6 = inlined_call_operand.vmem [shape: f32[1,768], index: 6, kind: input, shape index: {}]
  %s7 = inlined_call_operand.vmem [shape: bf16[256,256], index: 7, kind: input, shape index: {}]
  %s8 = inlined_call_operand.vmem [shape: f32[1,256], index: 8, kind: input, shape index: {}]
  %s9 = inlined_call_operand.vmem [shape: bf16[256,256], index: 9, kind: input, shape index: {}]
  %s10 = inlined_call_operand.vmem [shape: f32[1,256], index: 10, kind: input, shape index: {}]
  %s11 = inlined_call_operand.vmem [shape: f32[256,8], index: 11, kind: input, shape index: {}]
  %s12 = inlined_call_operand.vmem [shape: f32[8,256], index: 12, kind: input, shape index: {}]
  %s13 = inlined_call_operand.vmem [shape: bf16[16,16], index: 13, kind: input, shape index: {}]
  %s14 = inlined_call_operand.vmem [shape: bf16[16,16], index: 14, kind: input, shape index: {}]
  %s15 = inlined_call_operand.vmem [shape: f32[16,1], index: 15, kind: input, shape index: {}]
  %s16 = inlined_call_operand.vmem [shape: f32[16,256], index: 16, kind: output, shape index: {}]
  %s17 = sld [smem:[#allocation0]]
  $region74: #{mobile_mamba_forward.3} parent=0
    _
  %s19 = ssub.s32 1, %s17
  %s20 = scalar_select 0, %s19, %s17
  // Predicated region
  $region2: #{mobile_mamba_forward.3} parent=0 // pred_check
    _
  $region3: #{mobile_mamba_forward.3} parent=0 // pred_check_branch
    %22 = sbr.rel (0) target = $region5
  $region4: #{mobile_mamba_forward.3} parent=0 // pred_region
    _
  $region5: #{mobile_mamba_forward.3} parent=0 // pred_fallthru
    _
  // Predicated region
  $region6: #{mobile_mamba_forward.3} parent=0 // pred_check
    _
  $region7: #{mobile_mamba_forward.3} parent=0 // pred_check_branch
    %24 = sbr.rel (0) target = $region9
  $region8: #{mobile_mamba_forward.3} parent=0 // pred_region
    _
  $region9: #{mobile_mamba_forward.3} parent=0 // pred_fallthru
    _
  // Predicated region
  $region10: #{mobile_mamba_forward.3} parent=0 // pred_check
    _
  $region11: #{mobile_mamba_forward.3} parent=0 // pred_check_branch
    %26 = sbr.rel (0) target = $region13
  $region12: #{mobile_mamba_forward.3} parent=0 // pred_region
    _
  $region13: #{mobile_mamba_forward.3} parent=0 // pred_fallthru
    _
  // Predicated region
  $region14: #{mobile_mamba_forward.3} parent=0 // pred_check
    _
  $region15: #{mobile_mamba_forward.3} parent=0 // pred_check_branch
    %28 = sbr.rel (0) target = $region17
  $region16: #{mobile_mamba_forward.3} parent=0 // pred_region
    _
  $region17: #{mobile_mamba_forward.3} parent=0 // pred_fallthru
    _
  // Predicated region
  $region18: #{mobile_mamba_forward.3} parent=0 // pred_check
    _
  $region19: #{mobile_mamba_forward.3} parent=0 // pred_check_branch
    %30 = sbr.rel (0) target = $region21
  $region20: #{mobile_mamba_forward.3} parent=0 // pred_region
    _
  $region21: #{mobile_mamba_forward.3} parent=0 // pred_fallthru
    _
  // Predicated region
  $region22: #{mobile_mamba_forward.3} parent=0 // pred_check
    _
  $region23: #{mobile_mamba_forward.3} parent=0 // pred_check_branch
    %32 = sbr.rel (0) target = $region25
  $region24: #{mobile_mamba_forward.3} parent=0 // pred_region
    _
  $region25: #{mobile_mamba_forward.3} parent=0 // pred_fallthru
    _
  // Predicated region
  $region26: #{mobile_mamba_forward.3} parent=0 // pred_check
    _
  $region27: #{mobile_mamba_forward.3} parent=0 // pred_check_branch
    %34 = sbr.rel (0) target = $region29
  $region28: #{mobile_mamba_forward.3} parent=0 // pred_region
    _
  $region29: #{mobile_mamba_forward.3} parent=0 // pred_fallthru
    _
  // Predicated region
  $region30: #{mobile_mamba_forward.3} parent=0 // pred_check
    _
  $region31: #{mobile_mamba_forward.3} parent=0 // pred_check_branch
    %36 = sbr.rel (0) target = $region33
  $region32: #{mobile_mamba_forward.3} parent=0 // pred_region
    _
  $region33: #{mobile_mamba_forward.3} parent=0 // pred_fallthru
    _
  // Predicated region
  $region34: #{mobile_mamba_forward.3} parent=0 // pred_check
    _
  $region35: #{mobile_mamba_forward.3} parent=0 // pred_check_branch
    %38 = sbr.rel (0) target = $region37
  $region36: #{mobile_mamba_forward.3} parent=0 // pred_region
    _
  $region37: #{mobile_mamba_forward.3} parent=0 // pred_fallthru
    _
  // Predicated region
  $region38: #{mobile_mamba_forward.3} parent=0 // pred_check
    _
  $region39: #{mobile_mamba_forward.3} parent=0 // pred_check_branch
    %40 = sbr.rel (0) target = $region41
  $region40: #{mobile_mamba_forward.3} parent=0 // pred_region
    _
  $region41: #{mobile_mamba_forward.3} parent=0 // pred_fallthru
    _
  // Predicated region
  $region42: #{mobile_mamba_forward.3} parent=0 // pred_check
    _
  $region43: #{mobile_mamba_forward.3} parent=0 // pred_check_branch
    %42 = sbr.rel (0) target = $region45
  $region44: #{mobile_mamba_forward.3} parent=0 // pred_region
    _
  $region45: #{mobile_mamba_forward.3} parent=0 // pred_fallthru
    _
  // Predicated region
  $region46: #{mobile_mamba_forward.3} parent=0 // pred_check
    _
  $region47: #{mobile_mamba_forward.3} parent=0 // pred_check_branch
    %44 = sbr.rel (0) target = $region49
  $region48: #{mobile_mamba_forward.3} parent=0 // pred_region
    _
  $region49: #{mobile_mamba_forward.3} parent=0 // pred_fallthru
    _
  // Predicated region
  $region50: #{mobile_mamba_forward.3} parent=0 // pred_check
    _
  $region51: #{mobile_mamba_forward.3} parent=0 // pred_check_branch
    %46 = sbr.rel (0) target = $region53
  $region52: #{mobile_mamba_forward.3} parent=0 // pred_region
    _
  $region53: #{mobile_mamba_forward.3} parent=0 // pred_fallthru
    _
  // Predicated region
  $region54: #{mobile_mamba_forward.3} parent=0 // pred_check
    _
  $region55: #{mobile_mamba_forward.3} parent=0 // pred_check_branch
    %48 = sbr.rel (0) target = $region57
  $region56: #{mobile_mamba_forward.3} parent=0 // pred_region
    _
  $region57: #{mobile_mamba_forward.3} parent=0 // pred_fallthru
    _
  // Predicated region
  $region58: #{mobile_mamba_forward.3} parent=0 // pred_check
    _
  $region59: #{mobile_mamba_forward.3} parent=0 // pred_check_branch
    %50 = sbr.rel (0) target = $region61
  $region60: #{mobile_mamba_forward.3} parent=0 // pred_region
    _
  $region61: #{mobile_mamba_forward.3} parent=0 // pred_fallthru
    _
  // Predicated region
  $region62: #{mobile_mamba_forward.3} parent=0 // pred_check
    _
  $region63: #{mobile_mamba_forward.3} parent=0 // pred_check_branch
    %52 = sbr.rel (0) target = $region65
  $region64: #{mobile_mamba_forward.3} parent=0 // pred_region
    _
  $region65: #{mobile_mamba_forward.3} parent=0 // pred_fallthru
    _
  %v54 = vld [vmem:[%s0] sm:$0xff]
  %v55 = vld [vmem:[%s0 + $0x8] sm:$0xff]
  %v56 = vld [vmem:[%s0 + $0x10] sm:$0xff]
  %v57 = vld [vmem:[%s0 + $0x18] sm:$0xff]
  %v58 = vld [vmem:[%s1] sm:$0xff]
  %v59 = vld [vmem:[%s1 + $0x8] sm:$0xff]
  %v60 = vld [vmem:[%s1 + $0x10] sm:$0xff]
  %v61 = vld [vmem:[%s1 + $0x18] sm:$0xff]
  %v62 = vpack.c.bf16 %v56, %v54
  %v63 = vpack.c.bf16 %v57, %v55
  %v64 = vpack.c.bf16 %v60, %v58
  %v65 = vpack.c.bf16 %v61, %v59
  %v66 = vld [vmem:[%s3] sm:$0xff]
  %v67 = vld [vmem:[%s3 + $0x8] sm:$0xff]
  %v68 = vld [vmem:[%s3 + $0x10] sm:$0xff]
  %v69 = vld [vmem:[%s3 + $0x18] sm:$0xff]
  %v70 = vld [vmem:[%s3 + $0x20] sm:$0xff]
  %v71 = vld [vmem:[%s3 + $0x28] sm:$0xff]
  %v72 = vld [vmem:[%s3 + $0x30] sm:$0xff]
  %v73 = vld [vmem:[%s3 + $0x38] sm:$0xff]
  %v74 = vld [vmem:[%s3 + $0x40] sm:$0xff]
  %v75 = vld [vmem:[%s3 + $0x48] sm:$0xff]
  %v76 = vld [vmem:[%s3 + $0x50] sm:$0xff]
  %v77 = vld [vmem:[%s3 + $0x58] sm:$0xff]
  %v78 = vld [vmem:[%s3 + $0x60] sm:$0xff]
  %v79 = vld [vmem:[%s3 + $0x68] sm:$0xff]
  %v80 = vld [vmem:[%s3 + $0x70] sm:$0xff]
  %v81 = vld [vmem:[%s3 + $0x78] sm:$0xff]
  %v82 = vld [vmem:[%s3 + $0x80] sm:$0xff]
  %v83 = vld [vmem:[%s3 + $0x88] sm:$0xff]
  %v84 = vld [vmem:[%s3 + $0x90] sm:$0xff]
  %v85 = vld [vmem:[%s3 + $0x98] sm:$0xff]
  %v86 = vld [vmem:[%s3 + $0xa0] sm:$0xff]
  %v87 = vld [vmem:[%s3 + $0xa8] sm:$0xff]
  %v88 = vld [vmem:[%s3 + $0xb0] sm:$0xff]
  %v89 = vld [vmem:[%s3 + $0xb8] sm:$0xff]
  %v90 = vld [vmem:[%s3 + $0xc0] sm:$0xff]
  %v91 = vld [vmem:[%s3 + $0xc8] sm:$0xff]
  %v92 = vld [vmem:[%s3 + $0xd0] sm:$0xff]
  %v93 = vld [vmem:[%s3 + $0xd8] sm:$0xff]
  %v94 = vld [vmem:[%s3 + $0xe0] sm:$0xff]
  %v95 = vld [vmem:[%s3 + $0xe8] sm:$0xff]
  %v96 = vld [vmem:[%s3 + $0xf0] sm:$0xff]
  %v97 = vld [vmem:[%s3 + $0xf8] sm:$0xff]
  %v98 = vld [vmem:[%s3 + $0x100] sm:$0xff]
  %v99 = vld [vmem:[%s3 + $0x108] sm:$0xff]
  %v100 = vld [vmem:[%s3 + $0x110] sm:$0xff]
  %v101 = vld [vmem:[%s3 + $0x118] sm:$0xff]
  %v102 = vld [vmem:[%s3 + $0x120] sm:$0xff]
  %v103 = vld [vmem:[%s3 + $0x128] sm:$0xff]
  %v104 = vld [vmem:[%s3 + $0x130] sm:$0xff]
  %v105 = vld [vmem:[%s3 + $0x138] sm:$0xff]
  %v106 = vld [vmem:[%s3 + $0x140] sm:$0xff]
  %v107 = vld [vmem:[%s3 + $0x148] sm:$0xff]
  %v108 = vld [vmem:[%s3 + $0x150] sm:$0xff]
  %v109 = vld [vmem:[%s3 + $0x158] sm:$0xff]
  %v110 = vld [vmem:[%s3 + $0x160] sm:$0xff]
  %v111 = vld [vmem:[%s3 + $0x168] sm:$0xff]
  %v112 = vld [vmem:[%s3 + $0x170] sm:$0xff]
  %v113 = vld [vmem:[%s3 + $0x178] sm:$0xff]
  %v114 = vld [vmem:[%s3 + $0x180] sm:$0xff]
  %v115 = vld [vmem:[%s3 + $0x188] sm:$0xff]
  %v116 = vld [vmem:[%s3 + $0x190] sm:$0xff]
  %v117 = vld [vmem:[%s3 + $0x198] sm:$0xff]
  %v118 = vld [vmem:[%s3 + $0x1a0] sm:$0xff]
  %v119 = vld [vmem:[%s3 + $0x1a8] sm:$0xff]
  %v120 = vld [vmem:[%s3 + $0x1b0] sm:$0xff]
  %v121 = vld [vmem:[%s3 + $0x1b8] sm:$0xff]
  %v122 = vld [vmem:[%s3 + $0x1c0] sm:$0xff]
  %v123 = vld [vmem:[%s3 + $0x1c8] sm:$0xff]
  %v124 = vld [vmem:[%s3 + $0x1d0] sm:$0xff]
  %v125 = vld [vmem:[%s3 + $0x1d8] sm:$0xff]
  %v126 = vld [vmem:[%s3 + $0x1e0] sm:$0xff]
  %v127 = vld [vmem:[%s3 + $0x1e8] sm:$0xff]
  %v128 = vld [vmem:[%s3 + $0x1f0] sm:$0xff]
  %v129 = vld [vmem:[%s3 + $0x1f8] sm:$0xff]
  %v130 = vld [vmem:[%s3 + $0x200] sm:$0xff]
  %v131 = vld [vmem:[%s3 + $0x208] sm:$0xff]
  %v132 = vld [vmem:[%s3 + $0x210] sm:$0xff]
  %v133 = vld [vmem:[%s3 + $0x218] sm:$0xff]
  %v134 = vld [vmem:[%s3 + $0x220] sm:$0xff]
  %v135 = vld [vmem:[%s3 + $0x228] sm:$0xff]
  %v136 = vld [vmem:[%s3 + $0x230] sm:$0xff]
  %v137 = vld [vmem:[%s3 + $0x238] sm:$0xff]
  %v138 = vld [vmem:[%s3 + $0x240] sm:$0xff]
  %v139 = vld [vmem:[%s3 + $0x248] sm:$0xff]
  %v140 = vld [vmem:[%s3 + $0x250] sm:$0xff]
  %v141 = vld [vmem:[%s3 + $0x258] sm:$0xff]
  %v142 = vld [vmem:[%s3 + $0x260] sm:$0xff]
  %v143 = vld [vmem:[%s3 + $0x268] sm:$0xff]
  %v144 = vld [vmem:[%s3 + $0x270] sm:$0xff]
  %v145 = vld [vmem:[%s3 + $0x278] sm:$0xff]
  %v146 = vld [vmem:[%s3 + $0x280] sm:$0xff]
  %v147 = vld [vmem:[%s3 + $0x288] sm:$0xff]
  %v148 = vld [vmem:[%s3 + $0x290] sm:$0xff]
  %v149 = vld [vmem:[%s3 + $0x298] sm:$0xff]
  %v150 = vld [vmem:[%s3 + $0x2a0] sm:$0xff]
  %v151 = vld [vmem:[%s3 + $0x2a8] sm:$0xff]
  %v152 = vld [vmem:[%s3 + $0x2b0] sm:$0xff]
  %v153 = vld [vmem:[%s3 + $0x2b8] sm:$0xff]
  %v154 = vld [vmem:[%s3 + $0x2c0] sm:$0xff]
  %v155 = vld [vmem:[%s3 + $0x2c8] sm:$0xff]
  %v156 = vld [vmem:[%s3 + $0x2d0] sm:$0xff]
  %v157 = vld [vmem:[%s3 + $0x2d8] sm:$0xff]
  %v158 = vld [vmem:[%s3 + $0x2e0] sm:$0xff]
  %v159 = vld [vmem:[%s3 + $0x2e8] sm:$0xff]
  %v160 = vld [vmem:[%s3 + $0x2f0] sm:$0xff]
  %v161 = vld [vmem:[%s3 + $0x2f8] sm:$0xff]
  %v162 = vld [vmem:[%s4] sm:$0x3f]
  %v164 = vlaneseq
  %v165 = vshrl.u32 %v164, 7
  %v166 = vsub.s32 0, %v165
  %v167 = vrot.slane %v162, %v166
  %v168 = vlaneseq
  %v169 = vshrl.u32 %v168, 7
  %v170 = vsub.s32 1, %v169
  %v171 = vrot.slane %v162, %v170
  %v172 = vlaneseq
  %v173 = vshrl.u32 %v172, 7
  %v174 = vsub.s32 2, %v173
  %v175 = vrot.slane %v162, %v174
  %v176 = vlaneseq
  %v177 = vshrl.u32 %v176, 7
  %v178 = vsub.s32 3, %v177
  %v179 = vrot.slane %v162, %v178
  %v180 = vlaneseq
  %v181 = vshrl.u32 %v180, 7
  %v182 = vsub.s32 4, %v181
  %v183 = vrot.slane %v162, %v182
  %v184 = vlaneseq
  %v185 = vshrl.u32 %v184, 7
  %v186 = vsub.s32 5, %v185
  %v187 = vrot.slane %v162, %v186
  %v290 = vunpack.c.l.b16 %v66
  %v291 = vunpack.c.h.b16 %v66
  %v292 = vunpack.c.l.b16 %v67
  %v293 = vunpack.c.h.b16 %v67
  %v294 = vunpack.c.l.b16 %v68
  %v295 = vunpack.c.h.b16 %v68
  %v296 = vunpack.c.l.b16 %v69
  %v297 = vunpack.c.h.b16 %v69
  %v298 = vunpack.c.l.b16 %v70
  %v299 = vunpack.c.h.b16 %v70
  %v300 = vunpack.c.l.b16 %v71
  %v301 = vunpack.c.h.b16 %v71
  %v302 = vunpack.c.l.b16 %v72
  %v303 = vunpack.c.h.b16 %v72
  %v304 = vunpack.c.l.b16 %v73
  %v305 = vunpack.c.h.b16 %v73
  %v306 = vunpack.c.l.b16 %v74
  %v307 = vunpack.c.h.b16 %v74
  %v308 = vunpack.c.l.b16 %v75
  %v309 = vunpack.c.h.b16 %v75
  %v310 = vunpack.c.l.b16 %v76
  %v311 = vunpack.c.h.b16 %v76
  %v312 = vunpack.c.l.b16 %v77
  %v313 = vunpack.c.h.b16 %v77
  %v314 = vunpack.c.l.b16 %v78
  %v315 = vunpack.c.h.b16 %v78
  %v316 = vunpack.c.l.b16 %v79
  %v317 = vunpack.c.h.b16 %v79
  %v318 = vunpack.c.l.b16 %v80
  %v319 = vunpack.c.h.b16 %v80
  %v320 = vunpack.c.l.b16 %v81
  %v321 = vunpack.c.h.b16 %v81
  %v322 = vunpack.c.l.b16 %v82
  %v323 = vunpack.c.h.b16 %v82
  %v324 = vunpack.c.l.b16 %v83
  %v325 = vunpack.c.h.b16 %v83
  %v326 = vunpack.c.l.b16 %v84
  %v327 = vunpack.c.h.b16 %v84
  %v328 = vunpack.c.l.b16 %v85
  %v329 = vunpack.c.h.b16 %v85
  %v330 = vunpack.c.l.b16 %v86
  %v331 = vunpack.c.h.b16 %v86
  %v332 = vunpack.c.l.b16 %v87
  %v333 = vunpack.c.h.b16 %v87
  %v334 = vunpack.c.l.b16 %v88
  %v335 = vunpack.c.h.b16 %v88
  %v336 = vunpack.c.l.b16 %v89
  %v337 = vunpack.c.h.b16 %v89
  %v338 = vunpack.c.l.b16 %v90
  %v339 = vunpack.c.h.b16 %v90
  %v340 = vunpack.c.l.b16 %v91
  %v341 = vunpack.c.h.b16 %v91
  %v342 = vunpack.c.l.b16 %v92
  %v343 = vunpack.c.h.b16 %v92
  %v344 = vunpack.c.l.b16 %v93
  %v345 = vunpack.c.h.b16 %v93
  %v346 = vunpack.c.l.b16 %v94
  %v347 = vunpack.c.h.b16 %v94
  %v348 = vunpack.c.l.b16 %v95
  %v349 = vunpack.c.h.b16 %v95
  %v350 = vunpack.c.l.b16 %v96
  %v351 = vunpack.c.h.b16 %v96
  %v352 = vunpack.c.l.b16 %v97
  %v353 = vunpack.c.h.b16 %v97
  %v354 = vunpack.c.l.b16 %v98
  %v355 = vunpack.c.h.b16 %v98
  %v356 = vunpack.c.l.b16 %v99
  %v357 = vunpack.c.h.b16 %v99
  %v358 = vunpack.c.l.b16 %v100
  %v359 = vunpack.c.h.b16 %v100
  %v360 = vunpack.c.l.b16 %v101
  %v361 = vunpack.c.h.b16 %v101
  %v362 = vunpack.c.l.b16 %v102
  %v363 = vunpack.c.h.b16 %v102
  %v364 = vunpack.c.l.b16 %v103
  %v365 = vunpack.c.h.b16 %v103
  %v366 = vunpack.c.l.b16 %v104
  %v367 = vunpack.c.h.b16 %v104
  %v368 = vunpack.c.l.b16 %v105
  %v369 = vunpack.c.h.b16 %v105
  %v370 = vunpack.c.l.b16 %v106
  %v371 = vunpack.c.h.b16 %v106
  %v372 = vunpack.c.l.b16 %v107
  %v373 = vunpack.c.h.b16 %v107
  %v374 = vunpack.c.l.b16 %v108
  %v375 = vunpack.c.h.b16 %v108
  %v376 = vunpack.c.l.b16 %v109
  %v377 = vunpack.c.h.b16 %v109
  %v378 = vunpack.c.l.b16 %v110
  %v379 = vunpack.c.h.b16 %v110
  %v380 = vunpack.c.l.b16 %v111
  %v381 = vunpack.c.h.b16 %v111
  %v382 = vunpack.c.l.b16 %v112
  %v383 = vunpack.c.h.b16 %v112
  %v384 = vunpack.c.l.b16 %v113
  %v385 = vunpack.c.h.b16 %v113
  %v386 = vunpack.c.l.b16 %v114
  %v387 = vunpack.c.h.b16 %v114
  %v388 = vunpack.c.l.b16 %v115
  %v389 = vunpack.c.h.b16 %v115
  %v390 = vunpack.c.l.b16 %v116
  %v391 = vunpack.c.h.b16 %v116
  %v392 = vunpack.c.l.b16 %v117
  %v393 = vunpack.c.h.b16 %v117
  %v394 = vunpack.c.l.b16 %v118
  %v395 = vunpack.c.h.b16 %v118
  %v396 = vunpack.c.l.b16 %v119
  %v397 = vunpack.c.h.b16 %v119
  %v398 = vunpack.c.l.b16 %v120
  %v399 = vunpack.c.h.b16 %v120
  %v400 = vunpack.c.l.b16 %v121
  %v401 = vunpack.c.h.b16 %v121
  %v402 = vunpack.c.l.b16 %v122
  %v403 = vunpack.c.h.b16 %v122
  %v404 = vunpack.c.l.b16 %v123
  %v405 = vunpack.c.h.b16 %v123
  %v406 = vunpack.c.l.b16 %v124
  %v407 = vunpack.c.h.b16 %v124
  %v408 = vunpack.c.l.b16 %v125
  %v409 = vunpack.c.h.b16 %v125
  %v410 = vunpack.c.l.b16 %v126
  %v411 = vunpack.c.h.b16 %v126
  %v412 = vunpack.c.l.b16 %v127
  %v413 = vunpack.c.h.b16 %v127
  %v414 = vunpack.c.l.b16 %v128
  %v415 = vunpack.c.h.b16 %v128
  %v416 = vunpack.c.l.b16 %v129
  %v417 = vunpack.c.h.b16 %v129
  %v418 = vunpack.c.l.b16 %v130
  %v419 = vunpack.c.h.b16 %v130
  %v420 = vunpack.c.l.b16 %v131
  %v421 = vunpack.c.h.b16 %v131
  %v422 = vunpack.c.l.b16 %v132
  %v423 = vunpack.c.h.b16 %v132
  %v424 = vunpack.c.l.b16 %v133
  %v425 = vunpack.c.h.b16 %v133
  %v426 = vunpack.c.l.b16 %v134
  %v427 = vunpack.c.h.b16 %v134
  %v428 = vunpack.c.l.b16 %v135
  %v429 = vunpack.c.h.b16 %v135
  %v430 = vunpack.c.l.b16 %v136
  %v431 = vunpack.c.h.b16 %v136
  %v432 = vunpack.c.l.b16 %v137
  %v433 = vunpack.c.h.b16 %v137
  %v434 = vunpack.c.l.b16 %v138
  %v435 = vunpack.c.h.b16 %v138
  %v436 = vunpack.c.l.b16 %v139
  %v437 = vunpack.c.h.b16 %v139
  %v438 = vunpack.c.l.b16 %v140
  %v439 = vunpack.c.h.b16 %v140
  %v440 = vunpack.c.l.b16 %v141
  %v441 = vunpack.c.h.b16 %v141
  %v442 = vunpack.c.l.b16 %v142
  %v443 = vunpack.c.h.b16 %v142
  %v444 = vunpack.c.l.b16 %v143
  %v445 = vunpack.c.h.b16 %v143
  %v446 = vunpack.c.l.b16 %v144
  %v447 = vunpack.c.h.b16 %v144
  %v448 = vunpack.c.l.b16 %v145
  %v449 = vunpack.c.h.b16 %v145
  %v450 = vunpack.c.l.b16 %v146
  %v451 = vunpack.c.h.b16 %v146
  %v452 = vunpack.c.l.b16 %v147
  %v453 = vunpack.c.h.b16 %v147
  %v454 = vunpack.c.l.b16 %v148
  %v455 = vunpack.c.h.b16 %v148
  %v456 = vunpack.c.l.b16 %v149
  %v457 = vunpack.c.h.b16 %v149
  %v458 = vunpack.c.l.b16 %v150
  %v459 = vunpack.c.h.b16 %v150
  %v460 = vunpack.c.l.b16 %v151
  %v461 = vunpack.c.h.b16 %v151
  %v462 = vunpack.c.l.b16 %v152
  %v463 = vunpack.c.h.b16 %v152
  %v464 = vunpack.c.l.b16 %v153
  %v465 = vunpack.c.h.b16 %v153
  %v466 = vunpack.c.l.b16 %v154
  %v467 = vunpack.c.h.b16 %v154
  %v468 = vunpack.c.l.b16 %v155
  %v469 = vunpack.c.h.b16 %v155
  %v470 = vunpack.c.l.b16 %v156
  %v471 = vunpack.c.h.b16 %v156
  %v472 = vunpack.c.l.b16 %v157
  %v473 = vunpack.c.h.b16 %v157
  %v474 = vunpack.c.l.b16 %v158
  %v475 = vunpack.c.h.b16 %v158
  %v476 = vunpack.c.l.b16 %v159
  %v477 = vunpack.c.h.b16 %v159
  %v478 = vunpack.c.l.b16 %v160
  %v479 = vunpack.c.h.b16 %v160
  %v480 = vunpack.c.l.b16 %v161
  %v481 = vunpack.c.h.b16 %v161
  %v482 = vpack.c.b16 %v296, %v290
  %v483 = vpack.c.b16 %v297, %v291
  %v484 = vpack.c.b16 %v298, %v292
  %v485 = vpack.c.b16 %v299, %v293
  %v486 = vpack.c.b16 %v300, %v294
  %v487 = vpack.c.b16 %v301, %v295
  %v488 = vpack.c.b16 %v308, %v302
  %v489 = vpack.c.b16 %v309, %v303
  %v490 = vpack.c.b16 %v310, %v304
  %v491 = vpack.c.b16 %v311, %v305
  %v492 = vpack.c.b16 %v312, %v306
  %v493 = vpack.c.b16 %v313, %v307
  %v494 = vpack.c.b16 %v320, %v314
  %v495 = vpack.c.b16 %v321, %v315
  %v496 = vpack.c.b16 %v322, %v316
  %v497 = vpack.c.b16 %v323, %v317
  %v498 = vpack.c.b16 %v324, %v318
  %v499 = vpack.c.b16 %v325, %v319
  %v500 = vpack.c.b16 %v332, %v326
  %v501 = vpack.c.b16 %v333, %v327
  %v502 = vpack.c.b16 %v334, %v328
  %v503 = vpack.c.b16 %v335, %v329
  %v504 = vpack.c.b16 %v336, %v330
  %v505 = vpack.c.b16 %v337, %v331
  %v506 = vpack.c.b16 %v344, %v338
  %v507 = vpack.c.b16 %v345, %v339
  %v508 = vpack.c.b16 %v346, %v340
  %v509 = vpack.c.b16 %v347, %v341
  %v510 = vpack.c.b16 %v348, %v342
  %v511 = vpack.c.b16 %v349, %v343
  %v512 = vpack.c.b16 %v356, %v350
  %v513 = vpack.c.b16 %v357, %v351
  %v514 = vpack.c.b16 %v358, %v352
  %v515 = vpack.c.b16 %v359, %v353
  %v516 = vpack.c.b16 %v360, %v354
  %v517 = vpack.c.b16 %v361, %v355
  %v518 = vpack.c.b16 %v368, %v362
  %v519 = vpack.c.b16 %v369, %v363
  %v520 = vpack.c.b16 %v370, %v364
  %v521 = vpack.c.b16 %v371, %v365
  %v522 = vpack.c.b16 %v372, %v366
  %v523 = vpack.c.b16 %v373, %v367
  %v524 = vpack.c.b16 %v380, %v374
  %v525 = vpack.c.b16 %v381, %v375
  %v526 = vpack.c.b16 %v382, %v376
  %v527 = vpack.c.b16 %v383, %v377
  %v528 = vpack.c.b16 %v384, %v378
  %v529 = vpack.c.b16 %v385, %v379
  %v530 = vpack.c.b16 %v392, %v386
  %v531 = vpack.c.b16 %v393, %v387
  %v532 = vpack.c.b16 %v394, %v388
  %v533 = vpack.c.b16 %v395, %v389
  %v534 = vpack.c.b16 %v396, %v390
  %v535 = vpack.c.b16 %v397, %v391
  %v536 = vpack.c.b16 %v404, %v398
  %v537 = vpack.c.b16 %v405, %v399
  %v538 = vpack.c.b16 %v406, %v400
  %v539 = vpack.c.b16 %v407, %v401
  %v540 = vpack.c.b16 %v408, %v402
  %v541 = vpack.c.b16 %v409, %v403
  %v542 = vpack.c.b16 %v416, %v410
  %v543 = vpack.c.b16 %v417, %v411
  %v544 = vpack.c.b16 %v418, %v412
  %v545 = vpack.c.b16 %v419, %v413
  %v546 = vpack.c.b16 %v420, %v414
  %v547 = vpack.c.b16 %v421, %v415
  %v548 = vpack.c.b16 %v428, %v422
  %v549 = vpack.c.b16 %v429, %v423
  %v550 = vpack.c.b16 %v430, %v424
  %v551 = vpack.c.b16 %v431, %v425
  %v552 = vpack.c.b16 %v432, %v426
  %v553 = vpack.c.b16 %v433, %v427
  %v554 = vpack.c.b16 %v440, %v434
  %v555 = vpack.c.b16 %v441, %v435
  %v556 = vpack.c.b16 %v442, %v436
  %v557 = vpack.c.b16 %v443, %v437
  %v558 = vpack.c.b16 %v444, %v438
  %v559 = vpack.c.b16 %v445, %v439
  %v560 = vpack.c.b16 %v452, %v446
  %v561 = vpack.c.b16 %v453, %v447
  %v562 = vpack.c.b16 %v454, %v448
  %v563 = vpack.c.b16 %v455, %v449
  %v564 = vpack.c.b16 %v456, %v450
  %v565 = vpack.c.b16 %v457, %v451
  %v566 = vpack.c.b16 %v464, %v458
  %v567 = vpack.c.b16 %v465, %v459
  %v568 = vpack.c.b16 %v466, %v460
  %v569 = vpack.c.b16 %v467, %v461
  %v570 = vpack.c.b16 %v468, %v462
  %v571 = vpack.c.b16 %v469, %v463
  %v572 = vpack.c.b16 %v476, %v470
  %v573 = vpack.c.b16 %v477, %v471
  %v574 = vpack.c.b16 %v478, %v472
  %v575 = vpack.c.b16 %v479, %v473
  %v576 = vpack.c.b16 %v480, %v474
  %v577 = vpack.c.b16 %v481, %v475
  %674 = vmatprep.subr.bf16.mxu0 %v525
  %675 = vmatpush1.bf16.msra.mxu0 %v524
  %676 = vmatprep.subr.bf16.mxu0 %v519
  %677 = vmatpush1.bf16.msra.mxu0 %v518
  %678 = vmatprep.subr.bf16.mxu0 %v513
  %679 = vmatpush1.bf16.msra.mxu0 %v512
  %680 = vmatprep.subr.bf16.mxu0 %v507
  %681 = vmatpush1.bf16.msra.mxu0 %v506
  %682 = vmatprep.subr.bf16.mxu0 %v501
  %683 = vmatpush1.bf16.msra.mxu0 %v500
  %684 = vmatprep.subr.bf16.mxu0 %v495
  %685 = vmatpush1.bf16.msra.mxu0 %v494
  %686 = vmatprep.subr.bf16.mxu0 %v489
  %687 = vmatpush1.bf16.msra.mxu0 %v488
  %688 = vmatprep.subr.bf16.mxu0 %v483
  %689 = vmatpush1.bf16.msra.mxu0 %v482
  %690 = vmatprep.subr.bf16.mxu0 %v573
  %691 = vmatpush2.bf16.msra.mxu0 %v572
  %692 = vmatprep.subr.bf16.mxu0 %v567
  %693 = vmatpush2.bf16.msra.mxu0 %v566
  %694 = vmatprep.subr.bf16.mxu0 %v561
  %695 = vmatpush2.bf16.msra.mxu0 %v560
  %696 = vmatprep.subr.bf16.mxu0 %v555
  %697 = vmatpush2.bf16.msra.mxu0 %v554
  %698 = vmatprep.subr.bf16.mxu0 %v549
  %699 = vmatpush2.bf16.msra.mxu0 %v548
  %700 = vmatprep.subr.bf16.mxu0 %v543
  %701 = vmatpush2.bf16.msra.mxu0 %v542
  %702 = vmatprep.subr.bf16.mxu0 %v537
  %703 = vmatpush2.bf16.msra.mxu0 %v536
  %704 = vmatprep.subr.bf16.mxu0 %v531
  %705 = vmatpush2.bf16.msra.mxu0 %v530
  %706 = vmatprep.mubr.bf16.mxu0 %v63
  %707 = vmatmul.mubr.bf16.gmra.mxu0 %v62
  %v708 = vpop.f32.mrf.mxu0
  %v709 = vadd.f32 %v167, %v708
  %v710 = vpop.f32.mrf.mxu0
  %v711 = vadd.f32 %v171, %v710
  %v712 = vpop.f32.mrf.mxu0
  %v713 = vadd.f32 %v167, %v712
  %v714 = vpop.f32.mrf.mxu0
  %v715 = vadd.f32 %v171, %v714
  %716 = vdwg.mxu0
  %717 = vmatprep.subr.bf16.mxu0 %v527
  %718 = vmatpush1.bf16.msra.mxu0 %v526
  %719 = vmatprep.subr.bf16.mxu0 %v521
  %720 = vmatpush1.bf16.msra.mxu0 %v520
  %721 = vmatprep.subr.bf16.mxu0 %v515
  %722 = vmatpush1.bf16.msra.mxu0 %v514
  %723 = vmatprep.subr.bf16.mxu0 %v509
  %724 = vmatpush1.bf16.msra.mxu0 %v508
  %725 = vmatprep.subr.bf16.mxu0 %v503
  %726 = vmatpush1.bf16.msra.mxu0 %v502
  %727 = vmatprep.subr.bf16.mxu0 %v497
  %728 = vmatpush1.bf16.msra.mxu0 %v496
  %729 = vmatprep.subr.bf16.mxu0 %v491
  %730 = vmatpush1.bf16.msra.mxu0 %v490
  %731 = vmatprep.subr.bf16.mxu0 %v485
  %732 = vmatpush1.bf16.msra.mxu0 %v484
  %733 = vmatprep.subr.bf16.mxu0 %v575
  %734 = vmatpush2.bf16.msra.mxu0 %v574
  %735 = vmatprep.subr.bf16.mxu0 %v569
  %736 = vmatpush2.bf16.msra.mxu0 %v568
  %737 = vmatprep.subr.bf16.mxu0 %v563
  %738 = vmatpush2.bf16.msra.mxu0 %v562
  %739 = vmatprep.subr.bf16.mxu0 %v557
  %740 = vmatpush2.bf16.msra.mxu0 %v556
  %741 = vmatprep.subr.bf16.mxu0 %v551
  %742 = vmatpush2.bf16.msra.mxu0 %v550
  %743 = vmatprep.subr.bf16.mxu0 %v545
  %744 = vmatpush2.bf16.msra.mxu0 %v544
  %745 = vmatprep.subr.bf16.mxu0 %v539
  %746 = vmatpush2.bf16.msra.mxu0 %v538
  %747 = vmatprep.subr.bf16.mxu0 %v533
  %748 = vmatpush2.bf16.msra.mxu0 %v532
  %749 = vmatprep.mubr.bf16.mxu0 %v63
  %750 = vmatmul.mubr.bf16.gmra.mxu0 %v62
  %v751 = vpop.f32.mrf.mxu0
  %v752 = vadd.f32 %v175, %v751
  %v753 = vpop.f32.mrf.mxu0
  %v754 = vadd.f32 %v179, %v753
  %v755 = vpop.f32.mrf.mxu0
  %v756 = vadd.f32 %v175, %v755
  %v757 = vpop.f32.mrf.mxu0
  %v758 = vadd.f32 %v179, %v757
  %759 = vdwg.mxu0
  %760 = vmatprep.subr.bf16.mxu0 %v529
  %761 = vmatpush1.bf16.msra.mxu0 %v528
  %762 = vmatprep.subr.bf16.mxu0 %v523
  %763 = vmatpush1.bf16.msra.mxu0 %v522
  %764 = vmatprep.subr.bf16.mxu0 %v517
  %765 = vmatpush1.bf16.msra.mxu0 %v516
  %766 = vmatprep.subr.bf16.mxu0 %v511
  %767 = vmatpush1.bf16.msra.mxu0 %v510
  %768 = vmatprep.subr.bf16.mxu0 %v505
  %769 = vmatpush1.bf16.msra.mxu0 %v504
  %770 = vmatprep.subr.bf16.mxu0 %v499
  %771 = vmatpush1.bf16.msra.mxu0 %v498
  %772 = vmatprep.subr.bf16.mxu0 %v493
  %773 = vmatpush1.bf16.msra.mxu0 %v492
  %774 = vmatprep.subr.bf16.mxu0 %v487
  %775 = vmatpush1.bf16.msra.mxu0 %v486
  %776 = vmatprep.subr.bf16.mxu0 %v577
  %777 = vmatpush2.bf16.msra.mxu0 %v576
  %778 = vmatprep.subr.bf16.mxu0 %v571
  %779 = vmatpush2.bf16.msra.mxu0 %v570
  %780 = vmatprep.subr.bf16.mxu0 %v565
  %781 = vmatpush2.bf16.msra.mxu0 %v564
  %782 = vmatprep.subr.bf16.mxu0 %v559
  %783 = vmatpush2.bf16.msra.mxu0 %v558
  %784 = vmatprep.subr.bf16.mxu0 %v553
  %785 = vmatpush2.bf16.msra.mxu0 %v552
  %786 = vmatprep.subr.bf16.mxu0 %v547
  %787 = vmatpush2.bf16.msra.mxu0 %v546
  %788 = vmatprep.subr.bf16.mxu0 %v541
  %789 = vmatpush2.bf16.msra.mxu0 %v540
  %790 = vmatprep.subr.bf16.mxu0 %v535
  %791 = vmatpush2.bf16.msra.mxu0 %v534
  %792 = vmatprep.mubr.bf16.mxu0 %v63
  %793 = vmatmul.mubr.bf16.gmra.mxu0 %v62
  %v794 = vpop.f32.mrf.mxu0
  %v795 = vadd.f32 %v183, %v794
  %v796 = vpop.f32.mrf.mxu0
  %v797 = vadd.f32 %v187, %v796
  %v798 = vpop.f32.mrf.mxu0
  %v799 = vadd.f32 %v183, %v798
  %v800 = vpop.f32.mrf.mxu0
  %v801 = vadd.f32 %v187, %v800
  %802 = vdwg.mxu0
  %v803 = vld [vmem:[%s5] sm:$0xff]
  %v804 = vld [vmem:[%s5 + $0x8] sm:$0xff]
  %v805 = vld [vmem:[%s5 + $0x10] sm:$0xff]
  %v806 = vld [vmem:[%s5 + $0x18] sm:$0xff]
  %v807 = vld [vmem:[%s5 + $0x20] sm:$0xff]
  %v808 = vld [vmem:[%s5 + $0x28] sm:$0xff]
  %v809 = vld [vmem:[%s5 + $0x30] sm:$0xff]
  %v810 = vld [vmem:[%s5 + $0x38] sm:$0xff]
  %v811 = vld [vmem:[%s5 + $0x40] sm:$0xff]
  %v812 = vld [vmem:[%s5 + $0x48] sm:$0xff]
  %v813 = vld [vmem:[%s5 + $0x50] sm:$0xff]
  %v814 = vld [vmem:[%s5 + $0x58] sm:$0xff]
  %v815 = vld [vmem:[%s5 + $0x60] sm:$0xff]
  %v816 = vld [vmem:[%s5 + $0x68] sm:$0xff]
  %v817 = vld [vmem:[%s5 + $0x70] sm:$0xff]
  %v818 = vld [vmem:[%s5 + $0x78] sm:$0xff]
  %v819 = vld [vmem:[%s5 + $0x80] sm:$0xff]
  %v820 = vld [vmem:[%s5 + $0x88] sm:$0xff]
  %v821 = vld [vmem:[%s5 + $0x90] sm:$0xff]
  %v822 = vld [vmem:[%s5 + $0x98] sm:$0xff]
  %v823 = vld [vmem:[%s5 + $0xa0] sm:$0xff]
  %v824 = vld [vmem:[%s5 + $0xa8] sm:$0xff]
  %v825 = vld [vmem:[%s5 + $0xb0] sm:$0xff]
  %v826 = vld [vmem:[%s5 + $0xb8] sm:$0xff]
  %v827 = vld [vmem:[%s5 + $0xc0] sm:$0xff]
  %v828 = vld [vmem:[%s5 + $0xc8] sm:$0xff]
  %v829 = vld [vmem:[%s5 + $0xd0] sm:$0xff]
  %v830 = vld [vmem:[%s5 + $0xd8] sm:$0xff]
  %v831 = vld [vmem:[%s5 + $0xe0] sm:$0xff]
  %v832 = vld [vmem:[%s5 + $0xe8] sm:$0xff]
  %v833 = vld [vmem:[%s5 + $0xf0] sm:$0xff]
  %v834 = vld [vmem:[%s5 + $0xf8] sm:$0xff]
  %v835 = vld [vmem:[%s5 + $0x100] sm:$0xff]
  %v836 = vld [vmem:[%s5 + $0x108] sm:$0xff]
  %v837 = vld [vmem:[%s5 + $0x110] sm:$0xff]
  %v838 = vld [vmem:[%s5 + $0x118] sm:$0xff]
  %v839 = vld [vmem:[%s5 + $0x120] sm:$0xff]
  %v840 = vld [vmem:[%s5 + $0x128] sm:$0xff]
  %v841 = vld [vmem:[%s5 + $0x130] sm:$0xff]
  %v842 = vld [vmem:[%s5 + $0x138] sm:$0xff]
  %v843 = vld [vmem:[%s5 + $0x140] sm:$0xff]
  %v844 = vld [vmem:[%s5 + $0x148] sm:$0xff]
  %v845 = vld [vmem:[%s5 + $0x150] sm:$0xff]
  %v846 = vld [vmem:[%s5 + $0x158] sm:$0xff]
  %v847 = vld [vmem:[%s5 + $0x160] sm:$0xff]
  %v848 = vld [vmem:[%s5 + $0x168] sm:$0xff]
  %v849 = vld [vmem:[%s5 + $0x170] sm:$0xff]
  %v850 = vld [vmem:[%s5 + $0x178] sm:$0xff]
  %v851 = vld [vmem:[%s5 + $0x180] sm:$0xff]
  %v852 = vld [vmem:[%s5 + $0x188] sm:$0xff]
  %v853 = vld [vmem:[%s5 + $0x190] sm:$0xff]
  %v854 = vld [vmem:[%s5 + $0x198] sm:$0xff]
  %v855 = vld [vmem:[%s5 + $0x1a0] sm:$0xff]
  %v856 = vld [vmem:[%s5 + $0x1a8] sm:$0xff]
  %v857 = vld [vmem:[%s5 + $0x1b0] sm:$0xff]
  %v858 = vld [vmem:[%s5 + $0x1b8] sm:$0xff]
  %v859 = vld [vmem:[%s5 + $0x1c0] sm:$0xff]
  %v860 = vld [vmem:[%s5 + $0x1c8] sm:$0xff]
  %v861 = vld [vmem:[%s5 + $0x1d0] sm:$0xff]
  %v862 = vld [vmem:[%s5 + $0x1d8] sm:$0xff]
  %v863 = vld [vmem:[%s5 + $0x1e0] sm:$0xff]
  %v864 = vld [vmem:[%s5 + $0x1e8] sm:$0xff]
  %v865 = vld [vmem:[%s5 + $0x1f0] sm:$0xff]
  %v866 = vld [vmem:[%s5 + $0x1f8] sm:$0xff]
  %v867 = vld [vmem:[%s5 + $0x200] sm:$0xff]
  %v868 = vld [vmem:[%s5 + $0x208] sm:$0xff]
  %v869 = vld [vmem:[%s5 + $0x210] sm:$0xff]
  %v870 = vld [vmem:[%s5 + $0x218] sm:$0xff]
  %v871 = vld [vmem:[%s5 + $0x220] sm:$0xff]
  %v872 = vld [vmem:[%s5 + $0x228] sm:$0xff]
  %v873 = vld [vmem:[%s5 + $0x230] sm:$0xff]
  %v874 = vld [vmem:[%s5 + $0x238] sm:$0xff]
  %v875 = vld [vmem:[%s5 + $0x240] sm:$0xff]
  %v876 = vld [vmem:[%s5 + $0x248] sm:$0xff]
  %v877 = vld [vmem:[%s5 + $0x250] sm:$0xff]
  %v878 = vld [vmem:[%s5 + $0x258] sm:$0xff]
  %v879 = vld [vmem:[%s5 + $0x260] sm:$0xff]
  %v880 = vld [vmem:[%s5 + $0x268] sm:$0xff]
  %v881 = vld [vmem:[%s5 + $0x270] sm:$0xff]
  %v882 = vld [vmem:[%s5 + $0x278] sm:$0xff]
  %v883 = vld [vmem:[%s5 + $0x280] sm:$0xff]
  %v884 = vld [vmem:[%s5 + $0x288] sm:$0xff]
  %v885 = vld [vmem:[%s5 + $0x290] sm:$0xff]
  %v886 = vld [vmem:[%s5 + $0x298] sm:$0xff]
  %v887 = vld [vmem:[%s5 + $0x2a0] sm:$0xff]
  %v888 = vld [vmem:[%s5 + $0x2a8] sm:$0xff]
  %v889 = vld [vmem:[%s5 + $0x2b0] sm:$0xff]
  %v890 = vld [vmem:[%s5 + $0x2b8] sm:$0xff]
  %v891 = vld [vmem:[%s5 + $0x2c0] sm:$0xff]
  %v892 = vld [vmem:[%s5 + $0x2c8] sm:$0xff]
  %v893 = vld [vmem:[%s5 + $0x2d0] sm:$0xff]
  %v894 = vld [vmem:[%s5 + $0x2d8] sm:$0xff]
  %v895 = vld [vmem:[%s5 + $0x2e0] sm:$0xff]
  %v896 = vld [vmem:[%s5 + $0x2e8] sm:$0xff]
  %v897 = vld [vmem:[%s5 + $0x2f0] sm:$0xff]
  %v898 = vld [vmem:[%s5 + $0x2f8] sm:$0xff]
  %v899 = vld [vmem:[%s6] sm:$0x3f]
  %v901 = vlaneseq
  %v902 = vshrl.u32 %v901, 7
  %v903 = vsub.s32 0, %v902
  %v904 = vrot.slane %v899, %v903
  %v905 = vlaneseq
  %v906 = vshrl.u32 %v905, 7
  %v907 = vsub.s32 1, %v906
  %v908 = vrot.slane %v899, %v907
  %v909 = vlaneseq
  %v910 = vshrl.u32 %v909, 7
  %v911 = vsub.s32 2, %v910
  %v912 = vrot.slane %v899, %v911
  %v913 = vlaneseq
  %v914 = vshrl.u32 %v913, 7
  %v915 = vsub.s32 3, %v914
  %v916 = vrot.slane %v899, %v915
  %v917 = vlaneseq
  %v918 = vshrl.u32 %v917, 7
  %v919 = vsub.s32 4, %v918
  %v920 = vrot.slane %v899, %v919
  %v921 = vlaneseq
  %v922 = vshrl.u32 %v921, 7
  %v923 = vsub.s32 5, %v922
  %v924 = vrot.slane %v899, %v923
  %v1027 = vunpack.c.l.b16 %v803
  %v1028 = vunpack.c.h.b16 %v803
  %v1029 = vunpack.c.l.b16 %v804
  %v1030 = vunpack.c.h.b16 %v804
  %v1031 = vunpack.c.l.b16 %v805
  %v1032 = vunpack.c.h.b16 %v805
  %v1033 = vunpack.c.l.b16 %v806
  %v1034 = vunpack.c.h.b16 %v806
  %v1035 = vunpack.c.l.b16 %v807
  %v1036 = vunpack.c.h.b16 %v807
  %v1037 = vunpack.c.l.b16 %v808
  %v1038 = vunpack.c.h.b16 %v808
  %v1039 = vunpack.c.l.b16 %v809
  %v1040 = vunpack.c.h.b16 %v809
  %v1041 = vunpack.c.l.b16 %v810
  %v1042 = vunpack.c.h.b16 %v810
  %v1043 = vunpack.c.l.b16 %v811
  %v1044 = vunpack.c.h.b16 %v811
  %v1045 = vunpack.c.l.b16 %v812
  %v1046 = vunpack.c.h.b16 %v812
  %v1047 = vunpack.c.l.b16 %v813
  %v1048 = vunpack.c.h.b16 %v813
  %v1049 = vunpack.c.l.b16 %v814
  %v1050 = vunpack.c.h.b16 %v814
  %v1051 = vunpack.c.l.b16 %v815
  %v1052 = vunpack.c.h.b16 %v815
  %v1053 = vunpack.c.l.b16 %v816
  %v1054 = vunpack.c.h.b16 %v816
  %v1055 = vunpack.c.l.b16 %v817
  %v1056 = vunpack.c.h.b16 %v817
  %v1057 = vunpack.c.l.b16 %v818
  %v1058 = vunpack.c.h.b16 %v818
  %v1059 = vunpack.c.l.b16 %v819
  %v1060 = vunpack.c.h.b16 %v819
  %v1061 = vunpack.c.l.b16 %v820
  %v1062 = vunpack.c.h.b16 %v820
  %v1063 = vunpack.c.l.b16 %v821
  %v1064 = vunpack.c.h.b16 %v821
  %v1065 = vunpack.c.l.b16 %v822
  %v1066 = vunpack.c.h.b16 %v822
  %v1067 = vunpack.c.l.b16 %v823
  %v1068 = vunpack.c.h.b16 %v823
  %v1069 = vunpack.c.l.b16 %v824
  %v1070 = vunpack.c.h.b16 %v824
  %v1071 = vunpack.c.l.b16 %v825
  %v1072 = vunpack.c.h.b16 %v825
  %v1073 = vunpack.c.l.b16 %v826
  %v1074 = vunpack.c.h.b16 %v826
  %v1075 = vunpack.c.l.b16 %v827
  %v1076 = vunpack.c.h.b16 %v827
  %v1077 = vunpack.c.l.b16 %v828
  %v1078 = vunpack.c.h.b16 %v828
  %v1079 = vunpack.c.l.b16 %v829
  %v1080 = vunpack.c.h.b16 %v829
  %v1081 = vunpack.c.l.b16 %v830
  %v1082 = vunpack.c.h.b16 %v830
  %v1083 = vunpack.c.l.b16 %v831
  %v1084 = vunpack.c.h.b16 %v831
  %v1085 = vunpack.c.l.b16 %v832
  %v1086 = vunpack.c.h.b16 %v832
  %v1087 = vunpack.c.l.b16 %v833
  %v1088 = vunpack.c.h.b16 %v833
  %v1089 = vunpack.c.l.b16 %v834
  %v1090 = vunpack.c.h.b16 %v834
  %v1091 = vunpack.c.l.b16 %v835
  %v1092 = vunpack.c.h.b16 %v835
  %v1093 = vunpack.c.l.b16 %v836
  %v1094 = vunpack.c.h.b16 %v836
  %v1095 = vunpack.c.l.b16 %v837
  %v1096 = vunpack.c.h.b16 %v837
  %v1097 = vunpack.c.l.b16 %v838
  %v1098 = vunpack.c.h.b16 %v838
  %v1099 = vunpack.c.l.b16 %v839
  %v1100 = vunpack.c.h.b16 %v839
  %v1101 = vunpack.c.l.b16 %v840
  %v1102 = vunpack.c.h.b16 %v840
  %v1103 = vunpack.c.l.b16 %v841
  %v1104 = vunpack.c.h.b16 %v841
  %v1105 = vunpack.c.l.b16 %v842
  %v1106 = vunpack.c.h.b16 %v842
  %v1107 = vunpack.c.l.b16 %v843
  %v1108 = vunpack.c.h.b16 %v843
  %v1109 = vunpack.c.l.b16 %v844
  %v1110 = vunpack.c.h.b16 %v844
  %v1111 = vunpack.c.l.b16 %v845
  %v1112 = vunpack.c.h.b16 %v845
  %v1113 = vunpack.c.l.b16 %v846
  %v1114 = vunpack.c.h.b16 %v846
  %v1115 = vunpack.c.l.b16 %v847
  %v1116 = vunpack.c.h.b16 %v847
  %v1117 = vunpack.c.l.b16 %v848
  %v1118 = vunpack.c.h.b16 %v848
  %v1119 = vunpack.c.l.b16 %v849
  %v1120 = vunpack.c.h.b16 %v849
  %v1121 = vunpack.c.l.b16 %v850
  %v1122 = vunpack.c.h.b16 %v850
  %v1123 = vunpack.c.l.b16 %v851
  %v1124 = vunpack.c.h.b16 %v851
  %v1125 = vunpack.c.l.b16 %v852
  %v1126 = vunpack.c.h.b16 %v852
  %v1127 = vunpack.c.l.b16 %v853
  %v1128 = vunpack.c.h.b16 %v853
  %v1129 = vunpack.c.l.b16 %v854
  %v1130 = vunpack.c.h.b16 %v854
  %v1131 = vunpack.c.l.b16 %v855
  %v1132 = vunpack.c.h.b16 %v855
  %v1133 = vunpack.c.l.b16 %v856
  %v1134 = vunpack.c.h.b16 %v856
  %v1135 = vunpack.c.l.b16 %v857
  %v1136 = vunpack.c.h.b16 %v857
  %v1137 = vunpack.c.l.b16 %v858
  %v1138 = vunpack.c.h.b16 %v858
  %v1139 = vunpack.c.l.b16 %v859
  %v1140 = vunpack.c.h.b16 %v859
  %v1141 = vunpack.c.l.b16 %v860
  %v1142 = vunpack.c.h.b16 %v860
  %v1143 = vunpack.c.l.b16 %v861
  %v1144 = vunpack.c.h.b16 %v861
  %v1145 = vunpack.c.l.b16 %v862
  %v1146 = vunpack.c.h.b16 %v862
  %v1147 = vunpack.c.l.b16 %v863
  %v1148 = vunpack.c.h.b16 %v863
  %v1149 = vunpack.c.l.b16 %v864
  %v1150 = vunpack.c.h.b16 %v864
  %v1151 = vunpack.c.l.b16 %v865
  %v1152 = vunpack.c.h.b16 %v865
  %v1153 = vunpack.c.l.b16 %v866
  %v1154 = vunpack.c.h.b16 %v866
  %v1155 = vunpack.c.l.b16 %v867
  %v1156 = vunpack.c.h.b16 %v867
  %v1157 = vunpack.c.l.b16 %v868
  %v1158 = vunpack.c.h.b16 %v868
  %v1159 = vunpack.c.l.b16 %v869
  %v1160 = vunpack.c.h.b16 %v869
  %v1161 = vunpack.c.l.b16 %v870
  %v1162 = vunpack.c.h.b16 %v870
  %v1163 = vunpack.c.l.b16 %v871
  %v1164 = vunpack.c.h.b16 %v871
  %v1165 = vunpack.c.l.b16 %v872
  %v1166 = vunpack.c.h.b16 %v872
  %v1167 = vunpack.c.l.b16 %v873
  %v1168 = vunpack.c.h.b16 %v873
  %v1169 = vunpack.c.l.b16 %v874
  %v1170 = vunpack.c.h.b16 %v874
  %v1171 = vunpack.c.l.b16 %v875
  %v1172 = vunpack.c.h.b16 %v875
  %v1173 = vunpack.c.l.b16 %v876
  %v1174 = vunpack.c.h.b16 %v876
  %v1175 = vunpack.c.l.b16 %v877
  %v1176 = vunpack.c.h.b16 %v877
  %v1177 = vunpack.c.l.b16 %v878
  %v1178 = vunpack.c.h.b16 %v878
  %v1179 = vunpack.c.l.b16 %v879
  %v1180 = vunpack.c.h.b16 %v879
  %v1181 = vunpack.c.l.b16 %v880
  %v1182 = vunpack.c.h.b16 %v880
  %v1183 = vunpack.c.l.b16 %v881
  %v1184 = vunpack.c.h.b16 %v881
  %v1185 = vunpack.c.l.b16 %v882
  %v1186 = vunpack.c.h.b16 %v882
  %v1187 = vunpack.c.l.b16 %v883
  %v1188 = vunpack.c.h.b16 %v883
  %v1189 = vunpack.c.l.b16 %v884
  %v1190 = vunpack.c.h.b16 %v884
  %v1191 = vunpack.c.l.b16 %v885
  %v1192 = vunpack.c.h.b16 %v885
  %v1193 = vunpack.c.l.b16 %v886
  %v1194 = vunpack.c.h.b16 %v886
  %v1195 = vunpack.c.l.b16 %v887
  %v1196 = vunpack.c.h.b16 %v887
  %v1197 = vunpack.c.l.b16 %v888
  %v1198 = vunpack.c.h.b16 %v888
  %v1199 = vunpack.c.l.b16 %v889
  %v1200 = vunpack.c.h.b16 %v889
  %v1201 = vunpack.c.l.b16 %v890
  %v1202 = vunpack.c.h.b16 %v890
  %v1203 = vunpack.c.l.b16 %v891
  %v1204 = vunpack.c.h.b16 %v891
  %v1205 = vunpack.c.l.b16 %v892
  %v1206 = vunpack.c.h.b16 %v892
  %v1207 = vunpack.c.l.b16 %v893
  %v1208 = vunpack.c.h.b16 %v893
  %v1209 = vunpack.c.l.b16 %v894
  %v1210 = vunpack.c.h.b16 %v894
  %v1211 = vunpack.c.l.b16 %v895
  %v1212 = vunpack.c.h.b16 %v895
  %v1213 = vunpack.c.l.b16 %v896
  %v1214 = vunpack.c.h.b16 %v896
  %v1215 = vunpack.c.l.b16 %v897
  %v1216 = vunpack.c.h.b16 %v897
  %v1217 = vunpack.c.l.b16 %v898
  %v1218 = vunpack.c.h.b16 %v898
  %v1219 = vpack.c.b16 %v1033, %v1027
  %v1220 = vpack.c.b16 %v1034, %v1028
  %v1221 = vpack.c.b16 %v1035, %v1029
  %v1222 = vpack.c.b16 %v1036, %v1030
  %v1223 = vpack.c.b16 %v1037, %v1031
  %v1224 = vpack.c.b16 %v1038, %v1032
  %v1225 = vpack.c.b16 %v1045, %v1039
  %v1226 = vpack.c.b16 %v1046, %v1040
  %v1227 = vpack.c.b16 %v1047, %v1041
  %v1228 = vpack.c.b16 %v1048, %v1042
  %v1229 = vpack.c.b16 %v1049, %v1043
  %v1230 = vpack.c.b16 %v1050, %v1044
  %v1231 = vpack.c.b16 %v1057, %v1051
  %v1232 = vpack.c.b16 %v1058, %v1052
  %v1233 = vpack.c.b16 %v1059, %v1053
  %v1234 = vpack.c.b16 %v1060, %v1054
  %v1235 = vpack.c.b16 %v1061, %v1055
  %v1236 = vpack.c.b16 %v1062, %v1056
  %v1237 = vpack.c.b16 %v1069, %v1063
  %v1238 = vpack.c.b16 %v1070, %v1064
  %v1239 = vpack.c.b16 %v1071, %v1065
  %v1240 = vpack.c.b16 %v1072, %v1066
  %v1241 = vpack.c.b16 %v1073, %v1067
  %v1242 = vpack.c.b16 %v1074, %v1068
  %v1243 = vpack.c.b16 %v1081, %v1075
  %v1244 = vpack.c.b16 %v1082, %v1076
  %v1245 = vpack.c.b16 %v1083, %v1077
  %v1246 = vpack.c.b16 %v1084, %v1078
  %v1247 = vpack.c.b16 %v1085, %v1079
  %v1248 = vpack.c.b16 %v1086, %v1080
  %v1249 = vpack.c.b16 %v1093, %v1087
  %v1250 = vpack.c.b16 %v1094, %v1088
  %v1251 = vpack.c.b16 %v1095, %v1089
  %v1252 = vpack.c.b16 %v1096, %v1090
  %v1253 = vpack.c.b16 %v1097, %v1091
  %v1254 = vpack.c.b16 %v1098, %v1092
  %v1255 = vpack.c.b16 %v1105, %v1099
  %v1256 = vpack.c.b16 %v1106, %v1100
  %v1257 = vpack.c.b16 %v1107, %v1101
  %v1258 = vpack.c.b16 %v1108, %v1102
  %v1259 = vpack.c.b16 %v1109, %v1103
  %v1260 = vpack.c.b16 %v1110, %v1104
  %v1261 = vpack.c.b16 %v1117, %v1111
  %v1262 = vpack.c.b16 %v1118, %v1112
  %v1263 = vpack.c.b16 %v1119, %v1113
  %v1264 = vpack.c.b16 %v1120, %v1114
  %v1265 = vpack.c.b16 %v1121, %v1115
  %v1266 = vpack.c.b16 %v1122, %v1116
  %v1267 = vpack.c.b16 %v1129, %v1123
  %v1268 = vpack.c.b16 %v1130, %v1124
  %v1269 = vpack.c.b16 %v1131, %v1125
  %v1270 = vpack.c.b16 %v1132, %v1126
  %v1271 = vpack.c.b16 %v1133, %v1127
  %v1272 = vpack.c.b16 %v1134, %v1128
  %v1273 = vpack.c.b16 %v1141, %v1135
  %v1274 = vpack.c.b16 %v1142, %v1136
  %v1275 = vpack.c.b16 %v1143, %v1137
  %v1276 = vpack.c.b16 %v1144, %v1138
  %v1277 = vpack.c.b16 %v1145, %v1139
  %v1278 = vpack.c.b16 %v1146, %v1140
  %v1279 = vpack.c.b16 %v1153, %v1147
  %v1280 = vpack.c.b16 %v1154, %v1148
  %v1281 = vpack.c.b16 %v1155, %v1149
  %v1282 = vpack.c.b16 %v1156, %v1150
  %v1283 = vpack.c.b16 %v1157, %v1151
  %v1284 = vpack.c.b16 %v1158, %v1152
  %v1285 = vpack.c.b16 %v1165, %v1159
  %v1286 = vpack.c.b16 %v1166, %v1160
  %v1287 = vpack.c.b16 %v1167, %v1161
  %v1288 = vpack.c.b16 %v1168, %v1162
  %v1289 = vpack.c.b16 %v1169, %v1163
  %v1290 = vpack.c.b16 %v1170, %v1164
  %v1291 = vpack.c.b16 %v1177, %v1171
  %v1292 = vpack.c.b16 %v1178, %v1172
  %v1293 = vpack.c.b16 %v1179, %v1173
  %v1294 = vpack.c.b16 %v1180, %v1174
  %v1295 = vpack.c.b16 %v1181, %v1175
  %v1296 = vpack.c.b16 %v1182, %v1176
  %v1297 = vpack.c.b16 %v1189, %v1183
  %v1298 = vpack.c.b16 %v1190, %v1184
  %v1299 = vpack.c.b16 %v1191, %v1185
  %v1300 = vpack.c.b16 %v1192, %v1186
  %v1301 = vpack.c.b16 %v1193, %v1187
  %v1302 = vpack.c.b16 %v1194, %v1188
  %v1303 = vpack.c.b16 %v1201, %v1195
  %v1304 = vpack.c.b16 %v1202, %v1196
  %v1305 = vpack.c.b16 %v1203, %v1197
  %v1306 = vpack.c.b16 %v1204, %v1198
  %v1307 = vpack.c.b16 %v1205, %v1199
  %v1308 = vpack.c.b16 %v1206, %v1200
  %v1309 = vpack.c.b16 %v1213, %v1207
  %v1310 = vpack.c.b16 %v1214, %v1208
  %v1311 = vpack.c.b16 %v1215, %v1209
  %v1312 = vpack.c.b16 %v1216, %v1210
  %v1313 = vpack.c.b16 %v1217, %v1211
  %v1314 = vpack.c.b16 %v1218, %v1212
  %1411 = vmatprep.subr.bf16.mxu0 %v1262
  %1412 = vmatpush1.bf16.msra.mxu0 %v1261
  %1413 = vmatprep.subr.bf16.mxu0 %v1256
  %1414 = vmatpush1.bf16.msra.mxu0 %v1255
  %1415 = vmatprep.subr.bf16.mxu0 %v1250
  %1416 = vmatpush1.bf16.msra.mxu0 %v1249
  %1417 = vmatprep.subr.bf16.mxu0 %v1244
  %1418 = vmatpush1.bf16.msra.mxu0 %v1243
  %1419 = vmatprep.subr.bf16.mxu0 %v1238
  %1420 = vmatpush1.bf16.msra.mxu0 %v1237
  %1421 = vmatprep.subr.bf16.mxu0 %v1232
  %1422 = vmatpush1.bf16.msra.mxu0 %v1231
  %1423 = vmatprep.subr.bf16.mxu0 %v1226
  %1424 = vmatpush1.bf16.msra.mxu0 %v1225
  %1425 = vmatprep.subr.bf16.mxu0 %v1220
  %1426 = vmatpush1.bf16.msra.mxu0 %v1219
  %1427 = vmatprep.subr.bf16.mxu0 %v1310
  %1428 = vmatpush2.bf16.msra.mxu0 %v1309
  %1429 = vmatprep.subr.bf16.mxu0 %v1304
  %1430 = vmatpush2.bf16.msra.mxu0 %v1303
  %1431 = vmatprep.subr.bf16.mxu0 %v1298
  %1432 = vmatpush2.bf16.msra.mxu0 %v1297
  %1433 = vmatprep.subr.bf16.mxu0 %v1292
  %1434 = vmatpush2.bf16.msra.mxu0 %v1291
  %1435 = vmatprep.subr.bf16.mxu0 %v1286
  %1436 = vmatpush2.bf16.msra.mxu0 %v1285
  %1437 = vmatprep.subr.bf16.mxu0 %v1280
  %1438 = vmatpush2.bf16.msra.mxu0 %v1279
  %1439 = vmatprep.subr.bf16.mxu0 %v1274
  %1440 = vmatpush2.bf16.msra.mxu0 %v1273
  %1441 = vmatprep.subr.bf16.mxu0 %v1268
  %1442 = vmatpush2.bf16.msra.mxu0 %v1267
  %1443 = vmatprep.mubr.bf16.mxu0 %v65
  %1444 = vmatmul.mubr.bf16.gmra.mxu0 %v64
  %v1445 = vpop.f32.mrf.mxu0
  %v1446 = vadd.f32 %v904, %v1445
  %v1447 = vpop.f32.mrf.mxu0
  %v1448 = vadd.f32 %v908, %v1447
  %v1449 = vpop.f32.mrf.mxu0
  %v1450 = vadd.f32 %v904, %v1449
  %v1451 = vpop.f32.mrf.mxu0
  %v1452 = vadd.f32 %v908, %v1451
  %1453 = vdwg.mxu0
  %1454 = vmatprep.subr.bf16.mxu0 %v1264
  %1455 = vmatpush1.bf16.msra.mxu0 %v1263
  %1456 = vmatprep.subr.bf16.mxu0 %v1258
  %1457 = vmatpush1.bf16.msra.mxu0 %v1257
  %1458 = vmatprep.subr.bf16.mxu0 %v1252
  %1459 = vmatpush1.bf16.msra.mxu0 %v1251
  %1460 = vmatprep.subr.bf16.mxu0 %v1246
  %1461 = vmatpush1.bf16.msra.mxu0 %v1245
  %1462 = vmatprep.subr.bf16.mxu0 %v1240
  %1463 = vmatpush1.bf16.msra.mxu0 %v1239
  %1464 = vmatprep.subr.bf16.mxu0 %v1234
  %1465 = vmatpush1.bf16.msra.mxu0 %v1233
  %1466 = vmatprep.subr.bf16.mxu0 %v1228
  %1467 = vmatpush1.bf16.msra.mxu0 %v1227
  %1468 = vmatprep.subr.bf16.mxu0 %v1222
  %1469 = vmatpush1.bf16.msra.mxu0 %v1221
  %1470 = vmatprep.subr.bf16.mxu0 %v1312
  %1471 = vmatpush2.bf16.msra.mxu0 %v1311
  %1472 = vmatprep.subr.bf16.mxu0 %v1306
  %1473 = vmatpush2.bf16.msra.mxu0 %v1305
  %1474 = vmatprep.subr.bf16.mxu0 %v1300
  %1475 = vmatpush2.bf16.msra.mxu0 %v1299
  %1476 = vmatprep.subr.bf16.mxu0 %v1294
  %1477 = vmatpush2.bf16.msra.mxu0 %v1293
  %1478 = vmatprep.subr.bf16.mxu0 %v1288
  %1479 = vmatpush2.bf16.msra.mxu0 %v1287
  %1480 = vmatprep.subr.bf16.mxu0 %v1282
  %1481 = vmatpush2.bf16.msra.mxu0 %v1281
  %1482 = vmatprep.subr.bf16.mxu0 %v1276
  %1483 = vmatpush2.bf16.msra.mxu0 %v1275
  %1484 = vmatprep.subr.bf16.mxu0 %v1270
  %1485 = vmatpush2.bf16.msra.mxu0 %v1269
  %1486 = vmatprep.mubr.bf16.mxu0 %v65
  %1487 = vmatmul.mubr.bf16.gmra.mxu0 %v64
  %v1488 = vpop.f32.mrf.mxu0
  %v1489 = vadd.f32 %v912, %v1488
  %v1490 = vpop.f32.mrf.mxu0
  %v1491 = vadd.f32 %v916, %v1490
  %v1492 = vpop.f32.mrf.mxu0
  %v1493 = vadd.f32 %v912, %v1492
  %v1494 = vpop.f32.mrf.mxu0
  %v1495 = vadd.f32 %v916, %v1494
  %1496 = vdwg.mxu0
  %1497 = vmatprep.subr.bf16.mxu0 %v1266
  %1498 = vmatpush1.bf16.msra.mxu0 %v1265
  %1499 = vmatprep.subr.bf16.mxu0 %v1260
  %1500 = vmatpush1.bf16.msra.mxu0 %v1259
  %1501 = vmatprep.subr.bf16.mxu0 %v1254
  %1502 = vmatpush1.bf16.msra.mxu0 %v1253
  %1503 = vmatprep.subr.bf16.mxu0 %v1248
  %1504 = vmatpush1.bf16.msra.mxu0 %v1247
  %1505 = vmatprep.subr.bf16.mxu0 %v1242
  %1506 = vmatpush1.bf16.msra.mxu0 %v1241
  %1507 = vmatprep.subr.bf16.mxu0 %v1236
  %1508 = vmatpush1.bf16.msra.mxu0 %v1235
  %1509 = vmatprep.subr.bf16.mxu0 %v1230
  %1510 = vmatpush1.bf16.msra.mxu0 %v1229
  %1511 = vmatprep.subr.bf16.mxu0 %v1224
  %1512 = vmatpush1.bf16.msra.mxu0 %v1223
  %1513 = vmatprep.subr.bf16.mxu0 %v1314
  %1514 = vmatpush2.bf16.msra.mxu0 %v1313
  %1515 = vmatprep.subr.bf16.mxu0 %v1308
  %1516 = vmatpush2.bf16.msra.mxu0 %v1307
  %1517 = vmatprep.subr.bf16.mxu0 %v1302
  %1518 = vmatpush2.bf16.msra.mxu0 %v1301
  %1519 = vmatprep.subr.bf16.mxu0 %v1296
  %1520 = vmatpush2.bf16.msra.mxu0 %v1295
  %1521 = vmatprep.subr.bf16.mxu0 %v1290
  %1522 = vmatpush2.bf16.msra.mxu0 %v1289
  %1523 = vmatprep.subr.bf16.mxu0 %v1284
  %1524 = vmatpush2.bf16.msra.mxu0 %v1283
  %1525 = vmatprep.subr.bf16.mxu0 %v1278
  %1526 = vmatpush2.bf16.msra.mxu0 %v1277
  %1527 = vmatprep.subr.bf16.mxu0 %v1272
  %1528 = vmatpush2.bf16.msra.mxu0 %v1271
  %1529 = vmatprep.mubr.bf16.mxu0 %v65
  %1530 = vmatmul.mubr.bf16.gmra.mxu0 %v64
  %v1531 = vpop.f32.mrf.mxu0
  %v1532 = vadd.f32 %v920, %v1531
  %v1533 = vpop.f32.mrf.mxu0
  %v1534 = vadd.f32 %v924, %v1533
  %v1535 = vpop.f32.mrf.mxu0
  %v1536 = vadd.f32 %v920, %v1535
  %v1537 = vpop.f32.mrf.mxu0
  %v1538 = vadd.f32 %v924, %v1537
  %1539 = vdwg.mxu0
  %v1540 = vld [vmem:[%s11] sm:$0xff]
  %v1541 = vld [vmem:[%s11 + $0x8] sm:$0xff]
  %v1542 = vld [vmem:[%s11 + $0x10] sm:$0xff]
  %v1543 = vld [vmem:[%s11 + $0x18] sm:$0xff]
  %v1544 = vld [vmem:[%s11 + $0x20] sm:$0xff]
  %v1545 = vld [vmem:[%s11 + $0x28] sm:$0xff]
  %v1546 = vld [vmem:[%s11 + $0x30] sm:$0xff]
  %v1547 = vld [vmem:[%s11 + $0x38] sm:$0xff]
  %v1548 = vld [vmem:[%s11 + $0x40] sm:$0xff]
  %v1549 = vld [vmem:[%s11 + $0x48] sm:$0xff]
  %v1550 = vld [vmem:[%s11 + $0x50] sm:$0xff]
  %v1551 = vld [vmem:[%s11 + $0x58] sm:$0xff]
  %v1552 = vld [vmem:[%s11 + $0x60] sm:$0xff]
  %v1553 = vld [vmem:[%s11 + $0x68] sm:$0xff]
  %v1554 = vld [vmem:[%s11 + $0x70] sm:$0xff]
  %v1555 = vld [vmem:[%s11 + $0x78] sm:$0xff]
  %v1556 = vld [vmem:[%s11 + $0x80] sm:$0xff]
  %v1557 = vld [vmem:[%s11 + $0x88] sm:$0xff]
  %v1558 = vld [vmem:[%s11 + $0x90] sm:$0xff]
  %v1559 = vld [vmem:[%s11 + $0x98] sm:$0xff]
  %v1560 = vld [vmem:[%s11 + $0xa0] sm:$0xff]
  %v1561 = vld [vmem:[%s11 + $0xa8] sm:$0xff]
  %v1562 = vld [vmem:[%s11 + $0xb0] sm:$0xff]
  %v1563 = vld [vmem:[%s11 + $0xb8] sm:$0xff]
  %v1564 = vld [vmem:[%s11 + $0xc0] sm:$0xff]
  %v1565 = vld [vmem:[%s11 + $0xc8] sm:$0xff]
  %v1566 = vld [vmem:[%s11 + $0xd0] sm:$0xff]
  %v1567 = vld [vmem:[%s11 + $0xd8] sm:$0xff]
  %v1568 = vld [vmem:[%s11 + $0xe0] sm:$0xff]
  %v1569 = vld [vmem:[%s11 + $0xe8] sm:$0xff]
  %v1570 = vld [vmem:[%s11 + $0xf0] sm:$0xff]
  %v1571 = vld [vmem:[%s11 + $0xf8] sm:$0xff]
  %v1572 = vld [vmem:[%s12] sm:$0xff]
  %v1573 = vld [vmem:[%s12 + $0x8] sm:$0xff]
  %v1574 = vmul.f32 %v709, 0.17677669
  %v1575 = vmul.f32 %v711, 0.17677669
  %v1576 = vmul.f32 %v713, 0.17677669
  %v1577 = vmul.f32 %v715, 0.17677669
  %v1578 = vmul.f32 %v1574, %v1489
  %v1579 = vmul.f32 %v1575, %v1491
  %v1580 = vmul.f32 %v1574, %v1493
  %v1581 = vmul.f32 %v1575, %v1495
  %v1582 = vmul.f32 %v1576, %v1489
  %v1583 = vmul.f32 %v1577, %v1491
  %v1584 = vmul.f32 %v1576, %v1493
  %v1585 = vmul.f32 %v1577, %v1495
  %v1586 = vmul.f32 %v1446, 0.17677669
  %v1587 = vmul.f32 %v1448, 0.17677669
  %v1588 = vmul.f32 %v1450, 0.17677669
  %v1589 = vmul.f32 %v1452, 0.17677669
  %v1590 = vmul.f32 %v1586, %v752
  %v1591 = vmul.f32 %v1587, %v754
  %v1592 = vmul.f32 %v1586, %v756
  %v1593 = vmul.f32 %v1587, %v758
  %v1594 = vmul.f32 %v1588, %v752
  %v1595 = vmul.f32 %v1589, %v754
  %v1596 = vmul.f32 %v1588, %v756
  %v1597 = vmul.f32 %v1589, %v758
  %1598 = vmatprep.subr.mxu0 0.0
  %1599 = vmatpush1.msra.mxu0 %v1555
  %1600 = vmatprep.subr.mxu0 0.0
  %1601 = vmatpush1.msra.mxu0 %v1554
  %1602 = vmatprep.subr.mxu0 0.0
  %1603 = vmatpush1.msra.mxu0 %v1553
  %1604 = vmatprep.subr.mxu0 0.0
  %1605 = vmatpush1.msra.mxu0 %v1552
  %1606 = vmatprep.subr.mxu0 0.0
  %1607 = vmatpush1.msra.mxu0 %v1551
  %1608 = vmatprep.subr.mxu0 0.0
  %1609 = vmatpush1.msra.mxu0 %v1550
  %1610 = vmatprep.subr.mxu0 0.0
  %1611 = vmatpush1.msra.mxu0 %v1549
  %1612 = vmatprep.subr.mxu0 0.0
  %1613 = vmatpush1.msra.mxu0 %v1548
  %1614 = vmatprep.subr.mxu0 0.0
  %1615 = vmatpush1.msra.mxu0 %v1547
  %1616 = vmatprep.subr.mxu0 0.0
  %1617 = vmatpush1.msra.mxu0 %v1546
  %1618 = vmatprep.subr.mxu0 0.0
  %1619 = vmatpush1.msra.mxu0 %v1545
  %1620 = vmatprep.subr.mxu0 0.0
  %1621 = vmatpush1.msra.mxu0 %v1544
  %1622 = vmatprep.subr.mxu0 0.0
  %1623 = vmatpush1.msra.mxu0 %v1543
  %1624 = vmatprep.subr.mxu0 0.0
  %1625 = vmatpush1.msra.mxu0 %v1542
  %1626 = vmatprep.subr.mxu0 0.0
  %1627 = vmatpush1.msra.mxu0 %v1541
  %1628 = vmatprep.subr.mxu0 0.0
  %1629 = vmatpush1.msra.mxu0 %v1540
  %1630 = vmatprep.subr.mxu0 0.0
  %1631 = vmatpush2.msra.mxu0 %v1571
  %1632 = vmatprep.subr.mxu0 0.0
  %1633 = vmatpush2.msra.mxu0 %v1570
  %1634 = vmatprep.subr.mxu0 0.0
  %1635 = vmatpush2.msra.mxu0 %v1569
  %1636 = vmatprep.subr.mxu0 0.0
  %1637 = vmatpush2.msra.mxu0 %v1568
  %1638 = vmatprep.subr.mxu0 0.0
  %1639 = vmatpush2.msra.mxu0 %v1567
  %1640 = vmatprep.subr.mxu0 0.0
  %1641 = vmatpush2.msra.mxu0 %v1566
  %1642 = vmatprep.subr.mxu0 0.0
  %1643 = vmatpush2.msra.mxu0 %v1565
  %1644 = vmatprep.subr.mxu0 0.0
  %1645 = vmatpush2.msra.mxu0 %v1564
  %1646 = vmatprep.subr.mxu0 0.0
  %1647 = vmatpush2.msra.mxu0 %v1563
  %1648 = vmatprep.subr.mxu0 0.0
  %1649 = vmatpush2.msra.mxu0 %v1562
  %1650 = vmatprep.subr.mxu0 0.0
  %1651 = vmatpush2.msra.mxu0 %v1561
  %1652 = vmatprep.subr.mxu0 0.0
  %1653 = vmatpush2.msra.mxu0 %v1560
  %1654 = vmatprep.subr.mxu0 0.0
  %1655 = vmatpush2.msra.mxu0 %v1559
  %1656 = vmatprep.subr.mxu0 0.0
  %1657 = vmatpush2.msra.mxu0 %v1558
  %1658 = vmatprep.subr.mxu0 0.0
  %1659 = vmatpush2.msra.mxu0 %v1557
  %1660 = vmatprep.subr.mxu0 0.0
  %1661 = vmatpush2.msra.mxu0 %v1556
  %1662 = vmatprep.mubr.f32.mxu0 %v1579
  %1663 = vmatmul.mubr.f32.gmra.mxu0 %v1578
  %v1664 = vpop.f32.mrf.mxu0
  %v1665 = vadd.f32 0.0, %v1664
  %v1666 = vpop.f32.mrf.mxu0
  %1667 = vmatprep.mubr.f32.mxu0 %v1581
  %1668 = vmatmul.mubr.f32.gmra.mxu0 %v1580
  %v1669 = vpop.f32.mrf.mxu0
  %v1670 = vadd.f32 0.0, %v1669
  %v1671 = vpop.f32.mrf.mxu0
  %1672 = vmatprep.mubr.f32.mxu0 %v1583
  %1673 = vmatmul.mubr.f32.gmra.mxu0 %v1582
  %v1674 = vpop.f32.mrf.mxu0
  %v1675 = vadd.f32 0.0, %v1674
  %v1676 = vpop.f32.mrf.mxu0
  %1677 = vmatprep.mubr.f32.mxu0 %v1585
  %1678 = vmatmul.mubr.f32.gmra.mxu0 %v1584
  %v1679 = vpop.f32.mrf.mxu0
  %v1680 = vadd.f32 0.0, %v1679
  %v1681 = vpop.f32.mrf.mxu0
  %1682 = vmatprep.mubr.f32.mxu0 %v1591
  %1683 = vmatmul.mubr.f32.gmra.mxu0 %v1590
  %v1684 = vpop.f32.mrf.mxu0
  %v1685 = vadd.f32 0.0, %v1684
  %v1686 = vpop.f32.mrf.mxu0
  %1687 = vmatprep.mubr.f32.mxu0 %v1593
  %1688 = vmatmul.mubr.f32.gmra.mxu0 %v1592
  %v1689 = vpop.f32.mrf.mxu0
  %v1690 = vadd.f32 0.0, %v1689
  %v1691 = vpop.f32.mrf.mxu0
  %1692 = vmatprep.mubr.f32.mxu0 %v1595
  %1693 = vmatmul.mubr.f32.gmra.mxu0 %v1594
  %v1694 = vpop.f32.mrf.mxu0
  %v1695 = vadd.f32 0.0, %v1694
  %v1696 = vpop.f32.mrf.mxu0
  %1697 = vmatprep.mubr.f32.mxu0 %v1597
  %1698 = vmatmul.mubr.f32.gmra.mxu0 %v1596
  %v1699 = vpop.f32.mrf.mxu0
  %v1700 = vadd.f32 0.0, %v1699
  %v1701 = vpop.f32.mrf.mxu0
  %1702 = vdwg.mxu0
  %v1703 = vmax.f32 %v1665, %v1670
  %v1704 = vsub.f32 %v1665, %v1703
  %v1705 = vmul.f32 %v1704, 1.442695
  %v1706 = vpow.pop %v1705
  %v1707 = vsub.f32 %v1670, %v1703
  %v1708 = vmul.f32 %v1707, 1.442695
  %v1709 = vpow.pop %v1708
  %v1710 = vadd.f32 %v1706, %v1709
  %v1711 = vrcp.pop %v1710
  %v1712 = vmul.f32 %v1706, %v1711
  %v1713 = vmul.f32 %v1709, %v1711
  %v1714 = vmax.f32 %v1675, %v1680
  %v1715 = vsub.f32 %v1675, %v1714
  %v1716 = vmul.f32 %v1715, 1.442695
  %v1717 = vpow.pop %v1716
  %v1718 = vsub.f32 %v1680, %v1714
  %v1719 = vmul.f32 %v1718, 1.442695
  %v1720 = vpow.pop %v1719
  %v1721 = vadd.f32 %v1717, %v1720
  %v1722 = vrcp.pop %v1721
  %v1723 = vmul.f32 %v1717, %v1722
  %v1724 = vmul.f32 %v1720, %v1722
  %v1725 = vmax.f32 %v1685, %v1690
  %v1726 = vsub.f32 %v1685, %v1725
  %v1727 = vmul.f32 %v1726, 1.442695
  %v1728 = vpow.pop %v1727
  %v1729 = vsub.f32 %v1690, %v1725
  %v1730 = vmul.f32 %v1729, 1.442695
  %v1731 = vpow.pop %v1730
  %v1732 = vadd.f32 %v1728, %v1731
  %v1733 = vrcp.pop %v1732
  %v1734 = vmul.f32 %v1728, %v1733
  %v1735 = vmul.f32 %v1731, %v1733
  %v1736 = vmax.f32 %v1695, %v1700
  %v1737 = vsub.f32 %v1695, %v1736
  %v1738 = vmul.f32 %v1737, 1.442695
  %v1739 = vpow.pop %v1738
  %v1740 = vsub.f32 %v1700, %v1736
  %v1741 = vmul.f32 %v1740, 1.442695
  %v1742 = vpow.pop %v1741
  %v1743 = vadd.f32 %v1739, %v1742
  %v1744 = vrcp.pop %v1743
  %v1745 = vmul.f32 %v1739, %v1744
  %v1746 = vmul.f32 %v1742, %v1744
  %vm1747 = vcmask 64512
  %v1749 = vsel %vm1747, %v1712, 0
  %v1752 = vsel %vm1747, %v1713, 0
  %v1755 = vsel %vm1747, %v1723, 0
  %v1758 = vsel %vm1747, %v1724, 0
  %v1761 = vsel %vm1747, %v1734, 0
  %v1764 = vsel %vm1747, %v1735, 0
  %v1767 = vsel %vm1747, %v1745, 0
  %v1770 = vsel %vm1747, %v1746, 0
  %1772 = vmatprep.subr.mxu0 0.0
  %1773 = vmatpush1.msra.mxu0 0.0
  %1774 = vmatprep.subr.mxu0 0.0
  %1775 = vmatpush1.msra.mxu0 0.0
  %1776 = vmatprep.subr.mxu0 0.0
  %1777 = vmatpush1.msra.mxu0 0.0
  %1778 = vmatprep.subr.mxu0 0.0
  %1779 = vmatpush1.msra.mxu0 0.0
  %1780 = vmatprep.subr.mxu0 0.0
  %1781 = vmatpush1.msra.mxu0 0.0
  %1782 = vmatprep.subr.mxu0 0.0
  %1783 = vmatpush1.msra.mxu0 0.0
  %1784 = vmatprep.subr.mxu0 0.0
  %1785 = vmatpush1.msra.mxu0 0.0
  %1786 = vmatprep.subr.mxu0 0.0
  %1787 = vmatpush1.msra.mxu0 0.0
  %1788 = vmatprep.subr.mxu0 0.0
  %1789 = vmatpush1.msra.mxu0 0.0
  %1790 = vmatprep.subr.mxu0 0.0
  %1791 = vmatpush1.msra.mxu0 0.0
  %1792 = vmatprep.subr.mxu0 0.0
  %1793 = vmatpush1.msra.mxu0 0.0
  %1794 = vmatprep.subr.mxu0 0.0
  %1795 = vmatpush1.msra.mxu0 0.0
  %1796 = vmatprep.subr.mxu0 0.0
  %1797 = vmatpush1.msra.mxu0 0.0
  %1798 = vmatprep.subr.mxu0 0.0
  %1799 = vmatpush1.msra.mxu0 0.0
  %1800 = vmatprep.subr.mxu0 0.0
  %1801 = vmatpush1.msra.mxu0 0.0
  %1802 = vmatprep.subr.mxu0 %v1573
  %1803 = vmatpush1.msra.mxu0 %v1572
  %1804 = vmatprep.subr.mxu0 0.0
  %1805 = vmatpush2.msra.mxu0 0.0
  %1806 = vmatprep.subr.mxu0 0.0
  %1807 = vmatpush2.msra.mxu0 0.0
  %1808 = vmatprep.subr.mxu0 0.0
  %1809 = vmatpush2.msra.mxu0 0.0
  %1810 = vmatprep.subr.mxu0 0.0
  %1811 = vmatpush2.msra.mxu0 0.0
  %1812 = vmatprep.subr.mxu0 0.0
  %1813 = vmatpush2.msra.mxu0 0.0
  %1814 = vmatprep.subr.mxu0 0.0
  %1815 = vmatpush2.msra.mxu0 0.0
  %1816 = vmatprep.subr.mxu0 0.0
  %1817 = vmatpush2.msra.mxu0 0.0
  %1818 = vmatprep.subr.mxu0 0.0
  %1819 = vmatpush2.msra.mxu0 0.0
  %1820 = vmatprep.subr.mxu0 0.0
  %1821 = vmatpush2.msra.mxu0 0.0
  %1822 = vmatprep.subr.mxu0 0.0
  %1823 = vmatpush2.msra.mxu0 0.0
  %1824 = vmatprep.subr.mxu0 0.0
  %1825 = vmatpush2.msra.mxu0 0.0
  %1826 = vmatprep.subr.mxu0 0.0
  %1827 = vmatpush2.msra.mxu0 0.0
  %1828 = vmatprep.subr.mxu0 0.0
  %1829 = vmatpush2.msra.mxu0 0.0
  %1830 = vmatprep.subr.mxu0 0.0
  %1831 = vmatpush2.msra.mxu0 0.0
  %1832 = vmatprep.subr.mxu0 0.0
  %1833 = vmatpush2.msra.mxu0 0.0
  %1834 = vmatprep.subr.mxu0 0.0
  %1835 = vmatpush2.msra.mxu0 0.0
  %1836 = vmatprep.mubr.f32.mxu0 0.0
  %1837 = vmatmul.mubr.f32.gmra.mxu0 %v1749
  %v1838 = vpop.f32.mrf.mxu0
  %v1839 = vadd.f32 0.0, %v1838
  %v1840 = vpop.f32.mrf.mxu0
  %v1841 = vadd.f32 0.0, %v1840
  %1842 = vmatprep.mubr.f32.mxu0 0.0
  %1843 = vmatmul.mubr.f32.gmra.mxu0 %v1752
  %v1844 = vpop.f32.mrf.mxu0
  %v1845 = vadd.f32 0.0, %v1844
  %v1846 = vpop.f32.mrf.mxu0
  %v1847 = vadd.f32 0.0, %v1846
  %1848 = vmatprep.mubr.f32.mxu0 0.0
  %1849 = vmatmul.mubr.f32.gmra.mxu0 %v1755
  %v1850 = vpop.f32.mrf.mxu0
  %v1851 = vadd.f32 0.0, %v1850
  %v1852 = vpop.f32.mrf.mxu0
  %v1853 = vadd.f32 0.0, %v1852
  %1854 = vmatprep.mubr.f32.mxu0 0.0
  %1855 = vmatmul.mubr.f32.gmra.mxu0 %v1758
  %v1856 = vpop.f32.mrf.mxu0
  %v1857 = vadd.f32 0.0, %v1856
  %v1858 = vpop.f32.mrf.mxu0
  %v1859 = vadd.f32 0.0, %v1858
  %1860 = vmatprep.mubr.f32.mxu0 0.0
  %1861 = vmatmul.mubr.f32.gmra.mxu0 %v1761
  %v1862 = vpop.f32.mrf.mxu0
  %v1863 = vadd.f32 0.0, %v1862
  %v1864 = vpop.f32.mrf.mxu0
  %v1865 = vadd.f32 0.0, %v1864
  %1866 = vmatprep.mubr.f32.mxu0 0.0
  %1867 = vmatmul.mubr.f32.gmra.mxu0 %v1764
  %v1868 = vpop.f32.mrf.mxu0
  %v1869 = vadd.f32 0.0, %v1868
  %v1870 = vpop.f32.mrf.mxu0
  %v1871 = vadd.f32 0.0, %v1870
  %1872 = vmatprep.mubr.f32.mxu0 0.0
  %1873 = vmatmul.mubr.f32.gmra.mxu0 %v1767
  %v1874 = vpop.f32.mrf.mxu0
  %v1875 = vadd.f32 0.0, %v1874
  %v1876 = vpop.f32.mrf.mxu0
  %v1877 = vadd.f32 0.0, %v1876
  %1878 = vmatprep.mubr.f32.mxu0 0.0
  %1879 = vmatmul.mubr.f32.gmra.mxu0 %v1770
  %v1880 = vpop.f32.mrf.mxu0
  %v1881 = vadd.f32 0.0, %v1880
  %v1882 = vpop.f32.mrf.mxu0
  %v1883 = vadd.f32 0.0, %v1882
  %1884 = vdwg.mxu0
  %v1885 = vmul.f32 %v1839, %v1532
  %v1886 = vmul.f32 %v1841, %v1534
  %v1887 = vmul.f32 %v1845, %v1536
  %v1888 = vmul.f32 %v1847, %v1538
  %v1889 = vadd.f32 %v1885, %v1887
  %v1890 = vadd.f32 %v1886, %v1888
  %v1891 = vmul.f32 %v1851, %v1532
  %v1892 = vmul.f32 %v1853, %v1534
  %v1893 = vmul.f32 %v1857, %v1536
  %v1894 = vmul.f32 %v1859, %v1538
  %v1895 = vadd.f32 %v1891, %v1893
  %v1896 = vadd.f32 %v1892, %v1894
  %v1897 = vmul.f32 %v1863, %v795
  %v1898 = vmul.f32 %v1865, %v797
  %v1899 = vmul.f32 %v1869, %v799
  %v1900 = vmul.f32 %v1871, %v801
  %v1901 = vadd.f32 %v1897, %v1899
  %v1902 = vadd.f32 %v1898, %v1900
  %v1903 = vmul.f32 %v1875, %v795
  %v1904 = vmul.f32 %v1877, %v797
  %v1905 = vmul.f32 %v1881, %v799
  %v1906 = vmul.f32 %v1883, %v801
  %v1907 = vadd.f32 %v1903, %v1905
  %v1908 = vadd.f32 %v1904, %v1906
  %v1909 = vpack.c.bf16 %v1895, %v1889
  %v1910 = vpack.c.bf16 %v1896, %v1890
  %v1911 = vld [vmem:[%s7] sm:$0xff]
  %v1912 = vld [vmem:[%s7 + $0x8] sm:$0xff]
  %v1913 = vld [vmem:[%s7 + $0x10] sm:$0xff]
  %v1914 = vld [vmem:[%s7 + $0x18] sm:$0xff]
  %v1915 = vld [vmem:[%s7 + $0x20] sm:$0xff]
  %v1916 = vld [vmem:[%s7 + $0x28] sm:$0xff]
  %v1917 = vld [vmem:[%s7 + $0x30] sm:$0xff]
  %v1918 = vld [vmem:[%s7 + $0x38] sm:$0xff]
  %v1919 = vld [vmem:[%s7 + $0x40] sm:$0xff]
  %v1920 = vld [vmem:[%s7 + $0x48] sm:$0xff]
  %v1921 = vld [vmem:[%s7 + $0x50] sm:$0xff]
  %v1922 = vld [vmem:[%s7 + $0x58] sm:$0xff]
  %v1923 = vld [vmem:[%s7 + $0x60] sm:$0xff]
  %v1924 = vld [vmem:[%s7 + $0x68] sm:$0xff]
  %v1925 = vld [vmem:[%s7 + $0x70] sm:$0xff]
  %v1926 = vld [vmem:[%s7 + $0x78] sm:$0xff]
  %v1927 = vld [vmem:[%s7 + $0x80] sm:$0xff]
  %v1928 = vld [vmem:[%s7 + $0x88] sm:$0xff]
  %v1929 = vld [vmem:[%s7 + $0x90] sm:$0xff]
  %v1930 = vld [vmem:[%s7 + $0x98] sm:$0xff]
  %v1931 = vld [vmem:[%s7 + $0xa0] sm:$0xff]
  %v1932 = vld [vmem:[%s7 + $0xa8] sm:$0xff]
  %v1933 = vld [vmem:[%s7 + $0xb0] sm:$0xff]
  %v1934 = vld [vmem:[%s7 + $0xb8] sm:$0xff]
  %v1935 = vld [vmem:[%s7 + $0xc0] sm:$0xff]
  %v1936 = vld [vmem:[%s7 + $0xc8] sm:$0xff]
  %v1937 = vld [vmem:[%s7 + $0xd0] sm:$0xff]
  %v1938 = vld [vmem:[%s7 + $0xd8] sm:$0xff]
  %v1939 = vld [vmem:[%s7 + $0xe0] sm:$0xff]
  %v1940 = vld [vmem:[%s7 + $0xe8] sm:$0xff]
  %v1941 = vld [vmem:[%s7 + $0xf0] sm:$0xff]
  %v1942 = vld [vmem:[%s7 + $0xf8] sm:$0xff]
  %v1943 = vld [vmem:[%s8] sm:$0x3]
  %v1945 = vlaneseq
  %v1946 = vshrl.u32 %v1945, 7
  %v1947 = vsub.s32 0, %v1946
  %v1948 = vrot.slane %v1943, %v1947
  %v1949 = vlaneseq
  %v1950 = vshrl.u32 %v1949, 7
  %v1951 = vsub.s32 1, %v1950
  %v1952 = vrot.slane %v1943, %v1951
  %v1987 = vunpack.c.l.b16 %v1911
  %v1988 = vunpack.c.h.b16 %v1911
  %v1989 = vunpack.c.l.b16 %v1912
  %v1990 = vunpack.c.h.b16 %v1912
  %v1991 = vunpack.c.l.b16 %v1913
  %v1992 = vunpack.c.h.b16 %v1913
  %v1993 = vunpack.c.l.b16 %v1914
  %v1994 = vunpack.c.h.b16 %v1914
  %v1995 = vunpack.c.l.b16 %v1915
  %v1996 = vunpack.c.h.b16 %v1915
  %v1997 = vunpack.c.l.b16 %v1916
  %v1998 = vunpack.c.h.b16 %v1916
  %v1999 = vunpack.c.l.b16 %v1917
  %v2000 = vunpack.c.h.b16 %v1917
  %v2001 = vunpack.c.l.b16 %v1918
  %v2002 = vunpack.c.h.b16 %v1918
  %v2003 = vunpack.c.l.b16 %v1919
  %v2004 = vunpack.c.h.b16 %v1919
  %v2005 = vunpack.c.l.b16 %v1920
  %v2006 = vunpack.c.h.b16 %v1920
  %v2007 = vunpack.c.l.b16 %v1921
  %v2008 = vunpack.c.h.b16 %v1921
  %v2009 = vunpack.c.l.b16 %v1922
  %v2010 = vunpack.c.h.b16 %v1922
  %v2011 = vunpack.c.l.b16 %v1923
  %v2012 = vunpack.c.h.b16 %v1923
  %v2013 = vunpack.c.l.b16 %v1924
  %v2014 = vunpack.c.h.b16 %v1924
  %v2015 = vunpack.c.l.b16 %v1925
  %v2016 = vunpack.c.h.b16 %v1925
  %v2017 = vunpack.c.l.b16 %v1926
  %v2018 = vunpack.c.h.b16 %v1926
  %v2019 = vunpack.c.l.b16 %v1927
  %v2020 = vunpack.c.h.b16 %v1927
  %v2021 = vunpack.c.l.b16 %v1928
  %v2022 = vunpack.c.h.b16 %v1928
  %v2023 = vunpack.c.l.b16 %v1929
  %v2024 = vunpack.c.h.b16 %v1929
  %v2025 = vunpack.c.l.b16 %v1930
  %v2026 = vunpack.c.h.b16 %v1930
  %v2027 = vunpack.c.l.b16 %v1931
  %v2028 = vunpack.c.h.b16 %v1931
  %v2029 = vunpack.c.l.b16 %v1932
  %v2030 = vunpack.c.h.b16 %v1932
  %v2031 = vunpack.c.l.b16 %v1933
  %v2032 = vunpack.c.h.b16 %v1933
  %v2033 = vunpack.c.l.b16 %v1934
  %v2034 = vunpack.c.h.b16 %v1934
  %v2035 = vunpack.c.l.b16 %v1935
  %v2036 = vunpack.c.h.b16 %v1935
  %v2037 = vunpack.c.l.b16 %v1936
  %v2038 = vunpack.c.h.b16 %v1936
  %v2039 = vunpack.c.l.b16 %v1937
  %v2040 = vunpack.c.h.b16 %v1937
  %v2041 = vunpack.c.l.b16 %v1938
  %v2042 = vunpack.c.h.b16 %v1938
  %v2043 = vunpack.c.l.b16 %v1939
  %v2044 = vunpack.c.h.b16 %v1939
  %v2045 = vunpack.c.l.b16 %v1940
  %v2046 = vunpack.c.h.b16 %v1940
  %v2047 = vunpack.c.l.b16 %v1941
  %v2048 = vunpack.c.h.b16 %v1941
  %v2049 = vunpack.c.l.b16 %v1942
  %v2050 = vunpack.c.h.b16 %v1942
  %v2051 = vpack.c.b16 %v1989, %v1987
  %v2052 = vpack.c.b16 %v1990, %v1988
  %v2053 = vpack.c.b16 %v1993, %v1991
  %v2054 = vpack.c.b16 %v1994, %v1992
  %v2055 = vpack.c.b16 %v1997, %v1995
  %v2056 = vpack.c.b16 %v1998, %v1996
  %v2057 = vpack.c.b16 %v2001, %v1999
  %v2058 = vpack.c.b16 %v2002, %v2000
  %v2059 = vpack.c.b16 %v2005, %v2003
  %v2060 = vpack.c.b16 %v2006, %v2004
  %v2061 = vpack.c.b16 %v2009, %v2007
  %v2062 = vpack.c.b16 %v2010, %v2008
  %v2063 = vpack.c.b16 %v2013, %v2011
  %v2064 = vpack.c.b16 %v2014, %v2012
  %v2065 = vpack.c.b16 %v2017, %v2015
  %v2066 = vpack.c.b16 %v2018, %v2016
  %v2067 = vpack.c.b16 %v2021, %v2019
  %v2068 = vpack.c.b16 %v2022, %v2020
  %v2069 = vpack.c.b16 %v2025, %v2023
  %v2070 = vpack.c.b16 %v2026, %v2024
  %v2071 = vpack.c.b16 %v2029, %v2027
  %v2072 = vpack.c.b16 %v2030, %v2028
  %v2073 = vpack.c.b16 %v2033, %v2031
  %v2074 = vpack.c.b16 %v2034, %v2032
  %v2075 = vpack.c.b16 %v2037, %v2035
  %v2076 = vpack.c.b16 %v2038, %v2036
  %v2077 = vpack.c.b16 %v2041, %v2039
  %v2078 = vpack.c.b16 %v2042, %v2040
  %v2079 = vpack.c.b16 %v2045, %v2043
  %v2080 = vpack.c.b16 %v2046, %v2044
  %v2081 = vpack.c.b16 %v2049, %v2047
  %v2082 = vpack.c.b16 %v2050, %v2048
  %2115 = vmatprep.subr.bf16.mxu0 %v2066
  %2116 = vmatpush1.bf16.msra.mxu0 %v2065
  %2117 = vmatprep.subr.bf16.mxu0 %v2064
  %2118 = vmatpush1.bf16.msra.mxu0 %v2063
  %2119 = vmatprep.subr.bf16.mxu0 %v2062
  %2120 = vmatpush1.bf16.msra.mxu0 %v2061
  %2121 = vmatprep.subr.bf16.mxu0 %v2060
  %2122 = vmatpush1.bf16.msra.mxu0 %v2059
  %2123 = vmatprep.subr.bf16.mxu0 %v2058
  %2124 = vmatpush1.bf16.msra.mxu0 %v2057
  %2125 = vmatprep.subr.bf16.mxu0 %v2056
  %2126 = vmatpush1.bf16.msra.mxu0 %v2055
  %2127 = vmatprep.subr.bf16.mxu0 %v2054
  %2128 = vmatpush1.bf16.msra.mxu0 %v2053
  %2129 = vmatprep.subr.bf16.mxu0 %v2052
  %2130 = vmatpush1.bf16.msra.mxu0 %v2051
  %2131 = vmatprep.subr.bf16.mxu0 %v2082
  %2132 = vmatpush2.bf16.msra.mxu0 %v2081
  %2133 = vmatprep.subr.bf16.mxu0 %v2080
  %2134 = vmatpush2.bf16.msra.mxu0 %v2079
  %2135 = vmatprep.subr.bf16.mxu0 %v2078
  %2136 = vmatpush2.bf16.msra.mxu0 %v2077
  %2137 = vmatprep.subr.bf16.mxu0 %v2076
  %2138 = vmatpush2.bf16.msra.mxu0 %v2075
  %2139 = vmatprep.subr.bf16.mxu0 %v2074
  %2140 = vmatpush2.bf16.msra.mxu0 %v2073
  %2141 = vmatprep.subr.bf16.mxu0 %v2072
  %2142 = vmatpush2.bf16.msra.mxu0 %v2071
  %2143 = vmatprep.subr.bf16.mxu0 %v2070
  %2144 = vmatpush2.bf16.msra.mxu0 %v2069
  %2145 = vmatprep.subr.bf16.mxu0 %v2068
  %2146 = vmatpush2.bf16.msra.mxu0 %v2067
  %2147 = vmatprep.mubr.bf16.mxu0 %v1910
  %2148 = vmatmul.mubr.bf16.gmra.mxu0 %v1909
  %v2149 = vpop.f32.mrf.mxu0
  %v2150 = vadd.f32 %v1948, %v2149
  %v2151 = vpop.f32.mrf.mxu0
  %v2152 = vadd.f32 %v1952, %v2151
  %v2153 = vpop.f32.mrf.mxu0
  %v2154 = vadd.f32 %v1948, %v2153
  %v2155 = vpop.f32.mrf.mxu0
  %v2156 = vadd.f32 %v1952, %v2155
  %2157 = vdwg.mxu0
  %v2158 = vpack.c.bf16 %v1907, %v1901
  %v2159 = vpack.c.bf16 %v1908, %v1902
  %v2160 = vld [vmem:[%s9] sm:$0xff]
  %v2161 = vld [vmem:[%s9 + $0x8] sm:$0xff]
  %v2162 = vld [vmem:[%s9 + $0x10] sm:$0xff]
  %v2163 = vld [vmem:[%s9 + $0x18] sm:$0xff]
  %v2164 = vld [vmem:[%s9 + $0x20] sm:$0xff]
  %v2165 = vld [vmem:[%s9 + $0x28] sm:$0xff]
  %v2166 = vld [vmem:[%s9 + $0x30] sm:$0xff]
  %v2167 = vld [vmem:[%s9 + $0x38] sm:$0xff]
  %v2168 = vld [vmem:[%s9 + $0x40] sm:$0xff]
  %v2169 = vld [vmem:[%s9 + $0x48] sm:$0xff]
  %v2170 = vld [vmem:[%s9 + $0x50] sm:$0xff]
  %v2171 = vld [vmem:[%s9 + $0x58] sm:$0xff]
  %v2172 = vld [vmem:[%s9 + $0x60] sm:$0xff]
  %v2173 = vld [vmem:[%s9 + $0x68] sm:$0xff]
  %v2174 = vld [vmem:[%s9 + $0x70] sm:$0xff]
  %v2175 = vld [vmem:[%s9 + $0x78] sm:$0xff]
  %v2176 = vld [vmem:[%s9 + $0x80] sm:$0xff]
  %v2177 = vld [vmem:[%s9 + $0x88] sm:$0xff]
  %v2178 = vld [vmem:[%s9 + $0x90] sm:$0xff]
  %v2179 = vld [vmem:[%s9 + $0x98] sm:$0xff]
  %v2180 = vld [vmem:[%s9 + $0xa0] sm:$0xff]
  %v2181 = vld [vmem:[%s9 + $0xa8] sm:$0xff]
  %v2182 = vld [vmem:[%s9 + $0xb0] sm:$0xff]
  %v2183 = vld [vmem:[%s9 + $0xb8] sm:$0xff]
  %v2184 = vld [vmem:[%s9 + $0xc0] sm:$0xff]
  %v2185 = vld [vmem:[%s9 + $0xc8] sm:$0xff]
  %v2186 = vld [vmem:[%s9 + $0xd0] sm:$0xff]
  %v2187 = vld [vmem:[%s9 + $0xd8] sm:$0xff]
  %v2188 = vld [vmem:[%s9 + $0xe0] sm:$0xff]
  %v2189 = vld [vmem:[%s9 + $0xe8] sm:$0xff]
  %v2190 = vld [vmem:[%s9 + $0xf0] sm:$0xff]
  %v2191 = vld [vmem:[%s9 + $0xf8] sm:$0xff]
  %v2192 = vld [vmem:[%s10] sm:$0x3]
  %v2194 = vlaneseq
  %v2195 = vshrl.u32 %v2194, 7
  %v2196 = vsub.s32 0, %v2195
  %v2197 = vrot.slane %v2192, %v2196
  %v2198 = vlaneseq
  %v2199 = vshrl.u32 %v2198, 7
  %v2200 = vsub.s32 1, %v2199
  %v2201 = vrot.slane %v2192, %v2200
  %v2236 = vunpack.c.l.b16 %v2160
  %v2237 = vunpack.c.h.b16 %v2160
  %v2238 = vunpack.c.l.b16 %v2161
  %v2239 = vunpack.c.h.b16 %v2161
  %v2240 = vunpack.c.l.b16 %v2162
  %v2241 = vunpack.c.h.b16 %v2162
  %v2242 = vunpack.c.l.b16 %v2163
  %v2243 = vunpack.c.h.b16 %v2163
  %v2244 = vunpack.c.l.b16 %v2164
  %v2245 = vunpack.c.h.b16 %v2164
  %v2246 = vunpack.c.l.b16 %v2165
  %v2247 = vunpack.c.h.b16 %v2165
  %v2248 = vunpack.c.l.b16 %v2166
  %v2249 = vunpack.c.h.b16 %v2166
  %v2250 = vunpack.c.l.b16 %v2167
  %v2251 = vunpack.c.h.b16 %v2167
  %v2252 = vunpack.c.l.b16 %v2168
  %v2253 = vunpack.c.h.b16 %v2168
  %v2254 = vunpack.c.l.b16 %v2169
  %v2255 = vunpack.c.h.b16 %v2169
  %v2256 = vunpack.c.l.b16 %v2170
  %v2257 = vunpack.c.h.b16 %v2170
  %v2258 = vunpack.c.l.b16 %v2171
  %v2259 = vunpack.c.h.b16 %v2171
  %v2260 = vunpack.c.l.b16 %v2172
  %v2261 = vunpack.c.h.b16 %v2172
  %v2262 = vunpack.c.l.b16 %v2173
  %v2263 = vunpack.c.h.b16 %v2173
  %v2264 = vunpack.c.l.b16 %v2174
  %v2265 = vunpack.c.h.b16 %v2174
  %v2266 = vunpack.c.l.b16 %v2175
  %v2267 = vunpack.c.h.b16 %v2175
  %v2268 = vunpack.c.l.b16 %v2176
  %v2269 = vunpack.c.h.b16 %v2176
  %v2270 = vunpack.c.l.b16 %v2177
  %v2271 = vunpack.c.h.b16 %v2177
  %v2272 = vunpack.c.l.b16 %v2178
  %v2273 = vunpack.c.h.b16 %v2178
  %v2274 = vunpack.c.l.b16 %v2179
  %v2275 = vunpack.c.h.b16 %v2179
  %v2276 = vunpack.c.l.b16 %v2180
  %v2277 = vunpack.c.h.b16 %v2180
  %v2278 = vunpack.c.l.b16 %v2181
  %v2279 = vunpack.c.h.b16 %v2181
  %v2280 = vunpack.c.l.b16 %v2182
  %v2281 = vunpack.c.h.b16 %v2182
  %v2282 = vunpack.c.l.b16 %v2183
  %v2283 = vunpack.c.h.b16 %v2183
  %v2284 = vunpack.c.l.b16 %v2184
  %v2285 = vunpack.c.h.b16 %v2184
  %v2286 = vunpack.c.l.b16 %v2185
  %v2287 = vunpack.c.h.b16 %v2185
  %v2288 = vunpack.c.l.b16 %v2186
  %v2289 = vunpack.c.h.b16 %v2186
  %v2290 = vunpack.c.l.b16 %v2187
  %v2291 = vunpack.c.h.b16 %v2187
  %v2292 = vunpack.c.l.b16 %v2188
  %v2293 = vunpack.c.h.b16 %v2188
  %v2294 = vunpack.c.l.b16 %v2189
  %v2295 = vunpack.c.h.b16 %v2189
  %v2296 = vunpack.c.l.b16 %v2190
  %v2297 = vunpack.c.h.b16 %v2190
  %v2298 = vunpack.c.l.b16 %v2191
  %v2299 = vunpack.c.h.b16 %v2191
  %v2300 = vpack.c.b16 %v2238, %v2236
  %v2301 = vpack.c.b16 %v2239, %v2237
  %v2302 = vpack.c.b16 %v2242, %v2240
  %v2303 = vpack.c.b16 %v2243, %v2241
  %v2304 = vpack.c.b16 %v2246, %v2244
  %v2305 = vpack.c.b16 %v2247, %v2245
  %v2306 = vpack.c.b16 %v2250, %v2248
  %v2307 = vpack.c.b16 %v2251, %v2249
  %v2308 = vpack.c.b16 %v2254, %v2252
  %v2309 = vpack.c.b16 %v2255, %v2253
  %v2310 = vpack.c.b16 %v2258, %v2256
  %v2311 = vpack.c.b16 %v2259, %v2257
  %v2312 = vpack.c.b16 %v2262, %v2260
  %v2313 = vpack.c.b16 %v2263, %v2261
  %v2314 = vpack.c.b16 %v2266, %v2264
  %v2315 = vpack.c.b16 %v2267, %v2265
  %v2316 = vpack.c.b16 %v2270, %v2268
  %v2317 = vpack.c.b16 %v2271, %v2269
  %v2318 = vpack.c.b16 %v2274, %v2272
  %v2319 = vpack.c.b16 %v2275, %v2273
  %v2320 = vpack.c.b16 %v2278, %v2276
  %v2321 = vpack.c.b16 %v2279, %v2277
  %v2322 = vpack.c.b16 %v2282, %v2280
  %v2323 = vpack.c.b16 %v2283, %v2281
  %v2324 = vpack.c.b16 %v2286, %v2284
  %v2325 = vpack.c.b16 %v2287, %v2285
  %v2326 = vpack.c.b16 %v2290, %v2288
  %v2327 = vpack.c.b16 %v2291, %v2289
  %v2328 = vpack.c.b16 %v2294, %v2292
  %v2329 = vpack.c.b16 %v2295, %v2293
  %v2330 = vpack.c.b16 %v2298, %v2296
  %v2331 = vpack.c.b16 %v2299, %v2297
  %2364 = vmatprep.subr.bf16.mxu0 %v2315
  %2365 = vmatpush1.bf16.msra.mxu0 %v2314
  %2366 = vmatprep.subr.bf16.mxu0 %v2313
  %2367 = vmatpush1.bf16.msra.mxu0 %v2312
  %2368 = vmatprep.subr.bf16.mxu0 %v2311
  %2369 = vmatpush1.bf16.msra.mxu0 %v2310
  %2370 = vmatprep.subr.bf16.mxu0 %v2309
  %2371 = vmatpush1.bf16.msra.mxu0 %v2308
  %2372 = vmatprep.subr.bf16.mxu0 %v2307
  %2373 = vmatpush1.bf16.msra.mxu0 %v2306
  %2374 = vmatprep.subr.bf16.mxu0 %v2305
  %2375 = vmatpush1.bf16.msra.mxu0 %v2304
  %2376 = vmatprep.subr.bf16.mxu0 %v2303
  %2377 = vmatpush1.bf16.msra.mxu0 %v2302
  %2378 = vmatprep.subr.bf16.mxu0 %v2301
  %2379 = vmatpush1.bf16.msra.mxu0 %v2300
  %2380 = vmatprep.subr.bf16.mxu0 %v2331
  %2381 = vmatpush2.bf16.msra.mxu0 %v2330
  %2382 = vmatprep.subr.bf16.mxu0 %v2329
  %2383 = vmatpush2.bf16.msra.mxu0 %v2328
  %2384 = vmatprep.subr.bf16.mxu0 %v2327
  %2385 = vmatpush2.bf16.msra.mxu0 %v2326
  %2386 = vmatprep.subr.bf16.mxu0 %v2325
  %2387 = vmatpush2.bf16.msra.mxu0 %v2324
  %2388 = vmatprep.subr.bf16.mxu0 %v2323
  %2389 = vmatpush2.bf16.msra.mxu0 %v2322
  %2390 = vmatprep.subr.bf16.mxu0 %v2321
  %2391 = vmatpush2.bf16.msra.mxu0 %v2320
  %2392 = vmatprep.subr.bf16.mxu0 %v2319
  %2393 = vmatpush2.bf16.msra.mxu0 %v2318
  %2394 = vmatprep.subr.bf16.mxu0 %v2317
  %2395 = vmatpush2.bf16.msra.mxu0 %v2316
  %2396 = vmatprep.mubr.bf16.mxu0 %v2159
  %2397 = vmatmul.mubr.bf16.gmra.mxu0 %v2158
  %v2398 = vpop.f32.mrf.mxu0
  %v2399 = vadd.f32 %v2197, %v2398
  %v2400 = vpop.f32.mrf.mxu0
  %v2401 = vadd.f32 %v2201, %v2400
  %v2402 = vpop.f32.mrf.mxu0
  %v2403 = vadd.f32 %v2197, %v2402
  %v2404 = vpop.f32.mrf.mxu0
  %v2405 = vadd.f32 %v2201, %v2404
  %2406 = vdwg.mxu0
  %v2407 = vadd.f32 %v2150, %v54
  %v2408 = vadd.f32 %v2152, %v55
  %v2409 = vadd.f32 %v2154, %v56
  %v2410 = vadd.f32 %v2156, %v57
  %v2411 = vmax.f32 %v2407, 0.0
  %v2412 = vmax.f32 %v2408, 0.0
  %v2413 = vmax.f32 %v2409, 0.0
  %v2414 = vmax.f32 %v2410, 0.0
  %v2415 = vpack.c.bf16 %v2413, %v2411
  %v2416 = vpack.c.bf16 %v2414, %v2412
  %v2417 = vadd.f32 %v2399, %v58
  %v2418 = vadd.f32 %v2401, %v59
  %v2419 = vadd.f32 %v2403, %v60
  %v2420 = vadd.f32 %v2405, %v61
  %v2421 = vmax.f32 %v2417, 0.0
  %v2422 = vmax.f32 %v2418, 0.0
  %v2423 = vmax.f32 %v2419, 0.0
  %v2424 = vmax.f32 %v2420, 0.0
  %v2425 = vpack.c.bf16 %v2423, %v2421
  %v2426 = vpack.c.bf16 %v2424, %v2422
  %v2427 = vld [vmem:[%s13] sm:$0xf]
  %v2428 = vld [vmem:[%s13 + $0x4] sm:$0xf]
  %v2429 = vld [vmem:[%s14] sm:$0xf]
  %v2430 = vld [vmem:[%s14 + $0x4] sm:$0xf]
  %v2433 = vunpack.c.l.b16 %v2429
  %v2434 = vunpack.c.l.b16 %v2430
  %v2435 = vpack.c.b16 %v2434, %v2433
  %vm2436 = vcmask 130048
  %v2438 = vsel %vm2436, %v2435, 0
  %2440 = vmatprep.subr.bf16.mxu0 0
  %2441 = vmatpush1.bf16.msra.mxu0 0
  %2442 = vmatprep.subr.bf16.mxu0 0
  %2443 = vmatpush1.bf16.msra.mxu0 0
  %2444 = vmatprep.subr.bf16.mxu0 0
  %2445 = vmatpush1.bf16.msra.mxu0 0
  %2446 = vmatprep.subr.bf16.mxu0 0
  %2447 = vmatpush1.bf16.msra.mxu0 0
  %2448 = vmatprep.subr.bf16.mxu0 0
  %2449 = vmatpush1.bf16.msra.mxu0 0
  %2450 = vmatprep.subr.bf16.mxu0 0
  %2451 = vmatpush1.bf16.msra.mxu0 0
  %2452 = vmatprep.subr.bf16.mxu0 0
  %2453 = vmatpush1.bf16.msra.mxu0 0
  %2454 = vmatprep.subr.bf16.mxu0 %v2426
  %2455 = vmatpush1.bf16.msra.mxu0 %v2425
  %2456 = vmatprep.subr.bf16.mxu0 0
  %2457 = vmatpush2.bf16.msra.mxu0 0
  %2458 = vmatprep.subr.bf16.mxu0 0
  %2459 = vmatpush2.bf16.msra.mxu0 0
  %2460 = vmatprep.subr.bf16.mxu0 0
  %2461 = vmatpush2.bf16.msra.mxu0 0
  %2462 = vmatprep.subr.bf16.mxu0 0
  %2463 = vmatpush2.bf16.msra.mxu0 0
  %2464 = vmatprep.subr.bf16.mxu0 0
  %2465 = vmatpush2.bf16.msra.mxu0 0
  %2466 = vmatprep.subr.bf16.mxu0 0
  %2467 = vmatpush2.bf16.msra.mxu0 0
  %2468 = vmatprep.subr.bf16.mxu0 0
  %2469 = vmatpush2.bf16.msra.mxu0 0
  %2470 = vmatprep.subr.bf16.mxu0 0
  %2471 = vmatpush2.bf16.msra.mxu0 0
  %2472 = vmatprep.mubr.bf16.mxu0 0
  %2473 = vmatmul.mubr.bf16.gmra.mxu0 %v2438
  %v2474 = vpop.f32.mrf.mxu0
  %v2475 = vadd.f32 0.0, %v2474
  %v2476 = vpop.f32.mrf.mxu0
  %v2477 = vadd.f32 0.0, %v2476
  %v2478 = vpop.f32.mrf.mxu0
  %v2479 = vadd.f32 0.0, %v2478
  %v2480 = vpop.f32.mrf.mxu0
  %v2481 = vadd.f32 0.0, %v2480
  %2482 = vdwg.mxu0
  %v2485 = vunpack.c.l.b16 %v2427
  %v2486 = vunpack.c.l.b16 %v2428
  %v2487 = vpack.c.b16 %v2486, %v2485
  %v2489 = vsel %vm2436, %v2487, 0
  %2491 = vmatprep.subr.bf16.mxu0 0
  %2492 = vmatpush1.bf16.msra.mxu0 0
  %2493 = vmatprep.subr.bf16.mxu0 0
  %2494 = vmatpush1.bf16.msra.mxu0 0
  %2495 = vmatprep.subr.bf16.mxu0 0
  %2496 = vmatpush1.bf16.msra.mxu0 0
  %2497 = vmatprep.subr.bf16.mxu0 0
  %2498 = vmatpush1.bf16.msra.mxu0 0
  %2499 = vmatprep.subr.bf16.mxu0 0
  %2500 = vmatpush1.bf16.msra.mxu0 0
  %2501 = vmatprep.subr.bf16.mxu0 0
  %2502 = vmatpush1.bf16.msra.mxu0 0
  %2503 = vmatprep.subr.bf16.mxu0 0
  %2504 = vmatpush1.bf16.msra.mxu0 0
  %2505 = vmatprep.subr.bf16.mxu0 %v2416
  %2506 = vmatpush1.bf16.msra.mxu0 %v2415
  %2507 = vmatprep.subr.bf16.mxu0 0
  %2508 = vmatpush2.bf16.msra.mxu0 0
  %2509 = vmatprep.subr.bf16.mxu0 0
  %2510 = vmatpush2.bf16.msra.mxu0 0
  %2511 = vmatprep.subr.bf16.mxu0 0
  %2512 = vmatpush2.bf16.msra.mxu0 0
  %2513 = vmatprep.subr.bf16.mxu0 0
  %2514 = vmatpush2.bf16.msra.mxu0 0
  %2515 = vmatprep.subr.bf16.mxu0 0
  %2516 = vmatpush2.bf16.msra.mxu0 0
  %2517 = vmatprep.subr.bf16.mxu0 0
  %2518 = vmatpush2.bf16.msra.mxu0 0
  %2519 = vmatprep.subr.bf16.mxu0 0
  %2520 = vmatpush2.bf16.msra.mxu0 0
  %2521 = vmatprep.subr.bf16.mxu0 0
  %2522 = vmatpush2.bf16.msra.mxu0 0
  %2523 = vmatprep.mubr.bf16.mxu0 0
  %2524 = vmatmul.mubr.bf16.gmra.mxu0 %v2489
  %v2525 = vpop.f32.mrf.mxu0
  %v2526 = vadd.f32 %v2475, %v2525
  %v2527 = vpop.f32.mrf.mxu0
  %v2528 = vadd.f32 %v2477, %v2527
  %v2529 = vpop.f32.mrf.mxu0
  %v2530 = vadd.f32 %v2479, %v2529
  %v2531 = vpop.f32.mrf.mxu0
  %v2532 = vadd.f32 %v2481, %v2531
  %2533 = vdwg.mxu0
  %v2534 = vld [vmem:[%s15] sm:$0xff]
  %v2535 = vld [vmem:[%s15 + $0x8] sm:$0xff]
  %2537 = vset.pattern.permute.xlu0 0
  %2538 = vperm.xlu0 %2537, %v2534
  %v2539 = vpop.permute.xlu0 %2538
  %2542 = vset.pattern.permute.xlu0 0
  %2543 = vperm.xlu0 %2542, %v2535
  %v2544 = vpop.permute.xlu0 %2543
  %v2546 = vadd.f32 %v2526, %v2539
  %v2547 = vadd.f32 %v2528, %v2539
  %v2548 = vadd.f32 %v2530, %v2544
  %v2549 = vadd.f32 %v2532, %v2544
  %v2550 = vld [vmem:[%s2] sm:$0xff]
  %v2551 = vld [vmem:[%s2 + $0x8] sm:$0xff]
  %v2552 = vld [vmem:[%s2 + $0x10] sm:$0xff]
  %v2553 = vld [vmem:[%s2 + $0x18] sm:$0xff]
  %v2554 = vadd.f32 %v2546, %v2550
  %v2555 = vadd.f32 %v2547, %v2551
  %v2556 = vadd.f32 %v2548, %v2552
  %v2557 = vadd.f32 %v2549, %v2553
  %2558 = vst [vmem:[%s16] sm:$0xff] %v2554
  %2559 = vst [vmem:[%s16 + $0x8] sm:$0xff] %v2555
  %2560 = vst [vmem:[%s16 + $0x10] sm:$0xff] %v2556
  %2561 = vst [vmem:[%s16 + $0x18] sm:$0xff] %v2557
  // Predicated region
  $region66: #{mobile_mamba_forward.3} parent=0 // pred_check
    _
  $region67: #{mobile_mamba_forward.3} parent=0 // pred_check_branch
    %2563 = sbr.rel (0) target = $region69
  $region68: #{mobile_mamba_forward.3} parent=0 // pred_region
    _
  $region69: #{mobile_mamba_forward.3} parent=0 // pred_fallthru
    _
  // Predicated region
  $region70: #{mobile_mamba_forward.3} parent=0 // pred_check
    _
  $region71: #{mobile_mamba_forward.3} parent=0 // pred_check_branch
    %2565 = sbr.rel (0) target = $region73
  $region72: #{mobile_mamba_forward.3} parent=0 // pred_region
    _
  $region73: #{mobile_mamba_forward.3} parent=0 // pred_fallthru
    _

</llo_original>
